<compile_context>
chip_gen: v6e
topology: v6e:2x2x1
jax: 0.10.0
libtpu: 0.0.40
codegen_flags: <defaults>
</compile_context>

<pallas_src>
import functools
import math

import jax
import jax.numpy as jnp
from jax.experimental import pallas as pl
from jax.experimental.pallas import tpu as pltpu


NEG_INF = -1e30  # large finite negative: no NaN even for fully-masked rows


def make_mha_kernel(num_heads: int, input_dim: int, g_rows: int, num_groups: int):
    d = input_dim
    hd = num_heads * d

    def kernel(x_ref, mrow_ref, rid_ref, ckey_ref,
               wqkv_ref, bqkv_ref, wf_ref, bf_ref, out_ref):
        # ---- fused QKV projection at full block width: (m, d) @ (d, 3*h*d)
        xb = x_ref[...].astype(jnp.bfloat16)
        qkv = (jnp.dot(xb, wqkv_ref[...], preferred_element_type=jnp.float32)
               + bqkv_ref[...])
        # single full-width bf16 cast (instead of 12 narrow per-slice casts)
        qkv = qkv.astype(jnp.bfloat16)

        group_outs = []
        for g in range(num_groups):           # static loop over 128-row groups
            r0 = g * g_rows
            qkv_g = qkv[r0:r0 + g_rows, :]
            # attend iff the key's example code equals the query's example id
            # (padded keys carry code -1, which never matches).  This fuses the
            # block-diagonal band and the key-padding mask; no (m, m) f32 bias
            # is ever DMA'd or materialized.
            rid_g = rid_ref[r0:r0 + g_rows, :]           # (g_rows, 1)
            ckey_g = ckey_ref[:, r0:r0 + g_rows]         # (1, g_rows)
            same_g = rid_g == ckey_g                     # (g_rows, g_rows) bool

            head_outs = []
            for h in range(num_heads):         # small static loop over heads
                q_h = qkv_g[:, h * d:(h + 1) * d]                    # scale pre-folded
                k_h = qkv_g[:, hd + h * d: hd + (h + 1) * d]
                v_h = qkv_g[:, 2 * hd + h * d: 2 * hd + (h + 1) * d]

                # scores for this diagonal super-block in ONE matmul per head
                s = jax.lax.dot_general(q_h, k_h, (((1,), (1,)), ((), ())),
                                        preferred_element_type=jnp.float32)
                s = jnp.where(same_g, s, jnp.float32(NEG_INF))

                # softmax in f32 (EUP reciprocal)
                s_max = jnp.max(s, axis=-1, keepdims=True)
                p = jnp.exp(s - s_max)
                denom = jnp.sum(p, axis=-1, keepdims=True)
                p = p * pl.reciprocal(denom, approx=True)
                # TODO(synk): dropout on attention weights omitted (eval mode).

                head_outs.append(jnp.dot(p.astype(jnp.bfloat16), v_h,
                                         preferred_element_type=jnp.float32))
            group_outs.append(jnp.concatenate(head_outs, axis=-1))   # (g, h*d)

        attn = (group_outs[0] if num_groups == 1
                else jnp.concatenate(group_outs, axis=0))            # (m, h*d)
        # zero padded query rows BEFORE fc (== masked_fill in the reference)
        attn = attn * (mrow_ref[...] != 0.0).astype(jnp.float32)

        # single output projection matmul at full block width
        out = jnp.dot(attn.astype(jnp.bfloat16), wf_ref[...],
                      preferred_element_type=jnp.float32) + bf_ref[...]
        out_ref[...] = out.astype(out_ref.dtype)

    return kernel


def prepare_mha_params(params, *, num_heads, input_dim):
    """One-time weight transform: fold 1/sqrt(d) into the query projection,
    fuse Q/K/V into a single weight, pre-cast MXU weights to bf16."""
    wq, bq, wk, bk, wv, bv, wf, bf = params
    scale = 1.0 / math.sqrt(input_dim)
    wqkv = jnp.concatenate([wq * scale, wk, wv], axis=1).astype(jnp.bfloat16)
    bqkv = jnp.concatenate([bq * scale, bk, bv], axis=1).astype(jnp.float32)
    return wqkv, bqkv, wf.astype(jnp.bfloat16), bf.astype(jnp.float32)


def _pick_block_batch(b, n, target_rows=256):
    """Pick the batch tile: (bt*n) must be a multiple of 128 (lane/MXU
    alignment); prefer a grid of >= 2 steps (two v7x TensorCores); then the
    largest folded row count <= target_rows.  Falls back to the full batch
    (block == full array, always legal) if no aligned tile exists."""
    best_bt, best_score = None, None
    for bt in range(1, b + 1):
        if b % bt != 0 or bt * n > target_rows or (bt * n) % 128 != 0:
            continue
        score = ((b // bt) >= 2, bt * n)
        if best_score is None or score > best_score:
            best_bt, best_score = bt, score
    return best_bt if best_bt is not None else b


def _pick_group_rows(m, n):
    """Diagonal super-block size: 128 when exact (no example crosses a 128-row
    boundary and m tiles evenly), else a single group covering the block."""
    if m % 128 == 0 and 128 % n == 0:
        return 128
    return m


def multihead_attention_pallas(x, mask, fused_params, *,
                               num_heads, input_dim, block_batch=None):
    b, n, d = x.shape
    assert d == input_dim
    all_dim = num_heads * input_dim
    wqkv, bqkv, wf_b, bf_f = fused_params

    bt = _pick_block_batch(b, n) if block_batch is None else block_batch
    assert b % bt == 0
    m = bt * n                      # rows folded into each matmul (256 here)
    g_rows = _pick_group_rows(m, n)
    num_groups = m // g_rows

    r_total = b * n
    # dense 2-D slabs: no reshapes are needed inside the kernel
    x2 = x.reshape(r_total, d)
    mflat = mask.astype(jnp.float32).reshape(r_total)
    ids = (jnp.arange(r_total) // n).astype(jnp.float32)
    mrow = mflat.reshape(r_total, 1)                              # query validity
    rid = ids.reshape(r_total, 1)                                 # query example id
    ckey = jnp.where(mflat > 0, ids, -1.0).reshape(1, r_total)    # key example code

    kernel = make_mha_kernel(num_heads, input_dim, g_rows, num_groups)
    full = lambda i: (0, 0)          # grid-invariant blocks (DMA'd once)

    # advisory cost estimate: helps XLA schedule this small kernel
    flops = (2 * r_total * d * 3 * all_dim                 # fused QKV
             + 2 * 2 * num_heads * r_total * g_rows * d    # scores + PV
             + 2 * r_total * all_dim * d)                  # fc
    transcendentals = num_heads * r_total * g_rows         # exp
    bytes_accessed = (2 * r_total * d * 4 + 3 * r_total * 4
                      + d * 3 * all_dim * 2 + 3 * all_dim * 4
                      + all_dim * d * 2 + d * 4)

    out2 = pl.pallas_call(
        kernel,
        out_shape=jax.ShapeDtypeStruct((r_total, d), x.dtype),
        grid_spec=pltpu.PrefetchScalarGridSpec(
            num_scalar_prefetch=0,
            grid=(b // bt,),
            in_specs=[
                pl.BlockSpec((m, d), lambda i: (i, 0)),        # x rows
                pl.BlockSpec((m, 1), lambda i: (i, 0)),        # row mask
                pl.BlockSpec((m, 1), lambda i: (i, 0)),        # row example id
                pl.BlockSpec((1, m), lambda i: (0, i)),        # key example code
                pl.BlockSpec((d, 3 * all_dim), full),          # fused Wqkv (bf16)
                pl.BlockSpec((1, 3 * all_dim), full),          # fused bqkv
                pl.BlockSpec((all_dim, d), full),              # Wf (bf16)
                pl.BlockSpec((1, d), full),                    # bf
            ],
            out_specs=pl.BlockSpec((m, d), lambda i: (i, 0)),
        ),
        compiler_params=pltpu.CompilerParams(
            dimension_semantics=("parallel",)),
        cost_estimate=pl.CostEstimate(flops=int(flops),
                                      transcendentals=int(transcendentals),
                                      bytes_accessed=int(bytes_accessed)),
    )(x2, mrow, rid, ckey, wqkv, bqkv, wf_b, bf_f)

    return out2.reshape(b, n, d)


def multihead_attention_ref(x, mask, params, *, num_heads, input_dim):
    """Pure-JAX f32 reference matching the PyTorch forward (eval mode)."""
    wq, bq, wk, bk, wv, bv, wf, bf = params
    b, n, d = x.shape

    def proj(w_t, bias):
        y = jnp.einsum("bnd,de->bne", x, w_t) + bias
        return y.reshape(b, n, num_heads, input_dim).transpose(0, 2, 1, 3)

    q, k, v = proj(wq, bq), proj(wk, bk), proj(wv, bv)
    scores = jnp.einsum("bhqd,bhkd->bhqk", q, k) / math.sqrt(input_dim)
    mask1 = mask[:, None, None, :]
    scores = jnp.where(mask1 == 0, -jnp.inf, scores)
    attn = jax.nn.softmax(scores, axis=-1)
    out = jnp.einsum("bhqk,bhkd->bhqd", attn, v)
    mask2 = mask[:, None, :, None]
    out = jnp.where(mask2 == 0, 0.0, out)
    out = out.transpose(0, 2, 1, 3).reshape(b, n, num_heads * input_dim)
    return jnp.einsum("bne,ed->bnd", out, wf) + bf


if __name__ == "__main__":
    # small shapes consistent with the module; batch sized so each of the two
    # grid steps folds 32 examples * seq 8 = 256 matmul rows.
    batch, seq, input_dim, num_heads = 64, 8, 32, 4
    all_dim = input_dim * num_heads
    dropout = 0.1  # unused at inference

    key = jax.random.PRNGKey(0)
    k_x, k_wq, k_bq, k_wk, k_bk, k_wv, k_bv, k_wf, k_bf = jax.random.split(key, 9)

    x = jax.random.normal(k_x, (batch, seq, input_dim), dtype=jnp.float32)
    # mask: 1 = valid position, 0 = padded; at least one valid key per example
    lengths = (jnp.arange(batch) % seq) + 1
    mask = (jnp.arange(seq)[None, :] < lengths[:, None]).astype(jnp.float32)

    def lin_init(kw, kb, fan_in, fan_out):
        bound = 1.0 / math.sqrt(fan_in)
        w_t = jax.random.uniform(kw, (fan_in, fan_out), jnp.float32, -bound, bound)
        b = jax.random.uniform(kb, (1, fan_out), jnp.float32, -bound, bound)
        return w_t, b

    wq, bq = lin_init(k_wq, k_bq, input_dim, all_dim)
    wk, bk = lin_init(k_wk, k_bk, input_dim, all_dim)
    wv, bv = lin_init(k_wv, k_bv, input_dim, all_dim)
    wf, bf = lin_init(k_wf, k_bf, all_dim, input_dim)
    params = (wq, bq, wk, bk, wv, bv, wf, bf)

    # one-time weight fusion / scale folding / bf16 cast (outside jit)
    fused = prepare_mha_params(params, num_heads=num_heads, input_dim=input_dim)

    run = functools.partial(multihead_attention_pallas,
                            num_heads=num_heads, input_dim=input_dim)
    out = jax.jit(run)(x, mask, fused)
    out = jax.block_until_ready(out)

    ref = multihead_attention_ref(x, mask, params,
                                  num_heads=num_heads, input_dim=input_dim)
    assert out.shape == (batch, seq, input_dim)
    # bf16 MXU operands with f32 accumulation -> relaxed tolerance vs f32 ref
    max_err = float(jnp.max(jnp.abs(out - ref)))
    assert jnp.allclose(out, ref, atol=3e-2, rtol=3e-2), \
        f"mismatch vs reference (max abs err {max_err})"

    print("KERNEL_OK")
</pallas_src>

<mosaic_0001>
module attributes {stable_mosaic.version = 11 : i64} {
  func.func @kernel(%arg0: i32, %arg1: memref<256x32xf32, #tpu.memory_space<vmem>>, %arg2: memref<256x1xf32, #tpu.memory_space<vmem>>, %arg3: memref<256x1xf32, #tpu.memory_space<vmem>>, %arg4: memref<1x256xf32, #tpu.memory_space<vmem>>, %arg5: memref<32x384xbf16, #tpu.memory_space<vmem>>, %arg6: memref<1x384xf32, #tpu.memory_space<vmem>>, %arg7: memref<128x32xbf16, #tpu.memory_space<vmem>>, %arg8: memref<1x32xf32, #tpu.memory_space<vmem>>, %arg9: memref<256x32xf32, #tpu.memory_space<vmem>>) attributes {dimension_semantics = [#tpu.dimension_semantics<parallel>], iteration_bounds = array<i64: 2>, scalar_prefetch = 0 : i64, scratch_operands = 0 : i64, tpu.core_type = #tpu.core_type<tc>, window_params = [{transform_indices = @transform_0, window_bounds = array<i64: 256, 32>}, {transform_indices = @transform_1, window_bounds = array<i64: 256, 1>}, {transform_indices = @transform_2, window_bounds = array<i64: 256, 1>}, {transform_indices = @transform_3, window_bounds = array<i64: 1, 256>}, {pipeline_mode = #tpu.pipeline_mode<synchronous>, transform_indices = @transform_4, window_bounds = array<i64: 32, 384>}, {pipeline_mode = #tpu.pipeline_mode<synchronous>, transform_indices = @transform_5, window_bounds = array<i64: 1, 384>}, {pipeline_mode = #tpu.pipeline_mode<synchronous>, transform_indices = @transform_6, window_bounds = array<i64: 128, 32>}, {pipeline_mode = #tpu.pipeline_mode<synchronous>, transform_indices = @transform_7, window_bounds = array<i64: 1, 32>}, {transform_indices = @transform_8, window_bounds = array<i64: 256, 32>}]} {
    %c0 = arith.constant 0 : index
    %c0_0 = arith.constant 0 : index
    %0 = vector.load %arg1[%c0, %c0_0] : memref<256x32xf32, #tpu.memory_space<vmem>>, vector<256x32xf32>
    %1 = arith.truncf %0 : vector<256x32xf32> to vector<256x32xbf16>
    %c0_1 = arith.constant 0 : index
    %c0_2 = arith.constant 0 : index
    %2 = vector.load %arg5[%c0_1, %c0_2] : memref<32x384xbf16, #tpu.memory_space<vmem>>, vector<32x384xbf16>
    %cst = arith.constant dense<0.000000e+00> : vector<256x384xf32>
    %3 = tpu.matmul %1, %2, %cst {dimension_numbers = #tpu.dot_dimension_numbers<[1], [0], [0], [1], [0, 0, 1, 1], [], []>} : vector<256x32xbf16>, vector<32x384xbf16>, vector<256x384xf32> -> vector<256x384xf32>
    %c0_3 = arith.constant 0 : index
    %c0_4 = arith.constant 0 : index
    %4 = vector.load %arg6[%c0_3, %c0_4] : memref<1x384xf32, #tpu.memory_space<vmem>>, vector<1x384xf32>
    %5 = vector.broadcast %4 : vector<1x384xf32> to vector<256x384xf32>
    %6 = arith.addf %3, %5 : vector<256x384xf32>
    %7 = arith.truncf %6 : vector<256x384xf32> to vector<256x384xbf16>
    %8 = vector.extract_strided_slice %7 {offsets = [0, 0], sizes = [128, 384], strides = [1, 1]} : vector<256x384xbf16> to vector<128x384xbf16>
    %c0_5 = arith.constant 0 : index
    %c0_6 = arith.constant 0 : index
    %9 = vector.load %arg3[%c0_5, %c0_6] : memref<256x1xf32, #tpu.memory_space<vmem>>, vector<128x1xf32>
    %c0_7 = arith.constant 0 : index
    %c0_8 = arith.constant 0 : index
    %10 = vector.load %arg4[%c0_7, %c0_8] : memref<1x256xf32, #tpu.memory_space<vmem>>, vector<1x128xf32>
    %11 = vector.broadcast %9 : vector<128x1xf32> to vector<128x128xf32>
    %12 = vector.broadcast %10 : vector<1x128xf32> to vector<128x128xf32>
    %13 = arith.cmpf oeq, %11, %12 : vector<128x128xf32>
    %14 = vector.extract_strided_slice %8 {offsets = [0, 0], sizes = [128, 32], strides = [1, 1]} : vector<128x384xbf16> to vector<128x32xbf16>
    %15 = vector.extract_strided_slice %8 {offsets = [0, 128], sizes = [128, 32], strides = [1, 1]} : vector<128x384xbf16> to vector<128x32xbf16>
    %16 = vector.extract_strided_slice %8 {offsets = [0, 256], sizes = [128, 32], strides = [1, 1]} : vector<128x384xbf16> to vector<128x32xbf16>
    %cst_9 = arith.constant dense<0.000000e+00> : vector<128x128xf32>
    %17 = tpu.matmul %14, %15, %cst_9 {dimension_numbers = #tpu.dot_dimension_numbers<[1], [1], [0], [0], [0, 0, 1, 0], [], []>} : vector<128x32xbf16>, vector<128x32xbf16>, vector<128x128xf32> -> vector<128x128xf32>
    %cst_10 = arith.constant -1.000000e+30 : f32
    %18 = vector.broadcast %cst_10 : f32 to vector<128x128xf32>
    %19 = arith.select %13, %17, %18 : vector<128x128xi1>, vector<128x128xf32>
    %cst_11 = arith.constant dense<0xFF800000> : vector<128xf32>
    %20 = vector.multi_reduction <maximumf>, %19, %cst_11 [1] : vector<128x128xf32> to vector<128xf32>
    %21 = vector.shape_cast %20 : vector<128xf32> to vector<128x1xf32>
    %22 = vector.broadcast %21 : vector<128x1xf32> to vector<128x128xf32>
    %23 = arith.subf %19, %22 : vector<128x128xf32>
    %24 = math.exp %23 : vector<128x128xf32>
    %cst_12 = arith.constant dense<0.000000e+00> : vector<128xf32>
    %25 = vector.multi_reduction <add>, %24, %cst_12 [1] : vector<128x128xf32> to vector<128xf32>
    %26 = vector.shape_cast %25 : vector<128xf32> to vector<128x1xf32>
    %27 = tpu.reciprocal %26 {approx = true} : vector<128x1xf32> -> vector<128x1xf32>
    %28 = vector.broadcast %27 : vector<128x1xf32> to vector<128x128xf32>
    %29 = arith.mulf %24, %28 : vector<128x128xf32>
    %30 = arith.truncf %29 : vector<128x128xf32> to vector<128x128xbf16>
    %cst_13 = arith.constant dense<0.000000e+00> : vector<128x32xf32>
    %31 = tpu.matmul %30, %16, %cst_13 {dimension_numbers = #tpu.dot_dimension_numbers<[1], [0], [0], [1], [0, 0, 1, 1], [], []>} : vector<128x128xbf16>, vector<128x32xbf16>, vector<128x32xf32> -> vector<128x32xf32>
    %32 = vector.extract_strided_slice %8 {offsets = [0, 32], sizes = [128, 32], strides = [1, 1]} : vector<128x384xbf16> to vector<128x32xbf16>
    %33 = vector.extract_strided_slice %8 {offsets = [0, 160], sizes = [128, 32], strides = [1, 1]} : vector<128x384xbf16> to vector<128x32xbf16>
    %34 = vector.extract_strided_slice %8 {offsets = [0, 288], sizes = [128, 32], strides = [1, 1]} : vector<128x384xbf16> to vector<128x32xbf16>
    %cst_14 = arith.constant dense<0.000000e+00> : vector<128x128xf32>
    %35 = tpu.matmul %32, %33, %cst_14 {dimension_numbers = #tpu.dot_dimension_numbers<[1], [1], [0], [0], [0, 0, 1, 0], [], []>} : vector<128x32xbf16>, vector<128x32xbf16>, vector<128x128xf32> -> vector<128x128xf32>
    %cst_15 = arith.constant -1.000000e+30 : f32
    %36 = vector.broadcast %cst_15 : f32 to vector<128x128xf32>
    %37 = arith.select %13, %35, %36 : vector<128x128xi1>, vector<128x128xf32>
    %cst_16 = arith.constant dense<0xFF800000> : vector<128xf32>
    %38 = vector.multi_reduction <maximumf>, %37, %cst_16 [1] : vector<128x128xf32> to vector<128xf32>
    %39 = vector.shape_cast %38 : vector<128xf32> to vector<128x1xf32>
    %40 = vector.broadcast %39 : vector<128x1xf32> to vector<128x128xf32>
    %41 = arith.subf %37, %40 : vector<128x128xf32>
    %42 = math.exp %41 : vector<128x128xf32>
    %cst_17 = arith.constant dense<0.000000e+00> : vector<128xf32>
    %43 = vector.multi_reduction <add>, %42, %cst_17 [1] : vector<128x128xf32> to vector<128xf32>
    %44 = vector.shape_cast %43 : vector<128xf32> to vector<128x1xf32>
    %45 = tpu.reciprocal %44 {approx = true} : vector<128x1xf32> -> vector<128x1xf32>
    %46 = vector.broadcast %45 : vector<128x1xf32> to vector<128x128xf32>
    %47 = arith.mulf %42, %46 : vector<128x128xf32>
    %48 = arith.truncf %47 : vector<128x128xf32> to vector<128x128xbf16>
    %cst_18 = arith.constant dense<0.000000e+00> : vector<128x32xf32>
    %49 = tpu.matmul %48, %34, %cst_18 {dimension_numbers = #tpu.dot_dimension_numbers<[1], [0], [0], [1], [0, 0, 1, 1], [], []>} : vector<128x128xbf16>, vector<128x32xbf16>, vector<128x32xf32> -> vector<128x32xf32>
    %50 = vector.extract_strided_slice %8 {offsets = [0, 64], sizes = [128, 32], strides = [1, 1]} : vector<128x384xbf16> to vector<128x32xbf16>
    %51 = vector.extract_strided_slice %8 {offsets = [0, 192], sizes = [128, 32], strides = [1, 1]} : vector<128x384xbf16> to vector<128x32xbf16>
    %52 = vector.extract_strided_slice %8 {offsets = [0, 320], sizes = [128, 32], strides = [1, 1]} : vector<128x384xbf16> to vector<128x32xbf16>
    %cst_19 = arith.constant dense<0.000000e+00> : vector<128x128xf32>
    %53 = tpu.matmul %50, %51, %cst_19 {dimension_numbers = #tpu.dot_dimension_numbers<[1], [1], [0], [0], [0, 0, 1, 0], [], []>} : vector<128x32xbf16>, vector<128x32xbf16>, vector<128x128xf32> -> vector<128x128xf32>
    %cst_20 = arith.constant -1.000000e+30 : f32
    %54 = vector.broadcast %cst_20 : f32 to vector<128x128xf32>
    %55 = arith.select %13, %53, %54 : vector<128x128xi1>, vector<128x128xf32>
    %cst_21 = arith.constant dense<0xFF800000> : vector<128xf32>
    %56 = vector.multi_reduction <maximumf>, %55, %cst_21 [1] : vector<128x128xf32> to vector<128xf32>
    %57 = vector.shape_cast %56 : vector<128xf32> to vector<128x1xf32>
    %58 = vector.broadcast %57 : vector<128x1xf32> to vector<128x128xf32>
    %59 = arith.subf %55, %58 : vector<128x128xf32>
    %60 = math.exp %59 : vector<128x128xf32>
    %cst_22 = arith.constant dense<0.000000e+00> : vector<128xf32>
    %61 = vector.multi_reduction <add>, %60, %cst_22 [1] : vector<128x128xf32> to vector<128xf32>
    %62 = vector.shape_cast %61 : vector<128xf32> to vector<128x1xf32>
    %63 = tpu.reciprocal %62 {approx = true} : vector<128x1xf32> -> vector<128x1xf32>
    %64 = vector.broadcast %63 : vector<128x1xf32> to vector<128x128xf32>
    %65 = arith.mulf %60, %64 : vector<128x128xf32>
    %66 = arith.truncf %65 : vector<128x128xf32> to vector<128x128xbf16>
    %cst_23 = arith.constant dense<0.000000e+00> : vector<128x32xf32>
    %67 = tpu.matmul %66, %52, %cst_23 {dimension_numbers = #tpu.dot_dimension_numbers<[1], [0], [0], [1], [0, 0, 1, 1], [], []>} : vector<128x128xbf16>, vector<128x32xbf16>, vector<128x32xf32> -> vector<128x32xf32>
    %68 = vector.extract_strided_slice %8 {offsets = [0, 96], sizes = [128, 32], strides = [1, 1]} : vector<128x384xbf16> to vector<128x32xbf16>
    %69 = vector.extract_strided_slice %8 {offsets = [0, 224], sizes = [128, 32], strides = [1, 1]} : vector<128x384xbf16> to vector<128x32xbf16>
    %70 = vector.extract_strided_slice %8 {offsets = [0, 352], sizes = [128, 32], strides = [1, 1]} : vector<128x384xbf16> to vector<128x32xbf16>
    %cst_24 = arith.constant dense<0.000000e+00> : vector<128x128xf32>
    %71 = tpu.matmul %68, %69, %cst_24 {dimension_numbers = #tpu.dot_dimension_numbers<[1], [1], [0], [0], [0, 0, 1, 0], [], []>} : vector<128x32xbf16>, vector<128x32xbf16>, vector<128x128xf32> -> vector<128x128xf32>
    %cst_25 = arith.constant -1.000000e+30 : f32
    %72 = vector.broadcast %cst_25 : f32 to vector<128x128xf32>
    %73 = arith.select %13, %71, %72 : vector<128x128xi1>, vector<128x128xf32>
    %cst_26 = arith.constant dense<0xFF800000> : vector<128xf32>
    %74 = vector.multi_reduction <maximumf>, %73, %cst_26 [1] : vector<128x128xf32> to vector<128xf32>
    %75 = vector.shape_cast %74 : vector<128xf32> to vector<128x1xf32>
    %76 = vector.broadcast %75 : vector<128x1xf32> to vector<128x128xf32>
    %77 = arith.subf %73, %76 : vector<128x128xf32>
    %78 = math.exp %77 : vector<128x128xf32>
    %cst_27 = arith.constant dense<0.000000e+00> : vector<128xf32>
    %79 = vector.multi_reduction <add>, %78, %cst_27 [1] : vector<128x128xf32> to vector<128xf32>
    %80 = vector.shape_cast %79 : vector<128xf32> to vector<128x1xf32>
    %81 = tpu.reciprocal %80 {approx = true} : vector<128x1xf32> -> vector<128x1xf32>
    %82 = vector.broadcast %81 : vector<128x1xf32> to vector<128x128xf32>
    %83 = arith.mulf %78, %82 : vector<128x128xf32>
    %84 = arith.truncf %83 : vector<128x128xf32> to vector<128x128xbf16>
    %cst_28 = arith.constant dense<0.000000e+00> : vector<128x32xf32>
    %85 = tpu.matmul %84, %70, %cst_28 {dimension_numbers = #tpu.dot_dimension_numbers<[1], [0], [0], [1], [0, 0, 1, 1], [], []>} : vector<128x128xbf16>, vector<128x32xbf16>, vector<128x32xf32> -> vector<128x32xf32>
    %86 = tpu.concatenate %31, %49, %67, %85 in 1 : vector<128x32xf32>, vector<128x32xf32>, vector<128x32xf32>, vector<128x32xf32> -> vector<128x128xf32>
    %87 = vector.extract_strided_slice %7 {offsets = [128, 0], sizes = [128, 384], strides = [1, 1]} : vector<256x384xbf16> to vector<128x384xbf16>
    %c128 = arith.constant 128 : index
    %c0_29 = arith.constant 0 : index
    %88 = vector.load %arg3[%c128, %c0_29] : memref<256x1xf32, #tpu.memory_space<vmem>>, vector<128x1xf32>
    %c0_30 = arith.constant 0 : index
    %c128_31 = arith.constant 128 : index
    %89 = vector.load %arg4[%c0_30, %c128_31] : memref<1x256xf32, #tpu.memory_space<vmem>>, vector<1x128xf32>
    %90 = vector.broadcast %88 : vector<128x1xf32> to vector<128x128xf32>
    %91 = vector.broadcast %89 : vector<1x128xf32> to vector<128x128xf32>
    %92 = arith.cmpf oeq, %90, %91 : vector<128x128xf32>
    %93 = vector.extract_strided_slice %87 {offsets = [0, 0], sizes = [128, 32], strides = [1, 1]} : vector<128x384xbf16> to vector<128x32xbf16>
    %94 = vector.extract_strided_slice %87 {offsets = [0, 128], sizes = [128, 32], strides = [1, 1]} : vector<128x384xbf16> to vector<128x32xbf16>
    %95 = vector.extract_strided_slice %87 {offsets = [0, 256], sizes = [128, 32], strides = [1, 1]} : vector<128x384xbf16> to vector<128x32xbf16>
    %cst_32 = arith.constant dense<0.000000e+00> : vector<128x128xf32>
    %96 = tpu.matmul %93, %94, %cst_32 {dimension_numbers = #tpu.dot_dimension_numbers<[1], [1], [0], [0], [0, 0, 1, 0], [], []>} : vector<128x32xbf16>, vector<128x32xbf16>, vector<128x128xf32> -> vector<128x128xf32>
    %cst_33 = arith.constant -1.000000e+30 : f32
    %97 = vector.broadcast %cst_33 : f32 to vector<128x128xf32>
    %98 = arith.select %92, %96, %97 : vector<128x128xi1>, vector<128x128xf32>
    %cst_34 = arith.constant dense<0xFF800000> : vector<128xf32>
    %99 = vector.multi_reduction <maximumf>, %98, %cst_34 [1] : vector<128x128xf32> to vector<128xf32>
    %100 = vector.shape_cast %99 : vector<128xf32> to vector<128x1xf32>
    %101 = vector.broadcast %100 : vector<128x1xf32> to vector<128x128xf32>
    %102 = arith.subf %98, %101 : vector<128x128xf32>
    %103 = math.exp %102 : vector<128x128xf32>
    %cst_35 = arith.constant dense<0.000000e+00> : vector<128xf32>
    %104 = vector.multi_reduction <add>, %103, %cst_35 [1] : vector<128x128xf32> to vector<128xf32>
    %105 = vector.shape_cast %104 : vector<128xf32> to vector<128x1xf32>
    %106 = tpu.reciprocal %105 {approx = true} : vector<128x1xf32> -> vector<128x1xf32>
    %107 = vector.broadcast %106 : vector<128x1xf32> to vector<128x128xf32>
    %108 = arith.mulf %103, %107 : vector<128x128xf32>
    %109 = arith.truncf %108 : vector<128x128xf32> to vector<128x128xbf16>
    %cst_36 = arith.constant dense<0.000000e+00> : vector<128x32xf32>
    %110 = tpu.matmul %109, %95, %cst_36 {dimension_numbers = #tpu.dot_dimension_numbers<[1], [0], [0], [1], [0, 0, 1, 1], [], []>} : vector<128x128xbf16>, vector<128x32xbf16>, vector<128x32xf32> -> vector<128x32xf32>
    %111 = vector.extract_strided_slice %87 {offsets = [0, 32], sizes = [128, 32], strides = [1, 1]} : vector<128x384xbf16> to vector<128x32xbf16>
    %112 = vector.extract_strided_slice %87 {offsets = [0, 160], sizes = [128, 32], strides = [1, 1]} : vector<128x384xbf16> to vector<128x32xbf16>
    %113 = vector.extract_strided_slice %87 {offsets = [0, 288], sizes = [128, 32], strides = [1, 1]} : vector<128x384xbf16> to vector<128x32xbf16>
    %cst_37 = arith.constant dense<0.000000e+00> : vector<128x128xf32>
    %114 = tpu.matmul %111, %112, %cst_37 {dimension_numbers = #tpu.dot_dimension_numbers<[1], [1], [0], [0], [0, 0, 1, 0], [], []>} : vector<128x32xbf16>, vector<128x32xbf16>, vector<128x128xf32> -> vector<128x128xf32>
    %cst_38 = arith.constant -1.000000e+30 : f32
    %115 = vector.broadcast %cst_38 : f32 to vector<128x128xf32>
    %116 = arith.select %92, %114, %115 : vector<128x128xi1>, vector<128x128xf32>
    %cst_39 = arith.constant dense<0xFF800000> : vector<128xf32>
    %117 = vector.multi_reduction <maximumf>, %116, %cst_39 [1] : vector<128x128xf32> to vector<128xf32>
    %118 = vector.shape_cast %117 : vector<128xf32> to vector<128x1xf32>
    %119 = vector.broadcast %118 : vector<128x1xf32> to vector<128x128xf32>
    %120 = arith.subf %116, %119 : vector<128x128xf32>
    %121 = math.exp %120 : vector<128x128xf32>
    %cst_40 = arith.constant dense<0.000000e+00> : vector<128xf32>
    %122 = vector.multi_reduction <add>, %121, %cst_40 [1] : vector<128x128xf32> to vector<128xf32>
    %123 = vector.shape_cast %122 : vector<128xf32> to vector<128x1xf32>
    %124 = tpu.reciprocal %123 {approx = true} : vector<128x1xf32> -> vector<128x1xf32>
    %125 = vector.broadcast %124 : vector<128x1xf32> to vector<128x128xf32>
    %126 = arith.mulf %121, %125 : vector<128x128xf32>
    %127 = arith.truncf %126 : vector<128x128xf32> to vector<128x128xbf16>
    %cst_41 = arith.constant dense<0.000000e+00> : vector<128x32xf32>
    %128 = tpu.matmul %127, %113, %cst_41 {dimension_numbers = #tpu.dot_dimension_numbers<[1], [0], [0], [1], [0, 0, 1, 1], [], []>} : vector<128x128xbf16>, vector<128x32xbf16>, vector<128x32xf32> -> vector<128x32xf32>
    %129 = vector.extract_strided_slice %87 {offsets = [0, 64], sizes = [128, 32], strides = [1, 1]} : vector<128x384xbf16> to vector<128x32xbf16>
    %130 = vector.extract_strided_slice %87 {offsets = [0, 192], sizes = [128, 32], strides = [1, 1]} : vector<128x384xbf16> to vector<128x32xbf16>
    %131 = vector.extract_strided_slice %87 {offsets = [0, 320], sizes = [128, 32], strides = [1, 1]} : vector<128x384xbf16> to vector<128x32xbf16>
    %cst_42 = arith.constant dense<0.000000e+00> : vector<128x128xf32>
    %132 = tpu.matmul %129, %130, %cst_42 {dimension_numbers = #tpu.dot_dimension_numbers<[1], [1], [0], [0], [0, 0, 1, 0], [], []>} : vector<128x32xbf16>, vector<128x32xbf16>, vector<128x128xf32> -> vector<128x128xf32>
    %cst_43 = arith.constant -1.000000e+30 : f32
    %133 = vector.broadcast %cst_43 : f32 to vector<128x128xf32>
    %134 = arith.select %92, %132, %133 : vector<128x128xi1>, vector<128x128xf32>
    %cst_44 = arith.constant dense<0xFF800000> : vector<128xf32>
    %135 = vector.multi_reduction <maximumf>, %134, %cst_44 [1] : vector<128x128xf32> to vector<128xf32>
    %136 = vector.shape_cast %135 : vector<128xf32> to vector<128x1xf32>
    %137 = vector.broadcast %136 : vector<128x1xf32> to vector<128x128xf32>
    %138 = arith.subf %134, %137 : vector<128x128xf32>
    %139 = math.exp %138 : vector<128x128xf32>
    %cst_45 = arith.constant dense<0.000000e+00> : vector<128xf32>
    %140 = vector.multi_reduction <add>, %139, %cst_45 [1] : vector<128x128xf32> to vector<128xf32>
    %141 = vector.shape_cast %140 : vector<128xf32> to vector<128x1xf32>
    %142 = tpu.reciprocal %141 {approx = true} : vector<128x1xf32> -> vector<128x1xf32>
    %143 = vector.broadcast %142 : vector<128x1xf32> to vector<128x128xf32>
    %144 = arith.mulf %139, %143 : vector<128x128xf32>
    %145 = arith.truncf %144 : vector<128x128xf32> to vector<128x128xbf16>
    %cst_46 = arith.constant dense<0.000000e+00> : vector<128x32xf32>
    %146 = tpu.matmul %145, %131, %cst_46 {dimension_numbers = #tpu.dot_dimension_numbers<[1], [0], [0], [1], [0, 0, 1, 1], [], []>} : vector<128x128xbf16>, vector<128x32xbf16>, vector<128x32xf32> -> vector<128x32xf32>
    %147 = vector.extract_strided_slice %87 {offsets = [0, 96], sizes = [128, 32], strides = [1, 1]} : vector<128x384xbf16> to vector<128x32xbf16>
    %148 = vector.extract_strided_slice %87 {offsets = [0, 224], sizes = [128, 32], strides = [1, 1]} : vector<128x384xbf16> to vector<128x32xbf16>
    %149 = vector.extract_strided_slice %87 {offsets = [0, 352], sizes = [128, 32], strides = [1, 1]} : vector<128x384xbf16> to vector<128x32xbf16>
    %cst_47 = arith.constant dense<0.000000e+00> : vector<128x128xf32>
    %150 = tpu.matmul %147, %148, %cst_47 {dimension_numbers = #tpu.dot_dimension_numbers<[1], [1], [0], [0], [0, 0, 1, 0], [], []>} : vector<128x32xbf16>, vector<128x32xbf16>, vector<128x128xf32> -> vector<128x128xf32>
    %cst_48 = arith.constant -1.000000e+30 : f32
    %151 = vector.broadcast %cst_48 : f32 to vector<128x128xf32>
    %152 = arith.select %92, %150, %151 : vector<128x128xi1>, vector<128x128xf32>
    %cst_49 = arith.constant dense<0xFF800000> : vector<128xf32>
    %153 = vector.multi_reduction <maximumf>, %152, %cst_49 [1] : vector<128x128xf32> to vector<128xf32>
    %154 = vector.shape_cast %153 : vector<128xf32> to vector<128x1xf32>
    %155 = vector.broadcast %154 : vector<128x1xf32> to vector<128x128xf32>
    %156 = arith.subf %152, %155 : vector<128x128xf32>
    %157 = math.exp %156 : vector<128x128xf32>
    %cst_50 = arith.constant dense<0.000000e+00> : vector<128xf32>
    %158 = vector.multi_reduction <add>, %157, %cst_50 [1] : vector<128x128xf32> to vector<128xf32>
    %159 = vector.shape_cast %158 : vector<128xf32> to vector<128x1xf32>
    %160 = tpu.reciprocal %159 {approx = true} : vector<128x1xf32> -> vector<128x1xf32>
    %161 = vector.broadcast %160 : vector<128x1xf32> to vector<128x128xf32>
    %162 = arith.mulf %157, %161 : vector<128x128xf32>
    %163 = arith.truncf %162 : vector<128x128xf32> to vector<128x128xbf16>
    %cst_51 = arith.constant dense<0.000000e+00> : vector<128x32xf32>
    %164 = tpu.matmul %163, %149, %cst_51 {dimension_numbers = #tpu.dot_dimension_numbers<[1], [0], [0], [1], [0, 0, 1, 1], [], []>} : vector<128x128xbf16>, vector<128x32xbf16>, vector<128x32xf32> -> vector<128x32xf32>
    %165 = tpu.concatenate %110, %128, %146, %164 in 1 : vector<128x32xf32>, vector<128x32xf32>, vector<128x32xf32>, vector<128x32xf32> -> vector<128x128xf32>
    %166 = tpu.concatenate %86, %165 in 0 : vector<128x128xf32>, vector<128x128xf32> -> vector<256x128xf32>
    %c0_52 = arith.constant 0 : index
    %c0_53 = arith.constant 0 : index
    %167 = vector.load %arg2[%c0_52, %c0_53] : memref<256x1xf32, #tpu.memory_space<vmem>>, vector<256x1xf32>
    %cst_54 = arith.constant 0.000000e+00 : f32
    %168 = vector.broadcast %cst_54 : f32 to vector<256x1xf32>
    %169 = arith.cmpf one, %167, %168 : vector<256x1xf32>
    %170 = arith.extui %169 : vector<256x1xi1> to vector<256x1xi32>
    %171 = arith.sitofp %170 : vector<256x1xi32> to vector<256x1xf32>
    %172 = vector.broadcast %171 : vector<256x1xf32> to vector<256x128xf32>
    %173 = arith.mulf %166, %172 : vector<256x128xf32>
    %174 = arith.truncf %173 : vector<256x128xf32> to vector<256x128xbf16>
    %c0_55 = arith.constant 0 : index
    %c0_56 = arith.constant 0 : index
    %175 = vector.load %arg7[%c0_55, %c0_56] : memref<128x32xbf16, #tpu.memory_space<vmem>>, vector<128x32xbf16>
    %cst_57 = arith.constant dense<0.000000e+00> : vector<256x32xf32>
    %176 = tpu.matmul %174, %175, %cst_57 {dimension_numbers = #tpu.dot_dimension_numbers<[1], [0], [0], [1], [0, 0, 1, 1], [], []>} : vector<256x128xbf16>, vector<128x32xbf16>, vector<256x32xf32> -> vector<256x32xf32>
    %c0_58 = arith.constant 0 : index
    %c0_59 = arith.constant 0 : index
    %177 = vector.load %arg8[%c0_58, %c0_59] : memref<1x32xf32, #tpu.memory_space<vmem>>, vector<1x32xf32>
    %178 = vector.broadcast %177 : vector<1x32xf32> to vector<256x32xf32>
    %179 = arith.addf %176, %178 : vector<256x32xf32>
    %c0_60 = arith.constant 0 : index
    %c0_61 = arith.constant 0 : index
    %180 = vector.load %arg9[%c0_60, %c0_61] : memref<256x32xf32, #tpu.memory_space<vmem>>, vector<256x32xf32>
    tpu.vector_store %arg9[%c0_60, %c0_61], %179 {strides = array<i32>} : memref<256x32xf32, #tpu.memory_space<vmem>>, vector<256x32xf32>,
    return
  }
  func.func @transform_0(%arg0: i32) -> (i32, i32) {
    %c0_i32 = arith.constant 0 : i32
    %c0_i32_0 = arith.constant 0 : i32
    return %arg0, %c0_i32 : i32, i32
  }
  func.func @transform_1(%arg0: i32) -> (i32, i32) {
    %c0_i32 = arith.constant 0 : i32
    %c0_i32_0 = arith.constant 0 : i32
    return %arg0, %c0_i32 : i32, i32
  }
  func.func @transform_2(%arg0: i32) -> (i32, i32) {
    %c0_i32 = arith.constant 0 : i32
    %c0_i32_0 = arith.constant 0 : i32
    return %arg0, %c0_i32 : i32, i32
  }
  func.func @transform_3(%arg0: i32) -> (i32, i32) {
    %c0_i32 = arith.constant 0 : i32
    %c0_i32_0 = arith.constant 0 : i32
    return %c0_i32, %arg0 : i32, i32
  }
  func.func @transform_4(%arg0: i32) -> (i32, i32) {
    %c0_i32 = arith.constant 0 : i32
    %c0_i32_0 = arith.constant 0 : i32
    %c0_i32_1 = arith.constant 0 : i32
    return %c0_i32, %c0_i32_0 : i32, i32
  }
  func.func @transform_5(%arg0: i32) -> (i32, i32) {
    %c0_i32 = arith.constant 0 : i32
    %c0_i32_0 = arith.constant 0 : i32
    %c0_i32_1 = arith.constant 0 : i32
    return %c0_i32, %c0_i32_0 : i32, i32
  }
  func.func @transform_6(%arg0: i32) -> (i32, i32) {
    %c0_i32 = arith.constant 0 : i32
    %c0_i32_0 = arith.constant 0 : i32
    %c0_i32_1 = arith.constant 0 : i32
    return %c0_i32, %c0_i32_0 : i32, i32
  }
  func.func @transform_7(%arg0: i32) -> (i32, i32) {
    %c0_i32 = arith.constant 0 : i32
    %c0_i32_0 = arith.constant 0 : i32
    %c0_i32_1 = arith.constant 0 : i32
    return %c0_i32, %c0_i32_0 : i32, i32
  }
  func.func @transform_8(%arg0: i32) -> (i32, i32) {
    %c0_i32 = arith.constant 0 : i32
    %c0_i32_0 = arith.constant 0 : i32
    return %arg0, %c0_i32 : i32, i32
  }
}

</mosaic_0001>

<llo_original>
// kernel: multihead_attention_pallas.1
$region0: #{multihead_attention_pallas.1}
  #allocation0 [shape = 'u32[]', space=smem, size = 0x4, offset = 0x4, fixed_abs, tag = 'smem constant byte address 0x4 - core index']
  #allocation1 [shape = 'u32[144,128]{1,0:T(1,128)}', space=vmem, size = 0x12000, scoped, tag = 'internal scratch']
  %s0 = inlined_call_operand.vmem [shape: f32[512,32], index: 0, kind: input, shape index: {}]
  %s1 = inlined_call_operand.vmem [shape: f32[512,1], index: 1, kind: input, shape index: {}]
  %s2 = inlined_call_operand.vmem [shape: f32[512,1], index: 2, kind: input, shape index: {}]
  %s3 = inlined_call_operand.vmem [shape: f32[1,512], index: 3, kind: input, shape index: {}]
  %s4 = inlined_call_operand.vmem [shape: bf16[32,384], index: 4, kind: input, shape index: {}]
  %s5 = inlined_call_operand.vmem [shape: f32[1,384], index: 5, kind: input, shape index: {}]
  %s6 = inlined_call_operand.vmem [shape: bf16[128,32], index: 6, kind: input, shape index: {}]
  %s7 = inlined_call_operand.vmem [shape: f32[1,32], index: 7, kind: input, shape index: {}]
  %s8 = inlined_call_operand.vmem [shape: f32[512,32], index: 8, kind: output, shape index: {}]
  %s9 = sld [smem:[#allocation0]]
  $region65: #{multihead_attention_pallas.1} parent=0
    _
  %s11 = ssub.s32 1, %s9
  %s12 = scalar_select 0, %s11, %s9
  loop: start=0, step=1, limit=4
  $region2: #{multihead_attention_pallas.1} parent=0 // loop_pre_header
    _
  $region3: #{multihead_attention_pallas.1} parent=0 // loop_header
    %s14 = sphi 0, %s18
    %p15 = scmp.ge.s32.totalorder %s14, 4
    %s24 = sphi 0, %s26
    %s27 = sphi 0, %s24
    %s28 = sphi 0, %s27
    %s44 = sphi 0, %s28
    %s50 = sphi 0, %s52
    %s53 = sphi 0, %s50
    %s54 = sphi 0, %s53
    %s70 = sphi 0, %s54
    %s76 = sphi 0, %s78
    %s79 = sphi 0, %s76
    %s80 = sphi 0, %s79
    %s96 = sphi 0, %s80
    %s102 = sphi 0, %s104
    %s105 = sphi 0, %s102
    %s106 = sphi 0, %s105
    %s122 = sphi 0, %s106
    %s126 = sphi 0, %s126
    %s128 = sphi 0, %s126
    %s129 = sphi 0, %s128
    %s143 = sphi 0, %s129
    %s147 = sphi 0, %s147
    %s149 = sphi 0, %s147
    %s150 = sphi 0, %s149
    %s164 = sphi 0, %s150
    %s168 = sphi 0, %s168
    %s170 = sphi 0, %s168
    %s171 = sphi 0, %s170
    %s185 = sphi 0, %s171
    %s189 = sphi 0, %s189
    %s191 = sphi 0, %s189
    %s192 = sphi 0, %s191
    %s206 = sphi 0, %s192
    %s212 = sphi 0, %s214
    %s215 = sphi 0, %s212
    %s216 = sphi 0, %s215
    %s232 = sphi 0, %s216
  $region4: #{multihead_attention_pallas.1} parent=0 // loop_header_branch
    %17 = sbr.rel (%p15) target = $region8
  $region5: #{multihead_attention_pallas.1} parent=0 // loop_body
    %s19 = ssub.s32 %s14, 1
    %s20 = ssub.s32 %s14, 2
    %s21 = sadd.s32 %s14, 1
    %s22 = ssub.s32 %s14, %s21
    %p23 = scmp.eq.s32.totalorder %s22, 0
    %s25 = sadd.s32 %s24, 1
    %s26 = scalar_select %p23, %s24, %s25
    %p29 = pneg %p23
    %p30 = scmp.eq.s32.totalorder %s14, 1
    %p31 = por %p29, %p30
    %p32 = scmp.ne.s32.totalorder %s24, %s27
    %p33 = scmp.eq.s32.totalorder %s14, 0
    %p34 = por %p32, %p33
    %p35 = scmp.ne.s32.totalorder %s24, %s27
    %p36 = scmp.eq.s32.totalorder %s19, 1
    %p37 = por %p35, %p36
    %p38 = scmp.ne.s32.totalorder %s27, %s28
    %p39 = scmp.eq.s32.totalorder %s19, 0
    %p40 = por %p38, %p39
    %p41 = scmp.ne.s32.totalorder %s27, %s28
    %p42 = scmp.eq.s32.totalorder %s20, 1
    %p43 = por %p41, %p42
    %p45 = scmp.ne.s32.totalorder %s28, %s44
    %p46 = scmp.eq.s32.totalorder %s20, 0
    %p47 = por %p45, %p46
    %s48 = ssub.s32 %s14, %s21
    %p49 = scmp.eq.s32.totalorder %s48, 0
    %s51 = sadd.s32 %s50, 1
    %s52 = scalar_select %p49, %s50, %s51
    %p55 = pneg %p49
    %p56 = scmp.eq.s32.totalorder %s14, 1
    %p57 = por %p55, %p56
    %p58 = scmp.ne.s32.totalorder %s50, %s53
    %p59 = scmp.eq.s32.totalorder %s14, 0
    %p60 = por %p58, %p59
    %p61 = scmp.ne.s32.totalorder %s50, %s53
    %p62 = scmp.eq.s32.totalorder %s19, 1
    %p63 = por %p61, %p62
    %p64 = scmp.ne.s32.totalorder %s53, %s54
    %p65 = scmp.eq.s32.totalorder %s19, 0
    %p66 = por %p64, %p65
    %p67 = scmp.ne.s32.totalorder %s53, %s54
    %p68 = scmp.eq.s32.totalorder %s20, 1
    %p69 = por %p67, %p68
    %p71 = scmp.ne.s32.totalorder %s54, %s70
    %p72 = scmp.eq.s32.totalorder %s20, 0
    %p73 = por %p71, %p72
    %s74 = ssub.s32 %s14, %s21
    %p75 = scmp.eq.s32.totalorder %s74, 0
    %s77 = sadd.s32 %s76, 1
    %s78 = scalar_select %p75, %s76, %s77
    %p81 = pneg %p75
    %p82 = scmp.eq.s32.totalorder %s14, 1
    %p83 = por %p81, %p82
    %p84 = scmp.ne.s32.totalorder %s76, %s79
    %p85 = scmp.eq.s32.totalorder %s14, 0
    %p86 = por %p84, %p85
    %p87 = scmp.ne.s32.totalorder %s76, %s79
    %p88 = scmp.eq.s32.totalorder %s19, 1
    %p89 = por %p87, %p88
    %p90 = scmp.ne.s32.totalorder %s79, %s80
    %p91 = scmp.eq.s32.totalorder %s19, 0
    %p92 = por %p90, %p91
    %p93 = scmp.ne.s32.totalorder %s79, %s80
    %p94 = scmp.eq.s32.totalorder %s20, 1
    %p95 = por %p93, %p94
    %p97 = scmp.ne.s32.totalorder %s80, %s96
    %p98 = scmp.eq.s32.totalorder %s20, 0
    %p99 = por %p97, %p98
    %s100 = ssub.s32 %s14, %s21
    %p101 = scmp.eq.s32.totalorder %s100, 0
    %s103 = sadd.s32 %s102, 1
    %s104 = scalar_select %p101, %s102, %s103
    %p107 = pneg %p101
    %p108 = scmp.eq.s32.totalorder %s14, 1
    %p109 = por %p107, %p108
    %p110 = scmp.ne.s32.totalorder %s102, %s105
    %p111 = scmp.eq.s32.totalorder %s14, 0
    %p112 = por %p110, %p111
    %p113 = scmp.ne.s32.totalorder %s102, %s105
    %p114 = scmp.eq.s32.totalorder %s19, 1
    %p115 = por %p113, %p114
    %p116 = scmp.ne.s32.totalorder %s105, %s106
    %p117 = scmp.eq.s32.totalorder %s19, 0
    %p118 = por %p116, %p117
    %p119 = scmp.ne.s32.totalorder %s105, %s106
    %p120 = scmp.eq.s32.totalorder %s20, 1
    %p121 = por %p119, %p120
    %p123 = scmp.ne.s32.totalorder %s106, %s122
    %p124 = scmp.eq.s32.totalorder %s20, 0
    %p125 = por %p123, %p124
    %s127 = sadd.s32 %s126, 1
    %p130 = scmp.eq.s32.totalorder %s14, 1
    %p131 = scmp.ne.s32.totalorder %s126, %s128
    %p132 = scmp.eq.s32.totalorder %s14, 0
    %p133 = por %p131, %p132
    %p134 = scmp.ne.s32.totalorder %s126, %s128
    %p135 = scmp.eq.s32.totalorder %s19, 1
    %p136 = por %p134, %p135
    %p137 = scmp.ne.s32.totalorder %s128, %s129
    %p138 = scmp.eq.s32.totalorder %s19, 0
    %p139 = por %p137, %p138
    %p140 = scmp.ne.s32.totalorder %s128, %s129
    %p141 = scmp.eq.s32.totalorder %s20, 1
    %p142 = por %p140, %p141
    %p144 = scmp.ne.s32.totalorder %s129, %s143
    %p145 = scmp.eq.s32.totalorder %s20, 0
    %p146 = por %p144, %p145
    %s148 = sadd.s32 %s147, 1
    %p151 = scmp.eq.s32.totalorder %s14, 1
    %p152 = scmp.ne.s32.totalorder %s147, %s149
    %p153 = scmp.eq.s32.totalorder %s14, 0
    %p154 = por %p152, %p153
    %p155 = scmp.ne.s32.totalorder %s147, %s149
    %p156 = scmp.eq.s32.totalorder %s19, 1
    %p157 = por %p155, %p156
    %p158 = scmp.ne.s32.totalorder %s149, %s150
    %p159 = scmp.eq.s32.totalorder %s19, 0
    %p160 = por %p158, %p159
    %p161 = scmp.ne.s32.totalorder %s149, %s150
    %p162 = scmp.eq.s32.totalorder %s20, 1
    %p163 = por %p161, %p162
    %p165 = scmp.ne.s32.totalorder %s150, %s164
    %p166 = scmp.eq.s32.totalorder %s20, 0
    %p167 = por %p165, %p166
    %s169 = sadd.s32 %s168, 1
    %p172 = scmp.eq.s32.totalorder %s14, 1
    %p173 = scmp.ne.s32.totalorder %s168, %s170
    %p174 = scmp.eq.s32.totalorder %s14, 0
    %p175 = por %p173, %p174
    %p176 = scmp.ne.s32.totalorder %s168, %s170
    %p177 = scmp.eq.s32.totalorder %s19, 1
    %p178 = por %p176, %p177
    %p179 = scmp.ne.s32.totalorder %s170, %s171
    %p180 = scmp.eq.s32.totalorder %s19, 0
    %p181 = por %p179, %p180
    %p182 = scmp.ne.s32.totalorder %s170, %s171
    %p183 = scmp.eq.s32.totalorder %s20, 1
    %p184 = por %p182, %p183
    %p186 = scmp.ne.s32.totalorder %s171, %s185
    %p187 = scmp.eq.s32.totalorder %s20, 0
    %p188 = por %p186, %p187
    %s190 = sadd.s32 %s189, 1
    %p193 = scmp.eq.s32.totalorder %s14, 1
    %p194 = scmp.ne.s32.totalorder %s189, %s191
    %p195 = scmp.eq.s32.totalorder %s14, 0
    %p196 = por %p194, %p195
    %p197 = scmp.ne.s32.totalorder %s189, %s191
    %p198 = scmp.eq.s32.totalorder %s19, 1
    %p199 = por %p197, %p198
    %p200 = scmp.ne.s32.totalorder %s191, %s192
    %p201 = scmp.eq.s32.totalorder %s19, 0
    %p202 = por %p200, %p201
    %p203 = scmp.ne.s32.totalorder %s191, %s192
    %p204 = scmp.eq.s32.totalorder %s20, 1
    %p205 = por %p203, %p204
    %p207 = scmp.ne.s32.totalorder %s192, %s206
    %p208 = scmp.eq.s32.totalorder %s20, 0
    %p209 = por %p207, %p208
    %s210 = ssub.s32 %s14, %s21
    %p211 = scmp.eq.s32.totalorder %s210, 0
    %s213 = sadd.s32 %s212, 1
    %s214 = scalar_select %p211, %s212, %s213
    %p217 = pneg %p211
    %p218 = scmp.eq.s32.totalorder %s14, 1
    %p219 = por %p217, %p218
    %p220 = scmp.ne.s32.totalorder %s212, %s215
    %p221 = scmp.eq.s32.totalorder %s14, 0
    %p222 = por %p220, %p221
    %p223 = scmp.ne.s32.totalorder %s212, %s215
    %p224 = scmp.eq.s32.totalorder %s19, 1
    %p225 = por %p223, %p224
    %p226 = scmp.ne.s32.totalorder %s215, %s216
    %p227 = scmp.eq.s32.totalorder %s19, 0
    %p228 = por %p226, %p227
    %p229 = scmp.ne.s32.totalorder %s215, %s216
    %p230 = scmp.eq.s32.totalorder %s20, 1
    %p231 = por %p229, %p230
    %p233 = scmp.ne.s32.totalorder %s216, %s232
    %p234 = scmp.eq.s32.totalorder %s20, 0
    %p235 = por %p233, %p234
    %p236 = scmp.le.s32.totalorder 1, %s14
    %p237 = scmp.lt.s32.totalorder %s14, 3
    %p238 = pnand %p236, %p237
    %p239 = pneg %p238
    // Predicated region
    $region9: #{multihead_attention_pallas.1} parent=5 // pred_check
      _
    $region10: #{multihead_attention_pallas.1} parent=5 // pred_check_branch
      %241 = sbr.rel (%p238) target = $region12
    $region11: #{multihead_attention_pallas.1} parent=5 // pred_region
      %s242 = ssub.s32 %s14, 1
      // Predicated region
      $region13: #{multihead_attention_pallas.1} parent=11 // pred_check
        %p243 = pneg %p139
      $region14: #{multihead_attention_pallas.1} parent=11 // pred_check_branch
        %245 = sbr.rel (%p243) target = $region16
      $region15: #{multihead_attention_pallas.1} parent=11 // pred_region
        _
      $region16: #{multihead_attention_pallas.1} parent=11 // pred_fallthru
        _
      // Predicated region
      $region17: #{multihead_attention_pallas.1} parent=11 // pred_check
        %p246 = pneg %p160
      $region18: #{multihead_attention_pallas.1} parent=11 // pred_check_branch
        %248 = sbr.rel (%p246) target = $region20
      $region19: #{multihead_attention_pallas.1} parent=11 // pred_region
        _
      $region20: #{multihead_attention_pallas.1} parent=11 // pred_fallthru
        _
      // Predicated region
      $region21: #{multihead_attention_pallas.1} parent=11 // pred_check
        %p249 = pneg %p181
      $region22: #{multihead_attention_pallas.1} parent=11 // pred_check_branch
        %251 = sbr.rel (%p249) target = $region24
      $region23: #{multihead_attention_pallas.1} parent=11 // pred_region
        _
      $region24: #{multihead_attention_pallas.1} parent=11 // pred_fallthru
        _
      // Predicated region
      $region25: #{multihead_attention_pallas.1} parent=11 // pred_check
        %p252 = pneg %p202
      $region26: #{multihead_attention_pallas.1} parent=11 // pred_check_branch
        %254 = sbr.rel (%p252) target = $region28
      $region27: #{multihead_attention_pallas.1} parent=11 // pred_region
        _
      $region28: #{multihead_attention_pallas.1} parent=11 // pred_fallthru
        _
    $region12: #{multihead_attention_pallas.1} parent=5 // pred_fallthru
      _
    %p255 = scmp.lt.s32.totalorder %s14, 2
    // Predicated region
    $region29: #{multihead_attention_pallas.1} parent=5 // pred_check
      %p256 = pneg %p255
    $region30: #{multihead_attention_pallas.1} parent=5 // pred_check_branch
      %258 = sbr.rel (%p256) target = $region32
    $region31: #{multihead_attention_pallas.1} parent=5 // pred_region
      // Predicated region
      $region33: #{multihead_attention_pallas.1} parent=31 // pred_check
        %p259 = pneg %p34
      $region34: #{multihead_attention_pallas.1} parent=31 // pred_check_branch
        %261 = sbr.rel (%p259) target = $region36
      $region35: #{multihead_attention_pallas.1} parent=31 // pred_region
        %s262 = smul.u32 32, %s14
        %p263 = scmp.lt.s32.totalorder %s262, 63
        %s264 = scalar_select %p263, %s262, 63
        %s265 = smul.addr %s264, 8
        %s266 = scalar_lea.vmem %s0, %s265
        %s267 = smul.u32 32, %s14
      $region36: #{multihead_attention_pallas.1} parent=31 // pred_fallthru
        _
      // Predicated region
      $region37: #{multihead_attention_pallas.1} parent=31 // pred_check
        %p268 = pneg %p60
      $region38: #{multihead_attention_pallas.1} parent=31 // pred_check_branch
        %270 = sbr.rel (%p268) target = $region40
      $region39: #{multihead_attention_pallas.1} parent=31 // pred_region
        %s271 = smul.u32 32, %s14
        %p272 = scmp.lt.s32.totalorder %s271, 63
        %s273 = scalar_select %p272, %s271, 63
        %s274 = smul.addr %s273, 8
        %s275 = scalar_lea.vmem %s1, %s274
        %s276 = smul.u32 32, %s14
      $region40: #{multihead_attention_pallas.1} parent=31 // pred_fallthru
        _
      // Predicated region
      $region41: #{multihead_attention_pallas.1} parent=31 // pred_check
        %p277 = pneg %p86
      $region42: #{multihead_attention_pallas.1} parent=31 // pred_check_branch
        %279 = sbr.rel (%p277) target = $region44
      $region43: #{multihead_attention_pallas.1} parent=31 // pred_region
        %s280 = smul.u32 32, %s14
        %p281 = scmp.lt.s32.totalorder %s280, 63
        %s282 = scalar_select %p281, %s280, 63
        %s283 = smul.addr %s282, 8
        %s284 = scalar_lea.vmem %s2, %s283
        %s285 = smul.u32 32, %s14
      $region44: #{multihead_attention_pallas.1} parent=31 // pred_fallthru
        _
      // Predicated region
      $region45: #{multihead_attention_pallas.1} parent=31 // pred_check
        %p286 = pneg %p112
      $region46: #{multihead_attention_pallas.1} parent=31 // pred_check_branch
        %288 = sbr.rel (%p286) target = $region48
      $region47: #{multihead_attention_pallas.1} parent=31 // pred_region
        %s289 = smul.u32 2, %s14
        %p290 = scmp.lt.s32.totalorder %s289, 3
        %s291 = scalar_select %p290, %s289, 3
        %s292 = scalar_lea.vmem %s3, %s291
        %s293 = smul.u32 2, %s14
      $region48: #{multihead_attention_pallas.1} parent=31 // pred_fallthru
        _
    $region32: #{multihead_attention_pallas.1} parent=5 // pred_fallthru
      _
    %p294 = scmp.le.s32.totalorder 1, %s14
    %p295 = scmp.lt.s32.totalorder %s14, 3
    %p296 = pnand %p294, %p295
    %p297 = pneg %p296
    // Predicated region
    $region49: #{multihead_attention_pallas.1} parent=5 // pred_check
      _
    $region50: #{multihead_attention_pallas.1} parent=5 // pred_check_branch
      %299 = sbr.rel (%p296) target = $region52
    $region51: #{multihead_attention_pallas.1} parent=5 // pred_region
      %s300 = ssub.s32 %s14, 1
      %s301 = smul.u32 32, %s19
      %p302 = scmp.lt.s32.totalorder %s301, 63
      %s303 = scalar_select %p302, %s301, 63
      %s304 = smul.addr %s303, 8
      %s305 = scalar_lea.vmem %s0, %s304
      %p306 = pneg %p40
      %p307 = pneg %p37
      %s308 = smul.u32 32, %s19
      %p309 = scmp.lt.s32.totalorder %s308, 63
      %s310 = scalar_select %p309, %s308, 63
      %s311 = smul.addr %s310, 8
      %s312 = scalar_lea.vmem %s1, %s311
      %p313 = pneg %p66
      %p314 = pneg %p63
      %s315 = smul.u32 32, %s19
      %p316 = scmp.lt.s32.totalorder %s315, 63
      %s317 = scalar_select %p316, %s315, 63
      %s318 = smul.addr %s317, 8
      %s319 = scalar_lea.vmem %s2, %s318
      %p320 = pneg %p92
      %p321 = pneg %p89
      %s322 = smul.u32 2, %s19
      %p323 = scmp.lt.s32.totalorder %s322, 3
      %s324 = scalar_select %p323, %s322, 3
      %s325 = scalar_lea.vmem %s3, %s324
      %p326 = pneg %p118
      %p327 = pneg %p115
      %p328 = pneg %p139
      %p329 = pneg %p136
      %p330 = pneg %p160
      %p331 = pneg %p157
      %p332 = pneg %p181
      %p333 = pneg %p178
      %p334 = pneg %p202
      %p335 = pneg %p199
      %p336 = pneg %p228
      %p337 = pneg %p225
      %s338 = smul.u32 32, %s19
      %p339 = scmp.lt.s32.totalorder %s338, 63
      %s340 = scalar_select %p339, %s338, 63
      %s341 = smul.addr %s340, 8
      %s342 = scalar_lea.vmem %s8, %s341
      %s343 = smul.u32 32, %s19
      %p344 = scmp.lt.s32.totalorder %s343, 63
      %s345 = scalar_select %p344, %s343, 63
      %s346 = smul.addr %s345, 8
      %s347 = scalar_lea.vmem %s0, %s346
      %s348 = smul.u32 32, %s19
      %s349 = smul.u32 32, %s19
      %p350 = scmp.lt.s32.totalorder %s349, 63
      %s351 = scalar_select %p350, %s349, 63
      %s352 = smul.addr %s351, 8
      %s353 = scalar_lea.vmem %s1, %s352
      %s354 = smul.u32 32, %s19
      %s355 = smul.u32 32, %s19
      %p356 = scmp.lt.s32.totalorder %s355, 63
      %s357 = scalar_select %p356, %s355, 63
      %s358 = smul.addr %s357, 8
      %s359 = scalar_lea.vmem %s2, %s358
      %s360 = smul.u32 32, %s19
      %s361 = smul.u32 2, %s19
      %p362 = scmp.lt.s32.totalorder %s361, 3
      %s363 = scalar_select %p362, %s361, 3
      %s364 = scalar_lea.vmem %s3, %s363
      %s365 = smul.u32 2, %s19
      %s366 = smul.u32 32, %s19
      %p367 = scmp.lt.s32.totalorder %s366, 63
      %s368 = scalar_select %p367, %s366, 63
      %s369 = smul.addr %s368, 8
      %s370 = scalar_lea.vmem %s8, %s369
      %s371 = smul.u32 32, %s19
      %v373 = vld [vmem:[%s347] sm:$0xff]
      %v374 = vld [vmem:[%s347 + $0x8] sm:$0xff]
      %v375 = vld [vmem:[%s347 + $0x10] sm:$0xff]
      %v376 = vld [vmem:[%s347 + $0x18] sm:$0xff]
      %v377 = vld [vmem:[%s347 + $0x20] sm:$0xff]
      %v378 = vld [vmem:[%s347 + $0x28] sm:$0xff]
      %v379 = vld [vmem:[%s347 + $0x30] sm:$0xff]
      %v380 = vld [vmem:[%s347 + $0x38] sm:$0xff]
      %v381 = vld [vmem:[%s347 + $0x40] sm:$0xff]
      %v382 = vld [vmem:[%s347 + $0x48] sm:$0xff]
      %v383 = vld [vmem:[%s347 + $0x50] sm:$0xff]
      %v384 = vld [vmem:[%s347 + $0x58] sm:$0xff]
      %v385 = vld [vmem:[%s347 + $0x60] sm:$0xff]
      %v386 = vld [vmem:[%s347 + $0x68] sm:$0xff]
      %v387 = vld [vmem:[%s347 + $0x70] sm:$0xff]
      %v388 = vld [vmem:[%s347 + $0x78] sm:$0xff]
      %v389 = vld [vmem:[%s347 + $0x80] sm:$0xff]
      %v390 = vld [vmem:[%s347 + $0x88] sm:$0xff]
      %v391 = vld [vmem:[%s347 + $0x90] sm:$0xff]
      %v392 = vld [vmem:[%s347 + $0x98] sm:$0xff]
      %v393 = vld [vmem:[%s347 + $0xa0] sm:$0xff]
      %v394 = vld [vmem:[%s347 + $0xa8] sm:$0xff]
      %v395 = vld [vmem:[%s347 + $0xb0] sm:$0xff]
      %v396 = vld [vmem:[%s347 + $0xb8] sm:$0xff]
      %v397 = vld [vmem:[%s347 + $0xc0] sm:$0xff]
      %v398 = vld [vmem:[%s347 + $0xc8] sm:$0xff]
      %v399 = vld [vmem:[%s347 + $0xd0] sm:$0xff]
      %v400 = vld [vmem:[%s347 + $0xd8] sm:$0xff]
      %v401 = vld [vmem:[%s347 + $0xe0] sm:$0xff]
      %v402 = vld [vmem:[%s347 + $0xe8] sm:$0xff]
      %v403 = vld [vmem:[%s347 + $0xf0] sm:$0xff]
      %v404 = vld [vmem:[%s347 + $0xf8] sm:$0xff]
      %v405 = vpack.c.bf16 %v374, %v373
      %v406 = vpack.c.bf16 %v376, %v375
      %v407 = vpack.c.bf16 %v378, %v377
      %v408 = vpack.c.bf16 %v380, %v379
      %v409 = vpack.c.bf16 %v382, %v381
      %v410 = vpack.c.bf16 %v384, %v383
      %v411 = vpack.c.bf16 %v386, %v385
      %v412 = vpack.c.bf16 %v388, %v387
      %v413 = vpack.c.bf16 %v390, %v389
      %v414 = vpack.c.bf16 %v392, %v391
      %v415 = vpack.c.bf16 %v394, %v393
      %v416 = vpack.c.bf16 %v396, %v395
      %v417 = vpack.c.bf16 %v398, %v397
      %v418 = vpack.c.bf16 %v400, %v399
      %v419 = vpack.c.bf16 %v402, %v401
      %v420 = vpack.c.bf16 %v404, %v403
      %v421 = vld [vmem:[%s4] sm:$0xff]
      %v422 = vld [vmem:[%s4 + $0x8] sm:$0xf]
      %v423 = vld [vmem:[%s4 + $0xc] sm:$0xff]
      %v424 = vld [vmem:[%s4 + $0x14] sm:$0xf]
      %v425 = vld [vmem:[%s4 + $0x18] sm:$0xff]
      %v426 = vld [vmem:[%s4 + $0x20] sm:$0xf]
      %v427 = vld [vmem:[%s4 + $0x24] sm:$0xff]
      %v428 = vld [vmem:[%s4 + $0x2c] sm:$0xf]
      %v429 = vld [vmem:[%s5] sm:$0x7]
      %v431 = vlaneseq
      %v432 = vshrl.u32 %v431, 7
      %v433 = vsub.s32 0, %v432
      %v434 = vrot.slane %v429, %v433
      %v435 = vlaneseq
      %v436 = vshrl.u32 %v435, 7
      %v437 = vsub.s32 1, %v436
      %v438 = vrot.slane %v429, %v437
      %v439 = vlaneseq
      %v440 = vshrl.u32 %v439, 7
      %v441 = vsub.s32 2, %v440
      %v442 = vrot.slane %v429, %v441
      %v454 = vunpack.c.l.b16 %v421
      %v455 = vunpack.c.h.b16 %v421
      %v456 = vunpack.c.l.b16 %v422
      %v457 = vunpack.c.l.b16 %v423
      %v458 = vunpack.c.h.b16 %v423
      %v459 = vunpack.c.l.b16 %v424
      %v460 = vunpack.c.l.b16 %v425
      %v461 = vunpack.c.h.b16 %v425
      %v462 = vunpack.c.l.b16 %v426
      %v463 = vunpack.c.l.b16 %v427
      %v464 = vunpack.c.h.b16 %v427
      %v465 = vunpack.c.l.b16 %v428
      %v466 = vpack.c.b16 %v457, %v454
      %v467 = vpack.c.b16 %v458, %v455
      %v468 = vpack.c.b16 %v459, %v456
      %v469 = vpack.c.b16 %v463, %v460
      %v470 = vpack.c.b16 %v464, %v461
      %v471 = vpack.c.b16 %v465, %v462
      %vm478 = vcmask 261120
      %v480 = vsel %vm478, %v405, 0
      %v483 = vsel %vm478, %v406, 0
      %v486 = vsel %vm478, %v407, 0
      %v489 = vsel %vm478, %v408, 0
      %v492 = vsel %vm478, %v409, 0
      %v495 = vsel %vm478, %v410, 0
      %v498 = vsel %vm478, %v411, 0
      %v501 = vsel %vm478, %v412, 0
      %v504 = vsel %vm478, %v413, 0
      %v507 = vsel %vm478, %v414, 0
      %v510 = vsel %vm478, %v415, 0
      %v513 = vsel %vm478, %v416, 0
      %v516 = vsel %vm478, %v417, 0
      %v519 = vsel %vm478, %v418, 0
      %v522 = vsel %vm478, %v419, 0
      %v525 = vsel %vm478, %v420, 0
      %527 = vmatprep.subr.bf16.mxu0 0
      %528 = vmatpush1.bf16.msra.mxu0 0
      %529 = vmatprep.subr.bf16.mxu0 0
      %530 = vmatpush1.bf16.msra.mxu0 0
      %531 = vmatprep.subr.bf16.mxu0 0
      %532 = vmatpush1.bf16.msra.mxu0 0
      %533 = vmatprep.subr.bf16.mxu0 0
      %534 = vmatpush1.bf16.msra.mxu0 0
      %535 = vmatprep.subr.bf16.mxu0 0
      %536 = vmatpush1.bf16.msra.mxu0 0
      %537 = vmatprep.subr.bf16.mxu0 0
      %538 = vmatpush1.bf16.msra.mxu0 0
      %539 = vmatprep.subr.bf16.mxu0 %v470
      %540 = vmatpush1.bf16.msra.mxu0 %v469
      %541 = vmatprep.subr.bf16.mxu0 %v467
      %542 = vmatpush1.bf16.msra.mxu0 %v466
      %543 = vmatprep.subr.bf16.mxu0 0
      %544 = vmatpush2.bf16.msra.mxu0 0
      %545 = vmatprep.subr.bf16.mxu0 0
      %546 = vmatpush2.bf16.msra.mxu0 0
      %547 = vmatprep.subr.bf16.mxu0 0
      %548 = vmatpush2.bf16.msra.mxu0 0
      %549 = vmatprep.subr.bf16.mxu0 0
      %550 = vmatpush2.bf16.msra.mxu0 0
      %551 = vmatprep.subr.bf16.mxu0 0
      %552 = vmatpush2.bf16.msra.mxu0 0
      %553 = vmatprep.subr.bf16.mxu0 0
      %554 = vmatpush2.bf16.msra.mxu0 0
      %555 = vmatprep.subr.bf16.mxu0 0
      %556 = vmatpush2.bf16.msra.mxu0 0
      %557 = vmatprep.subr.bf16.mxu0 0
      %558 = vmatpush2.bf16.msra.mxu0 0
      %559 = vmatprep.mubr.bf16.mxu0 0
      %560 = vmatmul.mubr.bf16.gmra.mxu0 %v480
      %v561 = vpop.f32.mrf.mxu0
      %v562 = vadd.f32 %v434, %v561
      %v563 = vpop.f32.mrf.mxu0
      %v564 = vadd.f32 %v438, %v563
      %v565 = vpop.f32.mrf.mxu0
      %v566 = vadd.f32 %v434, %v565
      %v567 = vpop.f32.mrf.mxu0
      %v568 = vadd.f32 %v438, %v567
      %569 = vmatprep.mubr.bf16.mxu0 0
      %570 = vmatmul.mubr.bf16.gmra.mxu0 %v483
      %v571 = vpop.f32.mrf.mxu0
      %v572 = vadd.f32 %v434, %v571
      %v573 = vpop.f32.mrf.mxu0
      %v574 = vadd.f32 %v438, %v573
      %v575 = vpop.f32.mrf.mxu0
      %v576 = vadd.f32 %v434, %v575
      %v577 = vpop.f32.mrf.mxu0
      %v578 = vadd.f32 %v438, %v577
      %579 = vmatprep.mubr.bf16.mxu0 0
      %580 = vmatmul.mubr.bf16.gmra.mxu0 %v486
      %v581 = vpop.f32.mrf.mxu0
      %v582 = vadd.f32 %v434, %v581
      %v583 = vpop.f32.mrf.mxu0
      %v584 = vadd.f32 %v438, %v583
      %v585 = vpop.f32.mrf.mxu0
      %v586 = vadd.f32 %v434, %v585
      %v587 = vpop.f32.mrf.mxu0
      %v588 = vadd.f32 %v438, %v587
      %589 = vmatprep.mubr.bf16.mxu0 0
      %590 = vmatmul.mubr.bf16.gmra.mxu0 %v489
      %v591 = vpop.f32.mrf.mxu0
      %v592 = vadd.f32 %v434, %v591
      %v593 = vpop.f32.mrf.mxu0
      %v594 = vadd.f32 %v438, %v593
      %v595 = vpop.f32.mrf.mxu0
      %v596 = vadd.f32 %v434, %v595
      %v597 = vpop.f32.mrf.mxu0
      %v598 = vadd.f32 %v438, %v597
      %599 = vmatprep.mubr.bf16.mxu0 0
      %600 = vmatmul.mubr.bf16.gmra.mxu0 %v492
      %v601 = vpop.f32.mrf.mxu0
      %v602 = vadd.f32 %v434, %v601
      %v603 = vpop.f32.mrf.mxu0
      %v604 = vadd.f32 %v438, %v603
      %v605 = vpop.f32.mrf.mxu0
      %v606 = vadd.f32 %v434, %v605
      %v607 = vpop.f32.mrf.mxu0
      %v608 = vadd.f32 %v438, %v607
      %609 = vmatprep.mubr.bf16.mxu0 0
      %610 = vmatmul.mubr.bf16.gmra.mxu0 %v495
      %v611 = vpop.f32.mrf.mxu0
      %v612 = vadd.f32 %v434, %v611
      %v613 = vpop.f32.mrf.mxu0
      %v614 = vadd.f32 %v438, %v613
      %v615 = vpop.f32.mrf.mxu0
      %v616 = vadd.f32 %v434, %v615
      %v617 = vpop.f32.mrf.mxu0
      %v618 = vadd.f32 %v438, %v617
      %619 = vmatprep.mubr.bf16.mxu0 0
      %620 = vmatmul.mubr.bf16.gmra.mxu0 %v498
      %v621 = vpop.f32.mrf.mxu0
      %v622 = vadd.f32 %v434, %v621
      %v623 = vpop.f32.mrf.mxu0
      %v624 = vadd.f32 %v438, %v623
      %v625 = vpop.f32.mrf.mxu0
      %v626 = vadd.f32 %v434, %v625
      %v627 = vpop.f32.mrf.mxu0
      %v628 = vadd.f32 %v438, %v627
      %629 = vmatprep.mubr.bf16.mxu0 0
      %630 = vmatmul.mubr.bf16.gmra.mxu0 %v501
      %v631 = vpop.f32.mrf.mxu0
      %v632 = vadd.f32 %v434, %v631
      %v633 = vpop.f32.mrf.mxu0
      %v634 = vadd.f32 %v438, %v633
      %v635 = vpop.f32.mrf.mxu0
      %v636 = vadd.f32 %v434, %v635
      %v637 = vpop.f32.mrf.mxu0
      %v638 = vadd.f32 %v438, %v637
      %639 = vmatprep.mubr.bf16.mxu0 0
      %640 = vmatmul.mubr.bf16.gmra.mxu0 %v504
      %v641 = vpop.f32.mrf.mxu0
      %v642 = vadd.f32 %v434, %v641
      %v643 = vpop.f32.mrf.mxu0
      %v644 = vadd.f32 %v438, %v643
      %v645 = vpop.f32.mrf.mxu0
      %v646 = vadd.f32 %v434, %v645
      %v647 = vpop.f32.mrf.mxu0
      %v648 = vadd.f32 %v438, %v647
      %649 = vmatprep.mubr.bf16.mxu0 0
      %650 = vmatmul.mubr.bf16.gmra.mxu0 %v507
      %v651 = vpop.f32.mrf.mxu0
      %v652 = vadd.f32 %v434, %v651
      %v653 = vpop.f32.mrf.mxu0
      %v654 = vadd.f32 %v438, %v653
      %v655 = vpop.f32.mrf.mxu0
      %v656 = vadd.f32 %v434, %v655
      %v657 = vpop.f32.mrf.mxu0
      %v658 = vadd.f32 %v438, %v657
      %659 = vmatprep.mubr.bf16.mxu0 0
      %660 = vmatmul.mubr.bf16.gmra.mxu0 %v510
      %v661 = vpop.f32.mrf.mxu0
      %v662 = vadd.f32 %v434, %v661
      %v663 = vpop.f32.mrf.mxu0
      %v664 = vadd.f32 %v438, %v663
      %v665 = vpop.f32.mrf.mxu0
      %v666 = vadd.f32 %v434, %v665
      %v667 = vpop.f32.mrf.mxu0
      %v668 = vadd.f32 %v438, %v667
      %669 = vmatprep.mubr.bf16.mxu0 0
      %670 = vmatmul.mubr.bf16.gmra.mxu0 %v513
      %v671 = vpop.f32.mrf.mxu0
      %v672 = vadd.f32 %v434, %v671
      %v673 = vpop.f32.mrf.mxu0
      %v674 = vadd.f32 %v438, %v673
      %v675 = vpop.f32.mrf.mxu0
      %v676 = vadd.f32 %v434, %v675
      %v677 = vpop.f32.mrf.mxu0
      %v678 = vadd.f32 %v438, %v677
      %679 = vmatprep.mubr.bf16.mxu0 0
      %680 = vmatmul.mubr.bf16.gmra.mxu0 %v516
      %v681 = vpop.f32.mrf.mxu0
      %v682 = vadd.f32 %v434, %v681
      %v683 = vpop.f32.mrf.mxu0
      %v684 = vadd.f32 %v438, %v683
      %v685 = vpop.f32.mrf.mxu0
      %v686 = vadd.f32 %v434, %v685
      %v687 = vpop.f32.mrf.mxu0
      %v688 = vadd.f32 %v438, %v687
      %689 = vmatprep.mubr.bf16.mxu0 0
      %690 = vmatmul.mubr.bf16.gmra.mxu0 %v519
      %v691 = vpop.f32.mrf.mxu0
      %v692 = vadd.f32 %v434, %v691
      %v693 = vpop.f32.mrf.mxu0
      %v694 = vadd.f32 %v438, %v693
      %v695 = vpop.f32.mrf.mxu0
      %v696 = vadd.f32 %v434, %v695
      %v697 = vpop.f32.mrf.mxu0
      %v698 = vadd.f32 %v438, %v697
      %699 = vmatprep.mubr.bf16.mxu0 0
      %700 = vmatmul.mubr.bf16.gmra.mxu0 %v522
      %v701 = vpop.f32.mrf.mxu0
      %v702 = vadd.f32 %v434, %v701
      %v703 = vpop.f32.mrf.mxu0
      %v704 = vadd.f32 %v438, %v703
      %v705 = vpop.f32.mrf.mxu0
      %v706 = vadd.f32 %v434, %v705
      %v707 = vpop.f32.mrf.mxu0
      %v708 = vadd.f32 %v438, %v707
      %709 = vmatprep.mubr.bf16.mxu0 0
      %710 = vmatmul.mubr.bf16.gmra.mxu0 %v525
      %v711 = vpop.f32.mrf.mxu0
      %v712 = vadd.f32 %v434, %v711
      %v713 = vpop.f32.mrf.mxu0
      %v714 = vadd.f32 %v438, %v713
      %v715 = vpop.f32.mrf.mxu0
      %v716 = vadd.f32 %v434, %v715
      %v717 = vpop.f32.mrf.mxu0
      %v718 = vadd.f32 %v438, %v717
      %719 = vdwg.mxu0
      %720 = vmatprep.subr.bf16.mxu0 0
      %721 = vmatpush1.bf16.msra.mxu0 0
      %722 = vmatprep.subr.bf16.mxu0 0
      %723 = vmatpush1.bf16.msra.mxu0 0
      %724 = vmatprep.subr.bf16.mxu0 0
      %725 = vmatpush1.bf16.msra.mxu0 0
      %726 = vmatprep.subr.bf16.mxu0 0
      %727 = vmatpush1.bf16.msra.mxu0 0
      %728 = vmatprep.subr.bf16.mxu0 0
      %729 = vmatpush1.bf16.msra.mxu0 0
      %730 = vmatprep.subr.bf16.mxu0 0
      %731 = vmatpush1.bf16.msra.mxu0 0
      %732 = vmatprep.subr.bf16.mxu0 0
      %733 = vmatpush1.bf16.msra.mxu0 %v471
      %734 = vmatprep.subr.bf16.mxu0 0
      %735 = vmatpush1.bf16.msra.mxu0 %v468
      %736 = vmatprep.subr.bf16.mxu0 0
      %737 = vmatpush2.bf16.msra.mxu0 0
      %738 = vmatprep.subr.bf16.mxu0 0
      %739 = vmatpush2.bf16.msra.mxu0 0
      %740 = vmatprep.subr.bf16.mxu0 0
      %741 = vmatpush2.bf16.msra.mxu0 0
      %742 = vmatprep.subr.bf16.mxu0 0
      %743 = vmatpush2.bf16.msra.mxu0 0
      %744 = vmatprep.subr.bf16.mxu0 0
      %745 = vmatpush2.bf16.msra.mxu0 0
      %746 = vmatprep.subr.bf16.mxu0 0
      %747 = vmatpush2.bf16.msra.mxu0 0
      %748 = vmatprep.subr.bf16.mxu0 0
      %749 = vmatpush2.bf16.msra.mxu0 0
      %750 = vmatprep.subr.bf16.mxu0 0
      %751 = vmatpush2.bf16.msra.mxu0 0
      %752 = vmatprep.mubr.bf16.mxu0 0
      %753 = vmatmul.mubr.bf16.gmra.mxu0 %v480
      %v754 = vpop.f32.mrf.mxu0
      %v755 = vadd.f32 %v442, %v754
      %v756 = vpop.f32.mrf.mxu0
      %v757 = vpop.f32.mrf.mxu0
      %v758 = vadd.f32 %v442, %v757
      %v759 = vpop.f32.mrf.mxu0
      %760 = vmatprep.mubr.bf16.mxu0 0
      %761 = vmatmul.mubr.bf16.gmra.mxu0 %v483
      %v762 = vpop.f32.mrf.mxu0
      %v763 = vadd.f32 %v442, %v762
      %v764 = vpop.f32.mrf.mxu0
      %v765 = vpop.f32.mrf.mxu0
      %v766 = vadd.f32 %v442, %v765
      %v767 = vpop.f32.mrf.mxu0
      %768 = vmatprep.mubr.bf16.mxu0 0
      %769 = vmatmul.mubr.bf16.gmra.mxu0 %v486
      %v770 = vpop.f32.mrf.mxu0
      %v771 = vadd.f32 %v442, %v770
      %v772 = vpop.f32.mrf.mxu0
      %v773 = vpop.f32.mrf.mxu0
      %v774 = vadd.f32 %v442, %v773
      %v775 = vpop.f32.mrf.mxu0
      %776 = vmatprep.mubr.bf16.mxu0 0
      %777 = vmatmul.mubr.bf16.gmra.mxu0 %v489
      %v778 = vpop.f32.mrf.mxu0
      %v779 = vadd.f32 %v442, %v778
      %v780 = vpop.f32.mrf.mxu0
      %v781 = vpop.f32.mrf.mxu0
      %v782 = vadd.f32 %v442, %v781
      %v783 = vpop.f32.mrf.mxu0
      %784 = vmatprep.mubr.bf16.mxu0 0
      %785 = vmatmul.mubr.bf16.gmra.mxu0 %v492
      %v786 = vpop.f32.mrf.mxu0
      %v787 = vadd.f32 %v442, %v786
      %v788 = vpop.f32.mrf.mxu0
      %v789 = vpop.f32.mrf.mxu0
      %v790 = vadd.f32 %v442, %v789
      %v791 = vpop.f32.mrf.mxu0
      %792 = vmatprep.mubr.bf16.mxu0 0
      %793 = vmatmul.mubr.bf16.gmra.mxu0 %v495
      %v794 = vpop.f32.mrf.mxu0
      %v795 = vadd.f32 %v442, %v794
      %v796 = vpop.f32.mrf.mxu0
      %v797 = vpop.f32.mrf.mxu0
      %v798 = vadd.f32 %v442, %v797
      %v799 = vpop.f32.mrf.mxu0
      %800 = vmatprep.mubr.bf16.mxu0 0
      %801 = vmatmul.mubr.bf16.gmra.mxu0 %v498
      %v802 = vpop.f32.mrf.mxu0
      %v803 = vadd.f32 %v442, %v802
      %v804 = vpop.f32.mrf.mxu0
      %v805 = vpop.f32.mrf.mxu0
      %v806 = vadd.f32 %v442, %v805
      %v807 = vpop.f32.mrf.mxu0
      %808 = vmatprep.mubr.bf16.mxu0 0
      %809 = vmatmul.mubr.bf16.gmra.mxu0 %v501
      %v810 = vpop.f32.mrf.mxu0
      %v811 = vadd.f32 %v442, %v810
      %v812 = vpop.f32.mrf.mxu0
      %v813 = vpop.f32.mrf.mxu0
      %v814 = vadd.f32 %v442, %v813
      %v815 = vpop.f32.mrf.mxu0
      %816 = vmatprep.mubr.bf16.mxu0 0
      %817 = vmatmul.mubr.bf16.gmra.mxu0 %v504
      %v818 = vpop.f32.mrf.mxu0
      %v819 = vadd.f32 %v442, %v818
      %v820 = vpop.f32.mrf.mxu0
      %v821 = vpop.f32.mrf.mxu0
      %v822 = vadd.f32 %v442, %v821
      %v823 = vpop.f32.mrf.mxu0
      %824 = vmatprep.mubr.bf16.mxu0 0
      %825 = vmatmul.mubr.bf16.gmra.mxu0 %v507
      %v826 = vpop.f32.mrf.mxu0
      %v827 = vadd.f32 %v442, %v826
      %v828 = vpop.f32.mrf.mxu0
      %v829 = vpop.f32.mrf.mxu0
      %v830 = vadd.f32 %v442, %v829
      %v831 = vpop.f32.mrf.mxu0
      %832 = vmatprep.mubr.bf16.mxu0 0
      %833 = vmatmul.mubr.bf16.gmra.mxu0 %v510
      %v834 = vpop.f32.mrf.mxu0
      %v835 = vadd.f32 %v442, %v834
      %v836 = vpop.f32.mrf.mxu0
      %v837 = vpop.f32.mrf.mxu0
      %v838 = vadd.f32 %v442, %v837
      %v839 = vpop.f32.mrf.mxu0
      %840 = vmatprep.mubr.bf16.mxu0 0
      %841 = vmatmul.mubr.bf16.gmra.mxu0 %v513
      %v842 = vpop.f32.mrf.mxu0
      %v843 = vadd.f32 %v442, %v842
      %v844 = vpop.f32.mrf.mxu0
      %v845 = vpop.f32.mrf.mxu0
      %v846 = vadd.f32 %v442, %v845
      %v847 = vpop.f32.mrf.mxu0
      %848 = vmatprep.mubr.bf16.mxu0 0
      %849 = vmatmul.mubr.bf16.gmra.mxu0 %v516
      %v850 = vpop.f32.mrf.mxu0
      %v851 = vadd.f32 %v442, %v850
      %v852 = vpop.f32.mrf.mxu0
      %v853 = vpop.f32.mrf.mxu0
      %v854 = vadd.f32 %v442, %v853
      %v855 = vpop.f32.mrf.mxu0
      %856 = vmatprep.mubr.bf16.mxu0 0
      %857 = vmatmul.mubr.bf16.gmra.mxu0 %v519
      %v858 = vpop.f32.mrf.mxu0
      %v859 = vadd.f32 %v442, %v858
      %v860 = vpop.f32.mrf.mxu0
      %v861 = vpop.f32.mrf.mxu0
      %v862 = vadd.f32 %v442, %v861
      %v863 = vpop.f32.mrf.mxu0
      %864 = vmatprep.mubr.bf16.mxu0 0
      %865 = vmatmul.mubr.bf16.gmra.mxu0 %v522
      %v866 = vpop.f32.mrf.mxu0
      %v867 = vadd.f32 %v442, %v866
      %v868 = vpop.f32.mrf.mxu0
      %v869 = vpop.f32.mrf.mxu0
      %v870 = vadd.f32 %v442, %v869
      %v871 = vpop.f32.mrf.mxu0
      %872 = vmatprep.mubr.bf16.mxu0 0
      %873 = vmatmul.mubr.bf16.gmra.mxu0 %v525
      %v874 = vpop.f32.mrf.mxu0
      %v875 = vadd.f32 %v442, %v874
      %v876 = vpop.f32.mrf.mxu0
      %v877 = vpop.f32.mrf.mxu0
      %v878 = vadd.f32 %v442, %v877
      %v879 = vpop.f32.mrf.mxu0
      %880 = vdwg.mxu0
      %v881 = vpack.c.bf16 %v566, %v562
      %v882 = vpack.c.bf16 %v568, %v564
      %v883 = vpack.c.bf16 %v758, %v755
      %v884 = vpack.c.bf16 %v576, %v572
      %v885 = vpack.c.bf16 %v578, %v574
      %v886 = vpack.c.bf16 %v766, %v763
      %v887 = vpack.c.bf16 %v586, %v582
      %v888 = vpack.c.bf16 %v588, %v584
      %v889 = vpack.c.bf16 %v774, %v771
      %v890 = vpack.c.bf16 %v596, %v592
      %v891 = vpack.c.bf16 %v598, %v594
      %v892 = vpack.c.bf16 %v782, %v779
      %v893 = vpack.c.bf16 %v606, %v602
      %v894 = vpack.c.bf16 %v608, %v604
      %v895 = vpack.c.bf16 %v790, %v787
      %v896 = vpack.c.bf16 %v616, %v612
      %v897 = vpack.c.bf16 %v618, %v614
      %v898 = vpack.c.bf16 %v798, %v795
      %v899 = vpack.c.bf16 %v626, %v622
      %v900 = vpack.c.bf16 %v628, %v624
      %v901 = vpack.c.bf16 %v806, %v803
      %v902 = vpack.c.bf16 %v636, %v632
      %v903 = vpack.c.bf16 %v638, %v634
      %v904 = vpack.c.bf16 %v814, %v811
      %v905 = vpack.c.bf16 %v646, %v642
      %v906 = vpack.c.bf16 %v648, %v644
      %v907 = vpack.c.bf16 %v822, %v819
      %v908 = vpack.c.bf16 %v656, %v652
      %v909 = vpack.c.bf16 %v658, %v654
      %v910 = vpack.c.bf16 %v830, %v827
      %v911 = vpack.c.bf16 %v666, %v662
      %v912 = vpack.c.bf16 %v668, %v664
      %v913 = vpack.c.bf16 %v838, %v835
      %v914 = vpack.c.bf16 %v676, %v672
      %v915 = vpack.c.bf16 %v678, %v674
      %v916 = vpack.c.bf16 %v846, %v843
      %v917 = vpack.c.bf16 %v686, %v682
      %v918 = vpack.c.bf16 %v688, %v684
      %v919 = vpack.c.bf16 %v854, %v851
      %v920 = vpack.c.bf16 %v696, %v692
      %v921 = vpack.c.bf16 %v698, %v694
      %v922 = vpack.c.bf16 %v862, %v859
      %v923 = vpack.c.bf16 %v706, %v702
      %v924 = vpack.c.bf16 %v708, %v704
      %v925 = vpack.c.bf16 %v870, %v867
      %v926 = vpack.c.bf16 %v716, %v712
      %v927 = vpack.c.bf16 %v718, %v714
      %v928 = vpack.c.bf16 %v878, %v875
      %v929 = vld [vmem:[%s359] sm:$0xff]
      %v930 = vld [vmem:[%s359 + $0x8] sm:$0xff]
      %v931 = vld [vmem:[%s359 + $0x10] sm:$0xff]
      %v932 = vld [vmem:[%s359 + $0x18] sm:$0xff]
      %v933 = vld [vmem:[%s359 + $0x20] sm:$0xff]
      %v934 = vld [vmem:[%s359 + $0x28] sm:$0xff]
      %v935 = vld [vmem:[%s359 + $0x30] sm:$0xff]
      %v936 = vld [vmem:[%s359 + $0x38] sm:$0xff]
      %v937 = vld [vmem:[%s359 + $0x40] sm:$0xff]
      %v938 = vld [vmem:[%s359 + $0x48] sm:$0xff]
      %v939 = vld [vmem:[%s359 + $0x50] sm:$0xff]
      %v940 = vld [vmem:[%s359 + $0x58] sm:$0xff]
      %v941 = vld [vmem:[%s359 + $0x60] sm:$0xff]
      %v942 = vld [vmem:[%s359 + $0x68] sm:$0xff]
      %v943 = vld [vmem:[%s359 + $0x70] sm:$0xff]
      %v944 = vld [vmem:[%s359 + $0x78] sm:$0xff]
      %v945 = vld [vmem:[%s364] sm:$0x1]
      %947 = vset.pattern.permute.xlu0 0
      %948 = vperm.xlu0 %947, %v929
      %v949 = vpop.permute.xlu0 %948
      %952 = vset.pattern.permute.xlu0 0
      %953 = vperm.xlu0 %952, %v930
      %v954 = vpop.permute.xlu0 %953
      %957 = vset.pattern.permute.xlu0 0
      %958 = vperm.xlu0 %957, %v931
      %v959 = vpop.permute.xlu0 %958
      %962 = vset.pattern.permute.xlu0 0
      %963 = vperm.xlu0 %962, %v932
      %v964 = vpop.permute.xlu0 %963
      %967 = vset.pattern.permute.xlu0 0
      %968 = vperm.xlu0 %967, %v933
      %v969 = vpop.permute.xlu0 %968
      %972 = vset.pattern.permute.xlu0 0
      %973 = vperm.xlu0 %972, %v934
      %v974 = vpop.permute.xlu0 %973
      %977 = vset.pattern.permute.xlu0 0
      %978 = vperm.xlu0 %977, %v935
      %v979 = vpop.permute.xlu0 %978
      %982 = vset.pattern.permute.xlu0 0
      %983 = vperm.xlu0 %982, %v936
      %v984 = vpop.permute.xlu0 %983
      %987 = vset.pattern.permute.xlu0 0
      %988 = vperm.xlu0 %987, %v937
      %v989 = vpop.permute.xlu0 %988
      %992 = vset.pattern.permute.xlu0 0
      %993 = vperm.xlu0 %992, %v938
      %v994 = vpop.permute.xlu0 %993
      %997 = vset.pattern.permute.xlu0 0
      %998 = vperm.xlu0 %997, %v939
      %v999 = vpop.permute.xlu0 %998
      %1002 = vset.pattern.permute.xlu0 0
      %1003 = vperm.xlu0 %1002, %v940
      %v1004 = vpop.permute.xlu0 %1003
      %1007 = vset.pattern.permute.xlu0 0
      %1008 = vperm.xlu0 %1007, %v941
      %v1009 = vpop.permute.xlu0 %1008
      %1012 = vset.pattern.permute.xlu0 0
      %1013 = vperm.xlu0 %1012, %v942
      %v1014 = vpop.permute.xlu0 %1013
      %1017 = vset.pattern.permute.xlu0 0
      %1018 = vperm.xlu0 %1017, %v943
      %v1019 = vpop.permute.xlu0 %1018
      %1022 = vset.pattern.permute.xlu0 0
      %1023 = vperm.xlu0 %1022, %v944
      %v1024 = vpop.permute.xlu0 %1023
      %v1027 = vlaneseq
      %v1028 = vshrl.u32 %v1027, 7
      %v1029 = vsub.s32 0, %v1028
      %v1030 = vrot.slane %v945, %v1029
      %vm1032 = vcmp.eq.f32.partialorder %v949, %v1030
      %vm1033 = vcmp.eq.f32.partialorder %v954, %v1030
      %vm1034 = vcmp.eq.f32.partialorder %v959, %v1030
      %vm1035 = vcmp.eq.f32.partialorder %v964, %v1030
      %vm1036 = vcmp.eq.f32.partialorder %v969, %v1030
      %vm1037 = vcmp.eq.f32.partialorder %v974, %v1030
      %vm1038 = vcmp.eq.f32.partialorder %v979, %v1030
      %vm1039 = vcmp.eq.f32.partialorder %v984, %v1030
      %vm1040 = vcmp.eq.f32.partialorder %v989, %v1030
      %vm1041 = vcmp.eq.f32.partialorder %v994, %v1030
      %vm1042 = vcmp.eq.f32.partialorder %v999, %v1030
      %vm1043 = vcmp.eq.f32.partialorder %v1004, %v1030
      %vm1044 = vcmp.eq.f32.partialorder %v1009, %v1030
      %vm1045 = vcmp.eq.f32.partialorder %v1014, %v1030
      %vm1046 = vcmp.eq.f32.partialorder %v1019, %v1030
      %vm1047 = vcmp.eq.f32.partialorder %v1024, %v1030
      %v1049 = vsel %vm478, %v881, 0
      %v1052 = vsel %vm478, %v884, 0
      %v1055 = vsel %vm478, %v887, 0
      %v1058 = vsel %vm478, %v890, 0
      %v1061 = vsel %vm478, %v893, 0
      %v1064 = vsel %vm478, %v896, 0
      %v1067 = vsel %vm478, %v899, 0
      %v1070 = vsel %vm478, %v902, 0
      %v1073 = vsel %vm478, %v882, 0
      %v1076 = vsel %vm478, %v885, 0
      %v1079 = vsel %vm478, %v888, 0
      %v1082 = vsel %vm478, %v891, 0
      %v1085 = vsel %vm478, %v894, 0
      %v1088 = vsel %vm478, %v897, 0
      %v1091 = vsel %vm478, %v900, 0
      %v1094 = vsel %vm478, %v903, 0
      %1096 = vmatprep.subr.bf16.mxu0 0
      %1097 = vmatpush1.bf16.xpose.msra.mxu0 %v1094
      %1098 = vmatprep.subr.bf16.mxu0 0
      %1099 = vmatpush1.bf16.xpose.msra.mxu0 %v1091
      %1100 = vmatprep.subr.bf16.mxu0 0
      %1101 = vmatpush1.bf16.xpose.msra.mxu0 %v1088
      %1102 = vmatprep.subr.bf16.mxu0 0
      %1103 = vmatpush1.bf16.xpose.msra.mxu0 %v1085
      %1104 = vmatprep.subr.bf16.mxu0 0
      %1105 = vmatpush1.bf16.xpose.msra.mxu0 %v1082
      %1106 = vmatprep.subr.bf16.mxu0 0
      %1107 = vmatpush1.bf16.xpose.msra.mxu0 %v1079
      %1108 = vmatprep.subr.bf16.mxu0 0
      %1109 = vmatpush1.bf16.xpose.msra.mxu0 %v1076
      %1110 = vmatprep.subr.bf16.mxu0 0
      %1111 = vmatpush1.bf16.xpose.msra.mxu0 %v1073
      %1112 = vmatprep.subr.bf16.mxu0 0
      %1113 = vmatpush2.bf16.xpose.msra.mxu0 0
      %1114 = vmatprep.subr.bf16.mxu0 0
      %1115 = vmatpush2.bf16.xpose.msra.mxu0 0
      %1116 = vmatprep.subr.bf16.mxu0 0
      %1117 = vmatpush2.bf16.xpose.msra.mxu0 0
      %1118 = vmatprep.subr.bf16.mxu0 0
      %1119 = vmatpush2.bf16.xpose.msra.mxu0 0
      %1120 = vmatprep.subr.bf16.mxu0 0
      %1121 = vmatpush2.bf16.xpose.msra.mxu0 0
      %1122 = vmatprep.subr.bf16.mxu0 0
      %1123 = vmatpush2.bf16.xpose.msra.mxu0 0
      %1124 = vmatprep.subr.bf16.mxu0 0
      %1125 = vmatpush2.bf16.xpose.msra.mxu0 0
      %1126 = vmatprep.subr.bf16.mxu0 0
      %1127 = vmatpush2.bf16.xpose.msra.mxu0 0
      %1128 = vmatprep.mubr.bf16.mxu0 0
      %1129 = vmatmul.mubr.bf16.gmra.mxu0 %v1049
      %v1130 = vpop.f32.mrf.mxu0
      %v1131 = vadd.f32 0.0, %v1130
      %v1132 = vpop.f32.mrf.mxu0
      %v1133 = vpop.f32.mrf.mxu0
      %v1134 = vadd.f32 0.0, %v1133
      %v1135 = vpop.f32.mrf.mxu0
      %1136 = vmatprep.mubr.bf16.mxu0 0
      %1137 = vmatmul.mubr.bf16.gmra.mxu0 %v1052
      %v1138 = vpop.f32.mrf.mxu0
      %v1139 = vadd.f32 0.0, %v1138
      %v1140 = vpop.f32.mrf.mxu0
      %v1141 = vpop.f32.mrf.mxu0
      %v1142 = vadd.f32 0.0, %v1141
      %v1143 = vpop.f32.mrf.mxu0
      %1144 = vmatprep.mubr.bf16.mxu0 0
      %1145 = vmatmul.mubr.bf16.gmra.mxu0 %v1055
      %v1146 = vpop.f32.mrf.mxu0
      %v1147 = vadd.f32 0.0, %v1146
      %v1148 = vpop.f32.mrf.mxu0
      %v1149 = vpop.f32.mrf.mxu0
      %v1150 = vadd.f32 0.0, %v1149
      %v1151 = vpop.f32.mrf.mxu0
      %1152 = vmatprep.mubr.bf16.mxu0 0
      %1153 = vmatmul.mubr.bf16.gmra.mxu0 %v1058
      %v1154 = vpop.f32.mrf.mxu0
      %v1155 = vadd.f32 0.0, %v1154
      %v1156 = vpop.f32.mrf.mxu0
      %v1157 = vpop.f32.mrf.mxu0
      %v1158 = vadd.f32 0.0, %v1157
      %v1159 = vpop.f32.mrf.mxu0
      %1160 = vmatprep.mubr.bf16.mxu0 0
      %1161 = vmatmul.mubr.bf16.gmra.mxu0 %v1061
      %v1162 = vpop.f32.mrf.mxu0
      %v1163 = vadd.f32 0.0, %v1162
      %v1164 = vpop.f32.mrf.mxu0
      %v1165 = vpop.f32.mrf.mxu0
      %v1166 = vadd.f32 0.0, %v1165
      %v1167 = vpop.f32.mrf.mxu0
      %1168 = vmatprep.mubr.bf16.mxu0 0
      %1169 = vmatmul.mubr.bf16.gmra.mxu0 %v1064
      %v1170 = vpop.f32.mrf.mxu0
      %v1171 = vadd.f32 0.0, %v1170
      %v1172 = vpop.f32.mrf.mxu0
      %v1173 = vpop.f32.mrf.mxu0
      %v1174 = vadd.f32 0.0, %v1173
      %v1175 = vpop.f32.mrf.mxu0
      %1176 = vmatprep.mubr.bf16.mxu0 0
      %1177 = vmatmul.mubr.bf16.gmra.mxu0 %v1067
      %v1178 = vpop.f32.mrf.mxu0
      %v1179 = vadd.f32 0.0, %v1178
      %v1180 = vpop.f32.mrf.mxu0
      %v1181 = vpop.f32.mrf.mxu0
      %v1182 = vadd.f32 0.0, %v1181
      %v1183 = vpop.f32.mrf.mxu0
      %1184 = vmatprep.mubr.bf16.mxu0 0
      %1185 = vmatmul.mubr.bf16.gmra.mxu0 %v1070
      %v1186 = vpop.f32.mrf.mxu0
      %v1187 = vadd.f32 0.0, %v1186
      %v1188 = vpop.f32.mrf.mxu0
      %v1189 = vpop.f32.mrf.mxu0
      %v1190 = vadd.f32 0.0, %v1189
      %v1191 = vpop.f32.mrf.mxu0
      %1192 = vdwg.mxu0
      %v1193 = vsel %vm1032, %v1131, -1e+30
      %v1194 = vsel %vm1033, %v1134, -1e+30
      %v1195 = vsel %vm1034, %v1139, -1e+30
      %v1196 = vsel %vm1035, %v1142, -1e+30
      %v1197 = vsel %vm1036, %v1147, -1e+30
      %v1198 = vsel %vm1037, %v1150, -1e+30
      %v1199 = vsel %vm1038, %v1155, -1e+30
      %v1200 = vsel %vm1039, %v1158, -1e+30
      %v1201 = vsel %vm1040, %v1163, -1e+30
      %v1202 = vsel %vm1041, %v1166, -1e+30
      %v1203 = vsel %vm1042, %v1171, -1e+30
      %v1204 = vsel %vm1043, %v1174, -1e+30
      %v1205 = vsel %vm1044, %v1179, -1e+30
      %v1206 = vsel %vm1045, %v1182, -1e+30
      %v1207 = vsel %vm1046, %v1187, -1e+30
      %v1208 = vsel %vm1047, %v1190, -1e+30
      %1209 = vmax.xlane.f32.xlu0 %v1193
      %v1210 = vpop.xlane.xlu0 %1209
      %1211 = vmax.xlane.f32.xlu0 %v1194
      %v1212 = vpop.xlane.xlu0 %1211
      %1213 = vmax.xlane.f32.xlu0 %v1195
      %v1214 = vpop.xlane.xlu0 %1213
      %1215 = vmax.xlane.f32.xlu0 %v1196
      %v1216 = vpop.xlane.xlu0 %1215
      %1217 = vmax.xlane.f32.xlu0 %v1197
      %v1218 = vpop.xlane.xlu0 %1217
      %1219 = vmax.xlane.f32.xlu0 %v1198
      %v1220 = vpop.xlane.xlu0 %1219
      %1221 = vmax.xlane.f32.xlu0 %v1199
      %v1222 = vpop.xlane.xlu0 %1221
      %1223 = vmax.xlane.f32.xlu0 %v1200
      %v1224 = vpop.xlane.xlu0 %1223
      %1225 = vmax.xlane.f32.xlu0 %v1201
      %v1226 = vpop.xlane.xlu0 %1225
      %1227 = vmax.xlane.f32.xlu0 %v1202
      %v1228 = vpop.xlane.xlu0 %1227
      %1229 = vmax.xlane.f32.xlu0 %v1203
      %v1230 = vpop.xlane.xlu0 %1229
      %1231 = vmax.xlane.f32.xlu0 %v1204
      %v1232 = vpop.xlane.xlu0 %1231
      %1233 = vmax.xlane.f32.xlu0 %v1205
      %v1234 = vpop.xlane.xlu0 %1233
      %1235 = vmax.xlane.f32.xlu0 %v1206
      %v1236 = vpop.xlane.xlu0 %1235
      %1237 = vmax.xlane.f32.xlu0 %v1207
      %v1238 = vpop.xlane.xlu0 %1237
      %1239 = vmax.xlane.f32.xlu0 %v1208
      %v1240 = vpop.xlane.xlu0 %1239
      %v1241 = vsub.f32 %v1193, %v1210
      %v1242 = vsub.f32 %v1194, %v1212
      %v1243 = vsub.f32 %v1195, %v1214
      %v1244 = vsub.f32 %v1196, %v1216
      %v1245 = vsub.f32 %v1197, %v1218
      %v1246 = vsub.f32 %v1198, %v1220
      %v1247 = vsub.f32 %v1199, %v1222
      %v1248 = vsub.f32 %v1200, %v1224
      %v1249 = vsub.f32 %v1201, %v1226
      %v1250 = vsub.f32 %v1202, %v1228
      %v1251 = vsub.f32 %v1203, %v1230
      %v1252 = vsub.f32 %v1204, %v1232
      %v1253 = vsub.f32 %v1205, %v1234
      %v1254 = vsub.f32 %v1206, %v1236
      %v1255 = vsub.f32 %v1207, %v1238
      %v1256 = vsub.f32 %v1208, %v1240
      %v1257 = vmul.f32 %v1241, 1.442695
      %v1258 = vpow.pop %v1257
      %v1259 = vmul.f32 %v1242, 1.442695
      %v1260 = vpow.pop %v1259
      %v1261 = vmul.f32 %v1243, 1.442695
      %v1262 = vpow.pop %v1261
      %v1263 = vmul.f32 %v1244, 1.442695
      %v1264 = vpow.pop %v1263
      %v1265 = vmul.f32 %v1245, 1.442695
      %v1266 = vpow.pop %v1265
      %v1267 = vmul.f32 %v1246, 1.442695
      %v1268 = vpow.pop %v1267
      %v1269 = vmul.f32 %v1247, 1.442695
      %v1270 = vpow.pop %v1269
      %v1271 = vmul.f32 %v1248, 1.442695
      %v1272 = vpow.pop %v1271
      %v1273 = vmul.f32 %v1249, 1.442695
      %v1274 = vpow.pop %v1273
      %v1275 = vmul.f32 %v1250, 1.442695
      %v1276 = vpow.pop %v1275
      %v1277 = vmul.f32 %v1251, 1.442695
      %v1278 = vpow.pop %v1277
      %v1279 = vmul.f32 %v1252, 1.442695
      %v1280 = vpow.pop %v1279
      %v1281 = vmul.f32 %v1253, 1.442695
      %v1282 = vpow.pop %v1281
      %v1283 = vmul.f32 %v1254, 1.442695
      %v1284 = vpow.pop %v1283
      %v1285 = vmul.f32 %v1255, 1.442695
      %v1286 = vpow.pop %v1285
      %v1287 = vmul.f32 %v1256, 1.442695
      %v1288 = vpow.pop %v1287
      %1289 = vadd.xlane.f32.xlu0 %v1258
      %v1290 = vpop.xlane.xlu0 %1289
      %1291 = vadd.xlane.f32.xlu0 %v1260
      %v1292 = vpop.xlane.xlu0 %1291
      %1293 = vadd.xlane.f32.xlu0 %v1262
      %v1294 = vpop.xlane.xlu0 %1293
      %1295 = vadd.xlane.f32.xlu0 %v1264
      %v1296 = vpop.xlane.xlu0 %1295
      %1297 = vadd.xlane.f32.xlu0 %v1266
      %v1298 = vpop.xlane.xlu0 %1297
      %1299 = vadd.xlane.f32.xlu0 %v1268
      %v1300 = vpop.xlane.xlu0 %1299
      %1301 = vadd.xlane.f32.xlu0 %v1270
      %v1302 = vpop.xlane.xlu0 %1301
      %1303 = vadd.xlane.f32.xlu0 %v1272
      %v1304 = vpop.xlane.xlu0 %1303
      %1305 = vadd.xlane.f32.xlu0 %v1274
      %v1306 = vpop.xlane.xlu0 %1305
      %1307 = vadd.xlane.f32.xlu0 %v1276
      %v1308 = vpop.xlane.xlu0 %1307
      %1309 = vadd.xlane.f32.xlu0 %v1278
      %v1310 = vpop.xlane.xlu0 %1309
      %1311 = vadd.xlane.f32.xlu0 %v1280
      %v1312 = vpop.xlane.xlu0 %1311
      %1313 = vadd.xlane.f32.xlu0 %v1282
      %v1314 = vpop.xlane.xlu0 %1313
      %1315 = vadd.xlane.f32.xlu0 %v1284
      %v1316 = vpop.xlane.xlu0 %1315
      %1317 = vadd.xlane.f32.xlu0 %v1286
      %v1318 = vpop.xlane.xlu0 %1317
      %1319 = vadd.xlane.f32.xlu0 %v1288
      %v1320 = vpop.xlane.xlu0 %1319
      %v1321 = vrcp.pop %v1290
      %v1322 = vrcp.pop %v1292
      %v1323 = vrcp.pop %v1294
      %v1324 = vrcp.pop %v1296
      %v1325 = vrcp.pop %v1298
      %v1326 = vrcp.pop %v1300
      %v1327 = vrcp.pop %v1302
      %v1328 = vrcp.pop %v1304
      %v1329 = vrcp.pop %v1306
      %v1330 = vrcp.pop %v1308
      %v1331 = vrcp.pop %v1310
      %v1332 = vrcp.pop %v1312
      %v1333 = vrcp.pop %v1314
      %v1334 = vrcp.pop %v1316
      %v1335 = vrcp.pop %v1318
      %v1336 = vrcp.pop %v1320
      %v1337 = vmul.f32 %v1258, %v1321
      %v1338 = vmul.f32 %v1260, %v1322
      %v1339 = vmul.f32 %v1262, %v1323
      %v1340 = vmul.f32 %v1264, %v1324
      %v1341 = vmul.f32 %v1266, %v1325
      %v1342 = vmul.f32 %v1268, %v1326
      %v1343 = vmul.f32 %v1270, %v1327
      %v1344 = vmul.f32 %v1272, %v1328
      %v1345 = vmul.f32 %v1274, %v1329
      %v1346 = vmul.f32 %v1276, %v1330
      %v1347 = vmul.f32 %v1278, %v1331
      %v1348 = vmul.f32 %v1280, %v1332
      %v1349 = vmul.f32 %v1282, %v1333
      %v1350 = vmul.f32 %v1284, %v1334
      %v1351 = vmul.f32 %v1286, %v1335
      %v1352 = vmul.f32 %v1288, %v1336
      %v1353 = vpack.c.bf16 %v1338, %v1337
      %v1354 = vpack.c.bf16 %v1340, %v1339
      %v1355 = vpack.c.bf16 %v1342, %v1341
      %v1356 = vpack.c.bf16 %v1344, %v1343
      %v1357 = vpack.c.bf16 %v1346, %v1345
      %v1358 = vpack.c.bf16 %v1348, %v1347
      %v1359 = vpack.c.bf16 %v1350, %v1349
      %v1360 = vpack.c.bf16 %v1352, %v1351
      %1361 = vmatprep.subr.bf16.mxu0 0
      %1362 = vmatpush1.bf16.msra.mxu0 %v904
      %1363 = vmatprep.subr.bf16.mxu0 0
      %1364 = vmatpush1.bf16.msra.mxu0 %v901
      %1365 = vmatprep.subr.bf16.mxu0 0
      %1366 = vmatpush1.bf16.msra.mxu0 %v898
      %1367 = vmatprep.subr.bf16.mxu0 0
      %1368 = vmatpush1.bf16.msra.mxu0 %v895
      %1369 = vmatprep.subr.bf16.mxu0 0
      %1370 = vmatpush1.bf16.msra.mxu0 %v892
      %1371 = vmatprep.subr.bf16.mxu0 0
      %1372 = vmatpush1.bf16.msra.mxu0 %v889
      %1373 = vmatprep.subr.bf16.mxu0 0
      %1374 = vmatpush1.bf16.msra.mxu0 %v886
      %1375 = vmatprep.subr.bf16.mxu0 0
      %1376 = vmatpush1.bf16.msra.mxu0 %v883
      %1377 = vmatprep.subr.bf16.mxu0 0
      %1378 = vmatpush2.bf16.msra.mxu0 0
      %1379 = vmatprep.subr.bf16.mxu0 0
      %1380 = vmatpush2.bf16.msra.mxu0 0
      %1381 = vmatprep.subr.bf16.mxu0 0
      %1382 = vmatpush2.bf16.msra.mxu0 0
      %1383 = vmatprep.subr.bf16.mxu0 0
      %1384 = vmatpush2.bf16.msra.mxu0 0
      %1385 = vmatprep.subr.bf16.mxu0 0
      %1386 = vmatpush2.bf16.msra.mxu0 0
      %1387 = vmatprep.subr.bf16.mxu0 0
      %1388 = vmatpush2.bf16.msra.mxu0 0
      %1389 = vmatprep.subr.bf16.mxu0 0
      %1390 = vmatpush2.bf16.msra.mxu0 0
      %1391 = vmatprep.subr.bf16.mxu0 0
      %1392 = vmatpush2.bf16.msra.mxu0 0
      %1393 = vmatprep.mubr.bf16.mxu0 0
      %1394 = vmatmul.mubr.bf16.gmra.mxu0 %v1353
      %v1395 = vpop.f32.mrf.mxu0
      %v1396 = vadd.f32 0.0, %v1395
      %v1397 = vpop.f32.mrf.mxu0
      %v1398 = vpop.f32.mrf.mxu0
      %v1399 = vadd.f32 0.0, %v1398
      %v1400 = vpop.f32.mrf.mxu0
      %1401 = vmatprep.mubr.bf16.mxu0 0
      %1402 = vmatmul.mubr.bf16.gmra.mxu0 %v1354
      %v1403 = vpop.f32.mrf.mxu0
      %v1404 = vadd.f32 0.0, %v1403
      %v1405 = vpop.f32.mrf.mxu0
      %v1406 = vpop.f32.mrf.mxu0
      %v1407 = vadd.f32 0.0, %v1406
      %v1408 = vpop.f32.mrf.mxu0
      %1409 = vmatprep.mubr.bf16.mxu0 0
      %1410 = vmatmul.mubr.bf16.gmra.mxu0 %v1355
      %v1411 = vpop.f32.mrf.mxu0
      %v1412 = vadd.f32 0.0, %v1411
      %v1413 = vpop.f32.mrf.mxu0
      %v1414 = vpop.f32.mrf.mxu0
      %v1415 = vadd.f32 0.0, %v1414
      %v1416 = vpop.f32.mrf.mxu0
      %1417 = vmatprep.mubr.bf16.mxu0 0
      %1418 = vmatmul.mubr.bf16.gmra.mxu0 %v1356
      %v1419 = vpop.f32.mrf.mxu0
      %v1420 = vadd.f32 0.0, %v1419
      %v1421 = vpop.f32.mrf.mxu0
      %v1422 = vpop.f32.mrf.mxu0
      %v1423 = vadd.f32 0.0, %v1422
      %v1424 = vpop.f32.mrf.mxu0
      %1425 = vmatprep.mubr.bf16.mxu0 0
      %1426 = vmatmul.mubr.bf16.gmra.mxu0 %v1357
      %v1427 = vpop.f32.mrf.mxu0
      %v1428 = vadd.f32 0.0, %v1427
      %v1429 = vpop.f32.mrf.mxu0
      %v1430 = vpop.f32.mrf.mxu0
      %v1431 = vadd.f32 0.0, %v1430
      %v1432 = vpop.f32.mrf.mxu0
      %1433 = vmatprep.mubr.bf16.mxu0 0
      %1434 = vmatmul.mubr.bf16.gmra.mxu0 %v1358
      %v1435 = vpop.f32.mrf.mxu0
      %v1436 = vadd.f32 0.0, %v1435
      %v1437 = vpop.f32.mrf.mxu0
      %v1438 = vpop.f32.mrf.mxu0
      %v1439 = vadd.f32 0.0, %v1438
      %v1440 = vpop.f32.mrf.mxu0
      %1441 = vmatprep.mubr.bf16.mxu0 0
      %1442 = vmatmul.mubr.bf16.gmra.mxu0 %v1359
      %v1443 = vpop.f32.mrf.mxu0
      %v1444 = vadd.f32 0.0, %v1443
      %v1445 = vpop.f32.mrf.mxu0
      %v1446 = vpop.f32.mrf.mxu0
      %v1447 = vadd.f32 0.0, %v1446
      %v1448 = vpop.f32.mrf.mxu0
      %1449 = vmatprep.mubr.bf16.mxu0 0
      %1450 = vmatmul.mubr.bf16.gmra.mxu0 %v1360
      %v1451 = vpop.f32.mrf.mxu0
      %v1452 = vadd.f32 0.0, %v1451
      %v1453 = vpop.f32.mrf.mxu0
      %v1454 = vpop.f32.mrf.mxu0
      %v1455 = vadd.f32 0.0, %v1454
      %v1456 = vpop.f32.mrf.mxu0
      %1457 = vdwg.mxu0
      %1466 = vrot.lane.b32.xlu0 %v881, 96
      %v1467 = vpop.permute.xlu0 %1466
      %1468 = vrot.lane.b32.xlu0 %v884, 96
      %v1469 = vpop.permute.xlu0 %1468
      %1470 = vrot.lane.b32.xlu0 %v887, 96
      %v1471 = vpop.permute.xlu0 %1470
      %1472 = vrot.lane.b32.xlu0 %v890, 96
      %v1473 = vpop.permute.xlu0 %1472
      %1474 = vrot.lane.b32.xlu0 %v893, 96
      %v1475 = vpop.permute.xlu0 %1474
      %1476 = vrot.lane.b32.xlu0 %v896, 96
      %v1477 = vpop.permute.xlu0 %1476
      %1478 = vrot.lane.b32.xlu0 %v899, 96
      %v1479 = vpop.permute.xlu0 %1478
      %1480 = vrot.lane.b32.xlu0 %v902, 96
      %v1481 = vpop.permute.xlu0 %1480
      %1490 = vrot.lane.b32.xlu0 %v882, 96
      %v1491 = vpop.permute.xlu0 %1490
      %1492 = vrot.lane.b32.xlu0 %v885, 96
      %v1493 = vpop.permute.xlu0 %1492
      %1494 = vrot.lane.b32.xlu0 %v888, 96
      %v1495 = vpop.permute.xlu0 %1494
      %1496 = vrot.lane.b32.xlu0 %v891, 96
      %v1497 = vpop.permute.xlu0 %1496
      %1498 = vrot.lane.b32.xlu0 %v894, 96
      %v1499 = vpop.permute.xlu0 %1498
      %1500 = vrot.lane.b32.xlu0 %v897, 96
      %v1501 = vpop.permute.xlu0 %1500
      %1502 = vrot.lane.b32.xlu0 %v900, 96
      %v1503 = vpop.permute.xlu0 %1502
      %1504 = vrot.lane.b32.xlu0 %v903, 96
      %v1505 = vpop.permute.xlu0 %1504
      %v1507 = vsel %vm478, %v1467, 0
      %v1510 = vsel %vm478, %v1469, 0
      %v1513 = vsel %vm478, %v1471, 0
      %v1516 = vsel %vm478, %v1473, 0
      %v1519 = vsel %vm478, %v1475, 0
      %v1522 = vsel %vm478, %v1477, 0
      %v1525 = vsel %vm478, %v1479, 0
      %v1528 = vsel %vm478, %v1481, 0
      %v1531 = vsel %vm478, %v1491, 0
      %v1534 = vsel %vm478, %v1493, 0
      %v1537 = vsel %vm478, %v1495, 0
      %v1540 = vsel %vm478, %v1497, 0
      %v1543 = vsel %vm478, %v1499, 0
      %v1546 = vsel %vm478, %v1501, 0
      %v1549 = vsel %vm478, %v1503, 0
      %v1552 = vsel %vm478, %v1505, 0
      %1554 = vmatprep.subr.bf16.mxu0 0
      %1555 = vmatpush1.bf16.xpose.msra.mxu0 %v1552
      %1556 = vmatprep.subr.bf16.mxu0 0
      %1557 = vmatpush1.bf16.xpose.msra.mxu0 %v1549
      %1558 = vmatprep.subr.bf16.mxu0 0
      %1559 = vmatpush1.bf16.xpose.msra.mxu0 %v1546
      %1560 = vmatprep.subr.bf16.mxu0 0
      %1561 = vmatpush1.bf16.xpose.msra.mxu0 %v1543
      %1562 = vmatprep.subr.bf16.mxu0 0
      %1563 = vmatpush1.bf16.xpose.msra.mxu0 %v1540
      %1564 = vmatprep.subr.bf16.mxu0 0
      %1565 = vmatpush1.bf16.xpose.msra.mxu0 %v1537
      %1566 = vmatprep.subr.bf16.mxu0 0
      %1567 = vmatpush1.bf16.xpose.msra.mxu0 %v1534
      %1568 = vmatprep.subr.bf16.mxu0 0
      %1569 = vmatpush1.bf16.xpose.msra.mxu0 %v1531
      %1570 = vmatprep.subr.bf16.mxu0 0
      %1571 = vmatpush2.bf16.xpose.msra.mxu0 0
      %1572 = vmatprep.subr.bf16.mxu0 0
      %1573 = vmatpush2.bf16.xpose.msra.mxu0 0
      %1574 = vmatprep.subr.bf16.mxu0 0
      %1575 = vmatpush2.bf16.xpose.msra.mxu0 0
      %1576 = vmatprep.subr.bf16.mxu0 0
      %1577 = vmatpush2.bf16.xpose.msra.mxu0 0
      %1578 = vmatprep.subr.bf16.mxu0 0
      %1579 = vmatpush2.bf16.xpose.msra.mxu0 0
      %1580 = vmatprep.subr.bf16.mxu0 0
      %1581 = vmatpush2.bf16.xpose.msra.mxu0 0
      %1582 = vmatprep.subr.bf16.mxu0 0
      %1583 = vmatpush2.bf16.xpose.msra.mxu0 0
      %1584 = vmatprep.subr.bf16.mxu0 0
      %1585 = vmatpush2.bf16.xpose.msra.mxu0 0
      %1586 = vmatprep.mubr.bf16.mxu0 0
      %1587 = vmatmul.mubr.bf16.gmra.mxu0 %v1507
      %v1588 = vpop.f32.mrf.mxu0
      %v1589 = vadd.f32 0.0, %v1588
      %v1590 = vpop.f32.mrf.mxu0
      %v1591 = vpop.f32.mrf.mxu0
      %v1592 = vadd.f32 0.0, %v1591
      %v1593 = vpop.f32.mrf.mxu0
      %1594 = vmatprep.mubr.bf16.mxu0 0
      %1595 = vmatmul.mubr.bf16.gmra.mxu0 %v1510
      %v1596 = vpop.f32.mrf.mxu0
      %v1597 = vadd.f32 0.0, %v1596
      %v1598 = vpop.f32.mrf.mxu0
      %v1599 = vpop.f32.mrf.mxu0
      %v1600 = vadd.f32 0.0, %v1599
      %v1601 = vpop.f32.mrf.mxu0
      %1602 = vmatprep.mubr.bf16.mxu0 0
      %1603 = vmatmul.mubr.bf16.gmra.mxu0 %v1513
      %v1604 = vpop.f32.mrf.mxu0
      %v1605 = vadd.f32 0.0, %v1604
      %v1606 = vpop.f32.mrf.mxu0
      %v1607 = vpop.f32.mrf.mxu0
      %v1608 = vadd.f32 0.0, %v1607
      %v1609 = vpop.f32.mrf.mxu0
      %1610 = vmatprep.mubr.bf16.mxu0 0
      %1611 = vmatmul.mubr.bf16.gmra.mxu0 %v1516
      %v1612 = vpop.f32.mrf.mxu0
      %v1613 = vadd.f32 0.0, %v1612
      %v1614 = vpop.f32.mrf.mxu0
      %v1615 = vpop.f32.mrf.mxu0
      %v1616 = vadd.f32 0.0, %v1615
      %v1617 = vpop.f32.mrf.mxu0
      %1618 = vmatprep.mubr.bf16.mxu0 0
      %1619 = vmatmul.mubr.bf16.gmra.mxu0 %v1519
      %v1620 = vpop.f32.mrf.mxu0
      %v1621 = vadd.f32 0.0, %v1620
      %v1622 = vpop.f32.mrf.mxu0
      %v1623 = vpop.f32.mrf.mxu0
      %v1624 = vadd.f32 0.0, %v1623
      %v1625 = vpop.f32.mrf.mxu0
      %1626 = vmatprep.mubr.bf16.mxu0 0
      %1627 = vmatmul.mubr.bf16.gmra.mxu0 %v1522
      %v1628 = vpop.f32.mrf.mxu0
      %v1629 = vadd.f32 0.0, %v1628
      %v1630 = vpop.f32.mrf.mxu0
      %v1631 = vpop.f32.mrf.mxu0
      %v1632 = vadd.f32 0.0, %v1631
      %v1633 = vpop.f32.mrf.mxu0
      %1634 = vmatprep.mubr.bf16.mxu0 0
      %1635 = vmatmul.mubr.bf16.gmra.mxu0 %v1525
      %v1636 = vpop.f32.mrf.mxu0
      %v1637 = vadd.f32 0.0, %v1636
      %v1638 = vpop.f32.mrf.mxu0
      %v1639 = vpop.f32.mrf.mxu0
      %v1640 = vadd.f32 0.0, %v1639
      %v1641 = vpop.f32.mrf.mxu0
      %1642 = vmatprep.mubr.bf16.mxu0 0
      %1643 = vmatmul.mubr.bf16.gmra.mxu0 %v1528
      %v1644 = vpop.f32.mrf.mxu0
      %v1645 = vadd.f32 0.0, %v1644
      %v1646 = vpop.f32.mrf.mxu0
      %v1647 = vpop.f32.mrf.mxu0
      %v1648 = vadd.f32 0.0, %v1647
      %v1649 = vpop.f32.mrf.mxu0
      %1650 = vdwg.mxu0
      %v1651 = vsel %vm1032, %v1589, -1e+30
      %v1652 = vsel %vm1033, %v1592, -1e+30
      %v1653 = vsel %vm1034, %v1597, -1e+30
      %v1654 = vsel %vm1035, %v1600, -1e+30
      %v1655 = vsel %vm1036, %v1605, -1e+30
      %v1656 = vsel %vm1037, %v1608, -1e+30
      %v1657 = vsel %vm1038, %v1613, -1e+30
      %v1658 = vsel %vm1039, %v1616, -1e+30
      %v1659 = vsel %vm1040, %v1621, -1e+30
      %v1660 = vsel %vm1041, %v1624, -1e+30
      %v1661 = vsel %vm1042, %v1629, -1e+30
      %v1662 = vsel %vm1043, %v1632, -1e+30
      %v1663 = vsel %vm1044, %v1637, -1e+30
      %v1664 = vsel %vm1045, %v1640, -1e+30
      %v1665 = vsel %vm1046, %v1645, -1e+30
      %v1666 = vsel %vm1047, %v1648, -1e+30
      %1667 = vmax.xlane.f32.xlu0 %v1651
      %v1668 = vpop.xlane.xlu0 %1667
      %1669 = vmax.xlane.f32.xlu0 %v1652
      %v1670 = vpop.xlane.xlu0 %1669
      %1671 = vmax.xlane.f32.xlu0 %v1653
      %v1672 = vpop.xlane.xlu0 %1671
      %1673 = vmax.xlane.f32.xlu0 %v1654
      %v1674 = vpop.xlane.xlu0 %1673
      %1675 = vmax.xlane.f32.xlu0 %v1655
      %v1676 = vpop.xlane.xlu0 %1675
      %1677 = vmax.xlane.f32.xlu0 %v1656
      %v1678 = vpop.xlane.xlu0 %1677
      %1679 = vmax.xlane.f32.xlu0 %v1657
      %v1680 = vpop.xlane.xlu0 %1679
      %1681 = vmax.xlane.f32.xlu0 %v1658
      %v1682 = vpop.xlane.xlu0 %1681
      %1683 = vmax.xlane.f32.xlu0 %v1659
      %v1684 = vpop.xlane.xlu0 %1683
      %1685 = vmax.xlane.f32.xlu0 %v1660
      %v1686 = vpop.xlane.xlu0 %1685
      %1687 = vmax.xlane.f32.xlu0 %v1661
      %v1688 = vpop.xlane.xlu0 %1687
      %1689 = vmax.xlane.f32.xlu0 %v1662
      %v1690 = vpop.xlane.xlu0 %1689
      %1691 = vmax.xlane.f32.xlu0 %v1663
      %v1692 = vpop.xlane.xlu0 %1691
      %1693 = vmax.xlane.f32.xlu0 %v1664
      %v1694 = vpop.xlane.xlu0 %1693
      %1695 = vmax.xlane.f32.xlu0 %v1665
      %v1696 = vpop.xlane.xlu0 %1695
      %1697 = vmax.xlane.f32.xlu0 %v1666
      %v1698 = vpop.xlane.xlu0 %1697
      %v1699 = vsub.f32 %v1651, %v1668
      %v1700 = vsub.f32 %v1652, %v1670
      %v1701 = vsub.f32 %v1653, %v1672
      %v1702 = vsub.f32 %v1654, %v1674
      %v1703 = vsub.f32 %v1655, %v1676
      %v1704 = vsub.f32 %v1656, %v1678
      %v1705 = vsub.f32 %v1657, %v1680
      %v1706 = vsub.f32 %v1658, %v1682
      %v1707 = vsub.f32 %v1659, %v1684
      %v1708 = vsub.f32 %v1660, %v1686
      %v1709 = vsub.f32 %v1661, %v1688
      %v1710 = vsub.f32 %v1662, %v1690
      %v1711 = vsub.f32 %v1663, %v1692
      %v1712 = vsub.f32 %v1664, %v1694
      %v1713 = vsub.f32 %v1665, %v1696
      %v1714 = vsub.f32 %v1666, %v1698
      %v1715 = vmul.f32 %v1699, 1.442695
      %v1716 = vpow.pop %v1715
      %v1717 = vmul.f32 %v1700, 1.442695
      %v1718 = vpow.pop %v1717
      %v1719 = vmul.f32 %v1701, 1.442695
      %v1720 = vpow.pop %v1719
      %v1721 = vmul.f32 %v1702, 1.442695
      %v1722 = vpow.pop %v1721
      %v1723 = vmul.f32 %v1703, 1.442695
      %v1724 = vpow.pop %v1723
      %v1725 = vmul.f32 %v1704, 1.442695
      %v1726 = vpow.pop %v1725
      %v1727 = vmul.f32 %v1705, 1.442695
      %v1728 = vpow.pop %v1727
      %v1729 = vmul.f32 %v1706, 1.442695
      %v1730 = vpow.pop %v1729
      %v1731 = vmul.f32 %v1707, 1.442695
      %v1732 = vpow.pop %v1731
      %v1733 = vmul.f32 %v1708, 1.442695
      %v1734 = vpow.pop %v1733
      %v1735 = vmul.f32 %v1709, 1.442695
      %v1736 = vpow.pop %v1735
      %v1737 = vmul.f32 %v1710, 1.442695
      %v1738 = vpow.pop %v1737
      %v1739 = vmul.f32 %v1711, 1.442695
      %v1740 = vpow.pop %v1739
      %v1741 = vmul.f32 %v1712, 1.442695
      %v1742 = vpow.pop %v1741
      %v1743 = vmul.f32 %v1713, 1.442695
      %v1744 = vpow.pop %v1743
      %v1745 = vmul.f32 %v1714, 1.442695
      %v1746 = vpow.pop %v1745
      %1747 = vadd.xlane.f32.xlu0 %v1716
      %v1748 = vpop.xlane.xlu0 %1747
      %1749 = vadd.xlane.f32.xlu0 %v1718
      %v1750 = vpop.xlane.xlu0 %1749
      %1751 = vadd.xlane.f32.xlu0 %v1720
      %v1752 = vpop.xlane.xlu0 %1751
      %1753 = vadd.xlane.f32.xlu0 %v1722
      %v1754 = vpop.xlane.xlu0 %1753
      %1755 = vadd.xlane.f32.xlu0 %v1724
      %v1756 = vpop.xlane.xlu0 %1755
      %1757 = vadd.xlane.f32.xlu0 %v1726
      %v1758 = vpop.xlane.xlu0 %1757
      %1759 = vadd.xlane.f32.xlu0 %v1728
      %v1760 = vpop.xlane.xlu0 %1759
      %1761 = vadd.xlane.f32.xlu0 %v1730
      %v1762 = vpop.xlane.xlu0 %1761
      %1763 = vadd.xlane.f32.xlu0 %v1732
      %v1764 = vpop.xlane.xlu0 %1763
      %1765 = vadd.xlane.f32.xlu0 %v1734
      %v1766 = vpop.xlane.xlu0 %1765
      %1767 = vadd.xlane.f32.xlu0 %v1736
      %v1768 = vpop.xlane.xlu0 %1767
      %1769 = vadd.xlane.f32.xlu0 %v1738
      %v1770 = vpop.xlane.xlu0 %1769
      %1771 = vadd.xlane.f32.xlu0 %v1740
      %v1772 = vpop.xlane.xlu0 %1771
      %1773 = vadd.xlane.f32.xlu0 %v1742
      %v1774 = vpop.xlane.xlu0 %1773
      %1775 = vadd.xlane.f32.xlu0 %v1744
      %v1776 = vpop.xlane.xlu0 %1775
      %1777 = vadd.xlane.f32.xlu0 %v1746
      %v1778 = vpop.xlane.xlu0 %1777
      %v1779 = vrcp.pop %v1748
      %v1780 = vrcp.pop %v1750
      %v1781 = vrcp.pop %v1752
      %v1782 = vrcp.pop %v1754
      %v1783 = vrcp.pop %v1756
      %v1784 = vrcp.pop %v1758
      %v1785 = vrcp.pop %v1760
      %v1786 = vrcp.pop %v1762
      %v1787 = vrcp.pop %v1764
      %v1788 = vrcp.pop %v1766
      %v1789 = vrcp.pop %v1768
      %v1790 = vrcp.pop %v1770
      %v1791 = vrcp.pop %v1772
      %v1792 = vrcp.pop %v1774
      %v1793 = vrcp.pop %v1776
      %v1794 = vrcp.pop %v1778
      %v1795 = vmul.f32 %v1716, %v1779
      %v1796 = vmul.f32 %v1718, %v1780
      %v1797 = vmul.f32 %v1720, %v1781
      %v1798 = vmul.f32 %v1722, %v1782
      %v1799 = vmul.f32 %v1724, %v1783
      %v1800 = vmul.f32 %v1726, %v1784
      %v1801 = vmul.f32 %v1728, %v1785
      %v1802 = vmul.f32 %v1730, %v1786
      %v1803 = vmul.f32 %v1732, %v1787
      %v1804 = vmul.f32 %v1734, %v1788
      %v1805 = vmul.f32 %v1736, %v1789
      %v1806 = vmul.f32 %v1738, %v1790
      %v1807 = vmul.f32 %v1740, %v1791
      %v1808 = vmul.f32 %v1742, %v1792
      %v1809 = vmul.f32 %v1744, %v1793
      %v1810 = vmul.f32 %v1746, %v1794
      %v1811 = vpack.c.bf16 %v1796, %v1795
      %v1812 = vpack.c.bf16 %v1798, %v1797
      %v1813 = vpack.c.bf16 %v1800, %v1799
      %v1814 = vpack.c.bf16 %v1802, %v1801
      %v1815 = vpack.c.bf16 %v1804, %v1803
      %v1816 = vpack.c.bf16 %v1806, %v1805
      %v1817 = vpack.c.bf16 %v1808, %v1807
      %v1818 = vpack.c.bf16 %v1810, %v1809
      %1827 = vrot.lane.b32.xlu0 %v883, 96
      %v1828 = vpop.permute.xlu0 %1827
      %1829 = vrot.lane.b32.xlu0 %v886, 96
      %v1830 = vpop.permute.xlu0 %1829
      %1831 = vrot.lane.b32.xlu0 %v889, 96
      %v1832 = vpop.permute.xlu0 %1831
      %1833 = vrot.lane.b32.xlu0 %v892, 96
      %v1834 = vpop.permute.xlu0 %1833
      %1835 = vrot.lane.b32.xlu0 %v895, 96
      %v1836 = vpop.permute.xlu0 %1835
      %1837 = vrot.lane.b32.xlu0 %v898, 96
      %v1838 = vpop.permute.xlu0 %1837
      %1839 = vrot.lane.b32.xlu0 %v901, 96
      %v1840 = vpop.permute.xlu0 %1839
      %1841 = vrot.lane.b32.xlu0 %v904, 96
      %v1842 = vpop.permute.xlu0 %1841
      %1851 = vmatprep.subr.bf16.mxu0 0
      %1852 = vmatpush1.bf16.msra.mxu0 %v1842
      %1853 = vmatprep.subr.bf16.mxu0 0
      %1854 = vmatpush1.bf16.msra.mxu0 %v1840
      %1855 = vmatprep.subr.bf16.mxu0 0
      %1856 = vmatpush1.bf16.msra.mxu0 %v1838
      %1857 = vmatprep.subr.bf16.mxu0 0
      %1858 = vmatpush1.bf16.msra.mxu0 %v1836
      %1859 = vmatprep.subr.bf16.mxu0 0
      %1860 = vmatpush1.bf16.msra.mxu0 %v1834
      %1861 = vmatprep.subr.bf16.mxu0 0
      %1862 = vmatpush1.bf16.msra.mxu0 %v1832
      %1863 = vmatprep.subr.bf16.mxu0 0
      %1864 = vmatpush1.bf16.msra.mxu0 %v1830
      %1865 = vmatprep.subr.bf16.mxu0 0
      %1866 = vmatpush1.bf16.msra.mxu0 %v1828
      %1867 = vmatprep.subr.bf16.mxu0 0
      %1868 = vmatpush2.bf16.msra.mxu0 0
      %1869 = vmatprep.subr.bf16.mxu0 0
      %1870 = vmatpush2.bf16.msra.mxu0 0
      %1871 = vmatprep.subr.bf16.mxu0 0
      %1872 = vmatpush2.bf16.msra.mxu0 0
      %1873 = vmatprep.subr.bf16.mxu0 0
      %1874 = vmatpush2.bf16.msra.mxu0 0
      %1875 = vmatprep.subr.bf16.mxu0 0
      %1876 = vmatpush2.bf16.msra.mxu0 0
      %1877 = vmatprep.subr.bf16.mxu0 0
      %1878 = vmatpush2.bf16.msra.mxu0 0
      %1879 = vmatprep.subr.bf16.mxu0 0
      %1880 = vmatpush2.bf16.msra.mxu0 0
      %1881 = vmatprep.subr.bf16.mxu0 0
      %1882 = vmatpush2.bf16.msra.mxu0 0
      %1883 = vmatprep.mubr.bf16.mxu0 0
      %1884 = vmatmul.mubr.bf16.gmra.mxu0 %v1811
      %v1885 = vpop.f32.mrf.mxu0
      %v1886 = vadd.f32 0.0, %v1885
      %v1887 = vpop.f32.mrf.mxu0
      %v1888 = vpop.f32.mrf.mxu0
      %v1889 = vadd.f32 0.0, %v1888
      %v1890 = vpop.f32.mrf.mxu0
      %1891 = vmatprep.mubr.bf16.mxu0 0
      %1892 = vmatmul.mubr.bf16.gmra.mxu0 %v1812
      %v1893 = vpop.f32.mrf.mxu0
      %v1894 = vadd.f32 0.0, %v1893
      %v1895 = vpop.f32.mrf.mxu0
      %v1896 = vpop.f32.mrf.mxu0
      %v1897 = vadd.f32 0.0, %v1896
      %v1898 = vpop.f32.mrf.mxu0
      %1899 = vmatprep.mubr.bf16.mxu0 0
      %1900 = vmatmul.mubr.bf16.gmra.mxu0 %v1813
      %v1901 = vpop.f32.mrf.mxu0
      %v1902 = vadd.f32 0.0, %v1901
      %v1903 = vpop.f32.mrf.mxu0
      %v1904 = vpop.f32.mrf.mxu0
      %v1905 = vadd.f32 0.0, %v1904
      %v1906 = vpop.f32.mrf.mxu0
      %1907 = vmatprep.mubr.bf16.mxu0 0
      %1908 = vmatmul.mubr.bf16.gmra.mxu0 %v1814
      %v1909 = vpop.f32.mrf.mxu0
      %v1910 = vadd.f32 0.0, %v1909
      %v1911 = vpop.f32.mrf.mxu0
      %v1912 = vpop.f32.mrf.mxu0
      %v1913 = vadd.f32 0.0, %v1912
      %v1914 = vpop.f32.mrf.mxu0
      %1915 = vmatprep.mubr.bf16.mxu0 0
      %1916 = vmatmul.mubr.bf16.gmra.mxu0 %v1815
      %v1917 = vpop.f32.mrf.mxu0
      %v1918 = vadd.f32 0.0, %v1917
      %v1919 = vpop.f32.mrf.mxu0
      %v1920 = vpop.f32.mrf.mxu0
      %v1921 = vadd.f32 0.0, %v1920
      %v1922 = vpop.f32.mrf.mxu0
      %1923 = vmatprep.mubr.bf16.mxu0 0
      %1924 = vmatmul.mubr.bf16.gmra.mxu0 %v1816
      %v1925 = vpop.f32.mrf.mxu0
      %v1926 = vadd.f32 0.0, %v1925
      %v1927 = vpop.f32.mrf.mxu0
      %v1928 = vpop.f32.mrf.mxu0
      %v1929 = vadd.f32 0.0, %v1928
      %v1930 = vpop.f32.mrf.mxu0
      %1931 = vmatprep.mubr.bf16.mxu0 0
      %1932 = vmatmul.mubr.bf16.gmra.mxu0 %v1817
      %v1933 = vpop.f32.mrf.mxu0
      %v1934 = vadd.f32 0.0, %v1933
      %v1935 = vpop.f32.mrf.mxu0
      %v1936 = vpop.f32.mrf.mxu0
      %v1937 = vadd.f32 0.0, %v1936
      %v1938 = vpop.f32.mrf.mxu0
      %1939 = vmatprep.mubr.bf16.mxu0 0
      %1940 = vmatmul.mubr.bf16.gmra.mxu0 %v1818
      %v1941 = vpop.f32.mrf.mxu0
      %v1942 = vadd.f32 0.0, %v1941
      %v1943 = vpop.f32.mrf.mxu0
      %v1944 = vpop.f32.mrf.mxu0
      %v1945 = vadd.f32 0.0, %v1944
      %v1946 = vpop.f32.mrf.mxu0
      %1947 = vdwg.mxu0
      %1948 = vrot.lane.b32.xlu0 %v881, 64
      %v1949 = vpop.permute.xlu0 %1948
      %1950 = vrot.lane.b32.xlu0 %v884, 64
      %v1951 = vpop.permute.xlu0 %1950
      %1952 = vrot.lane.b32.xlu0 %v887, 64
      %v1953 = vpop.permute.xlu0 %1952
      %1954 = vrot.lane.b32.xlu0 %v890, 64
      %v1955 = vpop.permute.xlu0 %1954
      %1956 = vrot.lane.b32.xlu0 %v893, 64
      %v1957 = vpop.permute.xlu0 %1956
      %1958 = vrot.lane.b32.xlu0 %v896, 64
      %v1959 = vpop.permute.xlu0 %1958
      %1960 = vrot.lane.b32.xlu0 %v899, 64
      %v1961 = vpop.permute.xlu0 %1960
      %1962 = vrot.lane.b32.xlu0 %v902, 64
      %v1963 = vpop.permute.xlu0 %1962
      %1964 = vrot.lane.b32.xlu0 %v882, 64
      %v1965 = vpop.permute.xlu0 %1964
      %1966 = vrot.lane.b32.xlu0 %v885, 64
      %v1967 = vpop.permute.xlu0 %1966
      %1968 = vrot.lane.b32.xlu0 %v888, 64
      %v1969 = vpop.permute.xlu0 %1968
      %1970 = vrot.lane.b32.xlu0 %v891, 64
      %v1971 = vpop.permute.xlu0 %1970
      %1972 = vrot.lane.b32.xlu0 %v894, 64
      %v1973 = vpop.permute.xlu0 %1972
      %1974 = vrot.lane.b32.xlu0 %v897, 64
      %v1975 = vpop.permute.xlu0 %1974
      %1976 = vrot.lane.b32.xlu0 %v900, 64
      %v1977 = vpop.permute.xlu0 %1976
      %1978 = vrot.lane.b32.xlu0 %v903, 64
      %v1979 = vpop.permute.xlu0 %1978
      %v1981 = vsel %vm478, %v1949, 0
      %v1984 = vsel %vm478, %v1951, 0
      %v1987 = vsel %vm478, %v1953, 0
      %v1990 = vsel %vm478, %v1955, 0
      %v1993 = vsel %vm478, %v1957, 0
      %v1996 = vsel %vm478, %v1959, 0
      %v1999 = vsel %vm478, %v1961, 0
      %v2002 = vsel %vm478, %v1963, 0
      %v2005 = vsel %vm478, %v1965, 0
      %v2008 = vsel %vm478, %v1967, 0
      %v2011 = vsel %vm478, %v1969, 0
      %v2014 = vsel %vm478, %v1971, 0
      %v2017 = vsel %vm478, %v1973, 0
      %v2020 = vsel %vm478, %v1975, 0
      %v2023 = vsel %vm478, %v1977, 0
      %v2026 = vsel %vm478, %v1979, 0
      %2028 = vmatprep.subr.bf16.mxu0 0
      %2029 = vmatpush1.bf16.xpose.msra.mxu0 %v2026
      %2030 = vmatprep.subr.bf16.mxu0 0
      %2031 = vmatpush1.bf16.xpose.msra.mxu0 %v2023
      %2032 = vmatprep.subr.bf16.mxu0 0
      %2033 = vmatpush1.bf16.xpose.msra.mxu0 %v2020
      %2034 = vmatprep.subr.bf16.mxu0 0
      %2035 = vmatpush1.bf16.xpose.msra.mxu0 %v2017
      %2036 = vmatprep.subr.bf16.mxu0 0
      %2037 = vmatpush1.bf16.xpose.msra.mxu0 %v2014
      %2038 = vmatprep.subr.bf16.mxu0 0
      %2039 = vmatpush1.bf16.xpose.msra.mxu0 %v2011
      %2040 = vmatprep.subr.bf16.mxu0 0
      %2041 = vmatpush1.bf16.xpose.msra.mxu0 %v2008
      %2042 = vmatprep.subr.bf16.mxu0 0
      %2043 = vmatpush1.bf16.xpose.msra.mxu0 %v2005
      %2044 = vmatprep.subr.bf16.mxu0 0
      %2045 = vmatpush2.bf16.xpose.msra.mxu0 0
      %2046 = vmatprep.subr.bf16.mxu0 0
      %2047 = vmatpush2.bf16.xpose.msra.mxu0 0
      %2048 = vmatprep.subr.bf16.mxu0 0
      %2049 = vmatpush2.bf16.xpose.msra.mxu0 0
      %2050 = vmatprep.subr.bf16.mxu0 0
      %2051 = vmatpush2.bf16.xpose.msra.mxu0 0
      %2052 = vmatprep.subr.bf16.mxu0 0
      %2053 = vmatpush2.bf16.xpose.msra.mxu0 0
      %2054 = vmatprep.subr.bf16.mxu0 0
      %2055 = vmatpush2.bf16.xpose.msra.mxu0 0
      %2056 = vmatprep.subr.bf16.mxu0 0
      %2057 = vmatpush2.bf16.xpose.msra.mxu0 0
      %2058 = vmatprep.subr.bf16.mxu0 0
      %2059 = vmatpush2.bf16.xpose.msra.mxu0 0
      %2060 = vmatprep.mubr.bf16.mxu0 0
      %2061 = vmatmul.mubr.bf16.gmra.mxu0 %v1981
      %v2062 = vpop.f32.mrf.mxu0
      %v2063 = vadd.f32 0.0, %v2062
      %v2064 = vpop.f32.mrf.mxu0
      %v2065 = vpop.f32.mrf.mxu0
      %v2066 = vadd.f32 0.0, %v2065
      %v2067 = vpop.f32.mrf.mxu0
      %2068 = vmatprep.mubr.bf16.mxu0 0
      %2069 = vmatmul.mubr.bf16.gmra.mxu0 %v1984
      %v2070 = vpop.f32.mrf.mxu0
      %v2071 = vadd.f32 0.0, %v2070
      %v2072 = vpop.f32.mrf.mxu0
      %v2073 = vpop.f32.mrf.mxu0
      %v2074 = vadd.f32 0.0, %v2073
      %v2075 = vpop.f32.mrf.mxu0
      %2076 = vmatprep.mubr.bf16.mxu0 0
      %2077 = vmatmul.mubr.bf16.gmra.mxu0 %v1987
      %v2078 = vpop.f32.mrf.mxu0
      %v2079 = vadd.f32 0.0, %v2078
      %v2080 = vpop.f32.mrf.mxu0
      %v2081 = vpop.f32.mrf.mxu0
      %v2082 = vadd.f32 0.0, %v2081
      %v2083 = vpop.f32.mrf.mxu0
      %2084 = vmatprep.mubr.bf16.mxu0 0
      %2085 = vmatmul.mubr.bf16.gmra.mxu0 %v1990
      %v2086 = vpop.f32.mrf.mxu0
      %v2087 = vadd.f32 0.0, %v2086
      %v2088 = vpop.f32.mrf.mxu0
      %v2089 = vpop.f32.mrf.mxu0
      %v2090 = vadd.f32 0.0, %v2089
      %v2091 = vpop.f32.mrf.mxu0
      %2092 = vmatprep.mubr.bf16.mxu0 0
      %2093 = vmatmul.mubr.bf16.gmra.mxu0 %v1993
      %v2094 = vpop.f32.mrf.mxu0
      %v2095 = vadd.f32 0.0, %v2094
      %v2096 = vpop.f32.mrf.mxu0
      %v2097 = vpop.f32.mrf.mxu0
      %v2098 = vadd.f32 0.0, %v2097
      %v2099 = vpop.f32.mrf.mxu0
      %2100 = vmatprep.mubr.bf16.mxu0 0
      %2101 = vmatmul.mubr.bf16.gmra.mxu0 %v1996
      %v2102 = vpop.f32.mrf.mxu0
      %v2103 = vadd.f32 0.0, %v2102
      %v2104 = vpop.f32.mrf.mxu0
      %v2105 = vpop.f32.mrf.mxu0
      %v2106 = vadd.f32 0.0, %v2105
      %v2107 = vpop.f32.mrf.mxu0
      %2108 = vmatprep.mubr.bf16.mxu0 0
      %2109 = vmatmul.mubr.bf16.gmra.mxu0 %v1999
      %v2110 = vpop.f32.mrf.mxu0
      %v2111 = vadd.f32 0.0, %v2110
      %v2112 = vpop.f32.mrf.mxu0
      %v2113 = vpop.f32.mrf.mxu0
      %v2114 = vadd.f32 0.0, %v2113
      %v2115 = vpop.f32.mrf.mxu0
      %2116 = vmatprep.mubr.bf16.mxu0 0
      %2117 = vmatmul.mubr.bf16.gmra.mxu0 %v2002
      %v2118 = vpop.f32.mrf.mxu0
      %v2119 = vadd.f32 0.0, %v2118
      %v2120 = vpop.f32.mrf.mxu0
      %v2121 = vpop.f32.mrf.mxu0
      %v2122 = vadd.f32 0.0, %v2121
      %v2123 = vpop.f32.mrf.mxu0
      %2124 = vdwg.mxu0
      %v2125 = vsel %vm1032, %v2063, -1e+30
      %v2126 = vsel %vm1033, %v2066, -1e+30
      %v2127 = vsel %vm1034, %v2071, -1e+30
      %v2128 = vsel %vm1035, %v2074, -1e+30
      %v2129 = vsel %vm1036, %v2079, -1e+30
      %v2130 = vsel %vm1037, %v2082, -1e+30
      %v2131 = vsel %vm1038, %v2087, -1e+30
      %v2132 = vsel %vm1039, %v2090, -1e+30
      %v2133 = vsel %vm1040, %v2095, -1e+30
      %v2134 = vsel %vm1041, %v2098, -1e+30
      %v2135 = vsel %vm1042, %v2103, -1e+30
      %v2136 = vsel %vm1043, %v2106, -1e+30
      %v2137 = vsel %vm1044, %v2111, -1e+30
      %v2138 = vsel %vm1045, %v2114, -1e+30
      %v2139 = vsel %vm1046, %v2119, -1e+30
      %v2140 = vsel %vm1047, %v2122, -1e+30
      %2141 = vmax.xlane.f32.xlu0 %v2125
      %v2142 = vpop.xlane.xlu0 %2141
      %2143 = vmax.xlane.f32.xlu0 %v2126
      %v2144 = vpop.xlane.xlu0 %2143
      %2145 = vmax.xlane.f32.xlu0 %v2127
      %v2146 = vpop.xlane.xlu0 %2145
      %2147 = vmax.xlane.f32.xlu0 %v2128
      %v2148 = vpop.xlane.xlu0 %2147
      %2149 = vmax.xlane.f32.xlu0 %v2129
      %v2150 = vpop.xlane.xlu0 %2149
      %2151 = vmax.xlane.f32.xlu0 %v2130
      %v2152 = vpop.xlane.xlu0 %2151
      %2153 = vmax.xlane.f32.xlu0 %v2131
      %v2154 = vpop.xlane.xlu0 %2153
      %2155 = vmax.xlane.f32.xlu0 %v2132
      %v2156 = vpop.xlane.xlu0 %2155
      %2157 = vmax.xlane.f32.xlu0 %v2133
      %v2158 = vpop.xlane.xlu0 %2157
      %2159 = vmax.xlane.f32.xlu0 %v2134
      %v2160 = vpop.xlane.xlu0 %2159
      %2161 = vmax.xlane.f32.xlu0 %v2135
      %v2162 = vpop.xlane.xlu0 %2161
      %2163 = vmax.xlane.f32.xlu0 %v2136
      %v2164 = vpop.xlane.xlu0 %2163
      %2165 = vmax.xlane.f32.xlu0 %v2137
      %v2166 = vpop.xlane.xlu0 %2165
      %2167 = vmax.xlane.f32.xlu0 %v2138
      %v2168 = vpop.xlane.xlu0 %2167
      %2169 = vmax.xlane.f32.xlu0 %v2139
      %v2170 = vpop.xlane.xlu0 %2169
      %2171 = vmax.xlane.f32.xlu0 %v2140
      %v2172 = vpop.xlane.xlu0 %2171
      %v2173 = vsub.f32 %v2125, %v2142
      %v2174 = vsub.f32 %v2126, %v2144
      %v2175 = vsub.f32 %v2127, %v2146
      %v2176 = vsub.f32 %v2128, %v2148
      %v2177 = vsub.f32 %v2129, %v2150
      %v2178 = vsub.f32 %v2130, %v2152
      %v2179 = vsub.f32 %v2131, %v2154
      %v2180 = vsub.f32 %v2132, %v2156
      %v2181 = vsub.f32 %v2133, %v2158
      %v2182 = vsub.f32 %v2134, %v2160
      %v2183 = vsub.f32 %v2135, %v2162
      %v2184 = vsub.f32 %v2136, %v2164
      %v2185 = vsub.f32 %v2137, %v2166
      %v2186 = vsub.f32 %v2138, %v2168
      %v2187 = vsub.f32 %v2139, %v2170
      %v2188 = vsub.f32 %v2140, %v2172
      %v2189 = vmul.f32 %v2173, 1.442695
      %v2190 = vpow.pop %v2189
      %v2191 = vmul.f32 %v2174, 1.442695
      %v2192 = vpow.pop %v2191
      %v2193 = vmul.f32 %v2175, 1.442695
      %v2194 = vpow.pop %v2193
      %v2195 = vmul.f32 %v2176, 1.442695
      %v2196 = vpow.pop %v2195
      %v2197 = vmul.f32 %v2177, 1.442695
      %v2198 = vpow.pop %v2197
      %v2199 = vmul.f32 %v2178, 1.442695
      %v2200 = vpow.pop %v2199
      %v2201 = vmul.f32 %v2179, 1.442695
      %v2202 = vpow.pop %v2201
      %v2203 = vmul.f32 %v2180, 1.442695
      %v2204 = vpow.pop %v2203
      %v2205 = vmul.f32 %v2181, 1.442695
      %v2206 = vpow.pop %v2205
      %v2207 = vmul.f32 %v2182, 1.442695
      %v2208 = vpow.pop %v2207
      %v2209 = vmul.f32 %v2183, 1.442695
      %v2210 = vpow.pop %v2209
      %v2211 = vmul.f32 %v2184, 1.442695
      %v2212 = vpow.pop %v2211
      %v2213 = vmul.f32 %v2185, 1.442695
      %v2214 = vpow.pop %v2213
      %v2215 = vmul.f32 %v2186, 1.442695
      %v2216 = vpow.pop %v2215
      %v2217 = vmul.f32 %v2187, 1.442695
      %v2218 = vpow.pop %v2217
      %v2219 = vmul.f32 %v2188, 1.442695
      %v2220 = vpow.pop %v2219
      %2221 = vadd.xlane.f32.xlu0 %v2190
      %v2222 = vpop.xlane.xlu0 %2221
      %2223 = vadd.xlane.f32.xlu0 %v2192
      %v2224 = vpop.xlane.xlu0 %2223
      %2225 = vadd.xlane.f32.xlu0 %v2194
      %v2226 = vpop.xlane.xlu0 %2225
      %2227 = vadd.xlane.f32.xlu0 %v2196
      %v2228 = vpop.xlane.xlu0 %2227
      %2229 = vadd.xlane.f32.xlu0 %v2198
      %v2230 = vpop.xlane.xlu0 %2229
      %2231 = vadd.xlane.f32.xlu0 %v2200
      %v2232 = vpop.xlane.xlu0 %2231
      %2233 = vadd.xlane.f32.xlu0 %v2202
      %v2234 = vpop.xlane.xlu0 %2233
      %2235 = vadd.xlane.f32.xlu0 %v2204
      %v2236 = vpop.xlane.xlu0 %2235
      %2237 = vadd.xlane.f32.xlu0 %v2206
      %v2238 = vpop.xlane.xlu0 %2237
      %2239 = vadd.xlane.f32.xlu0 %v2208
      %v2240 = vpop.xlane.xlu0 %2239
      %2241 = vadd.xlane.f32.xlu0 %v2210
      %v2242 = vpop.xlane.xlu0 %2241
      %2243 = vadd.xlane.f32.xlu0 %v2212
      %v2244 = vpop.xlane.xlu0 %2243
      %2245 = vadd.xlane.f32.xlu0 %v2214
      %v2246 = vpop.xlane.xlu0 %2245
      %2247 = vadd.xlane.f32.xlu0 %v2216
      %v2248 = vpop.xlane.xlu0 %2247
      %2249 = vadd.xlane.f32.xlu0 %v2218
      %v2250 = vpop.xlane.xlu0 %2249
      %2251 = vadd.xlane.f32.xlu0 %v2220
      %v2252 = vpop.xlane.xlu0 %2251
      %v2253 = vrcp.pop %v2222
      %v2254 = vrcp.pop %v2224
      %v2255 = vrcp.pop %v2226
      %v2256 = vrcp.pop %v2228
      %v2257 = vrcp.pop %v2230
      %v2258 = vrcp.pop %v2232
      %v2259 = vrcp.pop %v2234
      %v2260 = vrcp.pop %v2236
      %v2261 = vrcp.pop %v2238
      %v2262 = vrcp.pop %v2240
      %v2263 = vrcp.pop %v2242
      %v2264 = vrcp.pop %v2244
      %v2265 = vrcp.pop %v2246
      %v2266 = vrcp.pop %v2248
      %v2267 = vrcp.pop %v2250
      %v2268 = vrcp.pop %v2252
      %v2269 = vmul.f32 %v2190, %v2253
      %v2270 = vmul.f32 %v2192, %v2254
      %v2271 = vmul.f32 %v2194, %v2255
      %v2272 = vmul.f32 %v2196, %v2256
      %v2273 = vmul.f32 %v2198, %v2257
      %v2274 = vmul.f32 %v2200, %v2258
      %v2275 = vmul.f32 %v2202, %v2259
      %v2276 = vmul.f32 %v2204, %v2260
      %v2277 = vmul.f32 %v2206, %v2261
      %v2278 = vmul.f32 %v2208, %v2262
      %v2279 = vmul.f32 %v2210, %v2263
      %v2280 = vmul.f32 %v2212, %v2264
      %v2281 = vmul.f32 %v2214, %v2265
      %v2282 = vmul.f32 %v2216, %v2266
      %v2283 = vmul.f32 %v2218, %v2267
      %v2284 = vmul.f32 %v2220, %v2268
      %v2285 = vpack.c.bf16 %v2270, %v2269
      %v2286 = vpack.c.bf16 %v2272, %v2271
      %v2287 = vpack.c.bf16 %v2274, %v2273
      %v2288 = vpack.c.bf16 %v2276, %v2275
      %v2289 = vpack.c.bf16 %v2278, %v2277
      %v2290 = vpack.c.bf16 %v2280, %v2279
      %v2291 = vpack.c.bf16 %v2282, %v2281
      %v2292 = vpack.c.bf16 %v2284, %v2283
      %2293 = vrot.lane.b32.xlu0 %v883, 64
      %v2294 = vpop.permute.xlu0 %2293
      %2295 = vrot.lane.b32.xlu0 %v886, 64
      %v2296 = vpop.permute.xlu0 %2295
      %2297 = vrot.lane.b32.xlu0 %v889, 64
      %v2298 = vpop.permute.xlu0 %2297
      %2299 = vrot.lane.b32.xlu0 %v892, 64
      %v2300 = vpop.permute.xlu0 %2299
      %2301 = vrot.lane.b32.xlu0 %v895, 64
      %v2302 = vpop.permute.xlu0 %2301
      %2303 = vrot.lane.b32.xlu0 %v898, 64
      %v2304 = vpop.permute.xlu0 %2303
      %2305 = vrot.lane.b32.xlu0 %v901, 64
      %v2306 = vpop.permute.xlu0 %2305
      %2307 = vrot.lane.b32.xlu0 %v904, 64
      %v2308 = vpop.permute.xlu0 %2307
      %2317 = vmatprep.subr.bf16.mxu0 0
      %2318 = vmatpush1.bf16.msra.mxu0 %v2308
      %2319 = vmatprep.subr.bf16.mxu0 0
      %2320 = vmatpush1.bf16.msra.mxu0 %v2306
      %2321 = vmatprep.subr.bf16.mxu0 0
      %2322 = vmatpush1.bf16.msra.mxu0 %v2304
      %2323 = vmatprep.subr.bf16.mxu0 0
      %2324 = vmatpush1.bf16.msra.mxu0 %v2302
      %2325 = vmatprep.subr.bf16.mxu0 0
      %2326 = vmatpush1.bf16.msra.mxu0 %v2300
      %2327 = vmatprep.subr.bf16.mxu0 0
      %2328 = vmatpush1.bf16.msra.mxu0 %v2298
      %2329 = vmatprep.subr.bf16.mxu0 0
      %2330 = vmatpush1.bf16.msra.mxu0 %v2296
      %2331 = vmatprep.subr.bf16.mxu0 0
      %2332 = vmatpush1.bf16.msra.mxu0 %v2294
      %2333 = vmatprep.subr.bf16.mxu0 0
      %2334 = vmatpush2.bf16.msra.mxu0 0
      %2335 = vmatprep.subr.bf16.mxu0 0
      %2336 = vmatpush2.bf16.msra.mxu0 0
      %2337 = vmatprep.subr.bf16.mxu0 0
      %2338 = vmatpush2.bf16.msra.mxu0 0
      %2339 = vmatprep.subr.bf16.mxu0 0
      %2340 = vmatpush2.bf16.msra.mxu0 0
      %2341 = vmatprep.subr.bf16.mxu0 0
      %2342 = vmatpush2.bf16.msra.mxu0 0
      %2343 = vmatprep.subr.bf16.mxu0 0
      %2344 = vmatpush2.bf16.msra.mxu0 0
      %2345 = vmatprep.subr.bf16.mxu0 0
      %2346 = vmatpush2.bf16.msra.mxu0 0
      %2347 = vmatprep.subr.bf16.mxu0 0
      %2348 = vmatpush2.bf16.msra.mxu0 0
      %2349 = vmatprep.mubr.bf16.mxu0 0
      %2350 = vmatmul.mubr.bf16.gmra.mxu0 %v2285
      %v2351 = vpop.f32.mrf.mxu0
      %v2352 = vadd.f32 0.0, %v2351
      %v2353 = vpop.f32.mrf.mxu0
      %v2354 = vpop.f32.mrf.mxu0
      %v2355 = vadd.f32 0.0, %v2354
      %v2356 = vpop.f32.mrf.mxu0
      %2357 = vmatprep.mubr.bf16.mxu0 0
      %2358 = vmatmul.mubr.bf16.gmra.mxu0 %v2286
      %v2359 = vpop.f32.mrf.mxu0
      %v2360 = vadd.f32 0.0, %v2359
      %v2361 = vpop.f32.mrf.mxu0
      %v2362 = vpop.f32.mrf.mxu0
      %v2363 = vadd.f32 0.0, %v2362
      %v2364 = vpop.f32.mrf.mxu0
      %2365 = vmatprep.mubr.bf16.mxu0 0
      %2366 = vmatmul.mubr.bf16.gmra.mxu0 %v2287
      %v2367 = vpop.f32.mrf.mxu0
      %v2368 = vadd.f32 0.0, %v2367
      %v2369 = vpop.f32.mrf.mxu0
      %v2370 = vpop.f32.mrf.mxu0
      %v2371 = vadd.f32 0.0, %v2370
      %v2372 = vpop.f32.mrf.mxu0
      %2373 = vmatprep.mubr.bf16.mxu0 0
      %2374 = vmatmul.mubr.bf16.gmra.mxu0 %v2288
      %v2375 = vpop.f32.mrf.mxu0
      %v2376 = vadd.f32 0.0, %v2375
      %v2377 = vpop.f32.mrf.mxu0
      %v2378 = vpop.f32.mrf.mxu0
      %v2379 = vadd.f32 0.0, %v2378
      %v2380 = vpop.f32.mrf.mxu0
      %2381 = vmatprep.mubr.bf16.mxu0 0
      %2382 = vmatmul.mubr.bf16.gmra.mxu0 %v2289
      %v2383 = vpop.f32.mrf.mxu0
      %v2384 = vadd.f32 0.0, %v2383
      %v2385 = vpop.f32.mrf.mxu0
      %v2386 = vpop.f32.mrf.mxu0
      %v2387 = vadd.f32 0.0, %v2386
      %v2388 = vpop.f32.mrf.mxu0
      %2389 = vmatprep.mubr.bf16.mxu0 0
      %2390 = vmatmul.mubr.bf16.gmra.mxu0 %v2290
      %v2391 = vpop.f32.mrf.mxu0
      %v2392 = vadd.f32 0.0, %v2391
      %v2393 = vpop.f32.mrf.mxu0
      %v2394 = vpop.f32.mrf.mxu0
      %v2395 = vadd.f32 0.0, %v2394
      %v2396 = vpop.f32.mrf.mxu0
      %2397 = vmatprep.mubr.bf16.mxu0 0
      %2398 = vmatmul.mubr.bf16.gmra.mxu0 %v2291
      %v2399 = vpop.f32.mrf.mxu0
      %v2400 = vadd.f32 0.0, %v2399
      %v2401 = vpop.f32.mrf.mxu0
      %v2402 = vpop.f32.mrf.mxu0
      %v2403 = vadd.f32 0.0, %v2402
      %v2404 = vpop.f32.mrf.mxu0
      %2405 = vmatprep.mubr.bf16.mxu0 0
      %2406 = vmatmul.mubr.bf16.gmra.mxu0 %v2292
      %v2407 = vpop.f32.mrf.mxu0
      %v2408 = vadd.f32 0.0, %v2407
      %v2409 = vpop.f32.mrf.mxu0
      %v2410 = vpop.f32.mrf.mxu0
      %v2411 = vadd.f32 0.0, %v2410
      %v2412 = vpop.f32.mrf.mxu0
      %2413 = vdwg.mxu0
      %2414 = vrot.lane.b32.xlu0 %v881, 32
      %v2415 = vpop.permute.xlu0 %2414
      %2416 = vrot.lane.b32.xlu0 %v884, 32
      %v2417 = vpop.permute.xlu0 %2416
      %2418 = vrot.lane.b32.xlu0 %v887, 32
      %v2419 = vpop.permute.xlu0 %2418
      %2420 = vrot.lane.b32.xlu0 %v890, 32
      %v2421 = vpop.permute.xlu0 %2420
      %2422 = vrot.lane.b32.xlu0 %v893, 32
      %v2423 = vpop.permute.xlu0 %2422
      %2424 = vrot.lane.b32.xlu0 %v896, 32
      %v2425 = vpop.permute.xlu0 %2424
      %2426 = vrot.lane.b32.xlu0 %v899, 32
      %v2427 = vpop.permute.xlu0 %2426
      %2428 = vrot.lane.b32.xlu0 %v902, 32
      %v2429 = vpop.permute.xlu0 %2428
      %2430 = vrot.lane.b32.xlu0 %v882, 32
      %v2431 = vpop.permute.xlu0 %2430
      %2432 = vrot.lane.b32.xlu0 %v885, 32
      %v2433 = vpop.permute.xlu0 %2432
      %2434 = vrot.lane.b32.xlu0 %v888, 32
      %v2435 = vpop.permute.xlu0 %2434
      %2436 = vrot.lane.b32.xlu0 %v891, 32
      %v2437 = vpop.permute.xlu0 %2436
      %2438 = vrot.lane.b32.xlu0 %v894, 32
      %v2439 = vpop.permute.xlu0 %2438
      %2440 = vrot.lane.b32.xlu0 %v897, 32
      %v2441 = vpop.permute.xlu0 %2440
      %2442 = vrot.lane.b32.xlu0 %v900, 32
      %v2443 = vpop.permute.xlu0 %2442
      %2444 = vrot.lane.b32.xlu0 %v903, 32
      %v2445 = vpop.permute.xlu0 %2444
      %v2447 = vsel %vm478, %v2415, 0
      %v2450 = vsel %vm478, %v2417, 0
      %v2453 = vsel %vm478, %v2419, 0
      %v2456 = vsel %vm478, %v2421, 0
      %v2459 = vsel %vm478, %v2423, 0
      %v2462 = vsel %vm478, %v2425, 0
      %v2465 = vsel %vm478, %v2427, 0
      %v2468 = vsel %vm478, %v2429, 0
      %v2471 = vsel %vm478, %v2431, 0
      %v2474 = vsel %vm478, %v2433, 0
      %v2477 = vsel %vm478, %v2435, 0
      %v2480 = vsel %vm478, %v2437, 0
      %v2483 = vsel %vm478, %v2439, 0
      %v2486 = vsel %vm478, %v2441, 0
      %v2489 = vsel %vm478, %v2443, 0
      %v2492 = vsel %vm478, %v2445, 0
      %2494 = vmatprep.subr.bf16.mxu0 0
      %2495 = vmatpush1.bf16.xpose.msra.mxu0 %v2492
      %2496 = vmatprep.subr.bf16.mxu0 0
      %2497 = vmatpush1.bf16.xpose.msra.mxu0 %v2489
      %2498 = vmatprep.subr.bf16.mxu0 0
      %2499 = vmatpush1.bf16.xpose.msra.mxu0 %v2486
      %2500 = vmatprep.subr.bf16.mxu0 0
      %2501 = vmatpush1.bf16.xpose.msra.mxu0 %v2483
      %2502 = vmatprep.subr.bf16.mxu0 0
      %2503 = vmatpush1.bf16.xpose.msra.mxu0 %v2480
      %2504 = vmatprep.subr.bf16.mxu0 0
      %2505 = vmatpush1.bf16.xpose.msra.mxu0 %v2477
      %2506 = vmatprep.subr.bf16.mxu0 0
      %2507 = vmatpush1.bf16.xpose.msra.mxu0 %v2474
      %2508 = vmatprep.subr.bf16.mxu0 0
      %2509 = vmatpush1.bf16.xpose.msra.mxu0 %v2471
      %2510 = vmatprep.subr.bf16.mxu0 0
      %2511 = vmatpush2.bf16.xpose.msra.mxu0 0
      %2512 = vmatprep.subr.bf16.mxu0 0
      %2513 = vmatpush2.bf16.xpose.msra.mxu0 0
      %2514 = vmatprep.subr.bf16.mxu0 0
      %2515 = vmatpush2.bf16.xpose.msra.mxu0 0
      %2516 = vmatprep.subr.bf16.mxu0 0
      %2517 = vmatpush2.bf16.xpose.msra.mxu0 0
      %2518 = vmatprep.subr.bf16.mxu0 0
      %2519 = vmatpush2.bf16.xpose.msra.mxu0 0
      %2520 = vmatprep.subr.bf16.mxu0 0
      %2521 = vmatpush2.bf16.xpose.msra.mxu0 0
      %2522 = vmatprep.subr.bf16.mxu0 0
      %2523 = vmatpush2.bf16.xpose.msra.mxu0 0
      %2524 = vmatprep.subr.bf16.mxu0 0
      %2525 = vmatpush2.bf16.xpose.msra.mxu0 0
      %2526 = vmatprep.mubr.bf16.mxu0 0
      %2527 = vmatmul.mubr.bf16.gmra.mxu0 %v2447
      %v2528 = vpop.f32.mrf.mxu0
      %v2529 = vadd.f32 0.0, %v2528
      %v2530 = vpop.f32.mrf.mxu0
      %v2531 = vpop.f32.mrf.mxu0
      %v2532 = vadd.f32 0.0, %v2531
      %v2533 = vpop.f32.mrf.mxu0
      %2534 = vmatprep.mubr.bf16.mxu0 0
      %2535 = vmatmul.mubr.bf16.gmra.mxu0 %v2450
      %v2536 = vpop.f32.mrf.mxu0
      %v2537 = vadd.f32 0.0, %v2536
      %v2538 = vpop.f32.mrf.mxu0
      %v2539 = vpop.f32.mrf.mxu0
      %v2540 = vadd.f32 0.0, %v2539
      %v2541 = vpop.f32.mrf.mxu0
      %2542 = vmatprep.mubr.bf16.mxu0 0
      %2543 = vmatmul.mubr.bf16.gmra.mxu0 %v2453
      %v2544 = vpop.f32.mrf.mxu0
      %v2545 = vadd.f32 0.0, %v2544
      %v2546 = vpop.f32.mrf.mxu0
      %v2547 = vpop.f32.mrf.mxu0
      %v2548 = vadd.f32 0.0, %v2547
      %v2549 = vpop.f32.mrf.mxu0
      %2550 = vmatprep.mubr.bf16.mxu0 0
      %2551 = vmatmul.mubr.bf16.gmra.mxu0 %v2456
      %v2552 = vpop.f32.mrf.mxu0
      %v2553 = vadd.f32 0.0, %v2552
      %v2554 = vpop.f32.mrf.mxu0
      %v2555 = vpop.f32.mrf.mxu0
      %v2556 = vadd.f32 0.0, %v2555
      %v2557 = vpop.f32.mrf.mxu0
      %2558 = vmatprep.mubr.bf16.mxu0 0
      %2559 = vmatmul.mubr.bf16.gmra.mxu0 %v2459
      %v2560 = vpop.f32.mrf.mxu0
      %v2561 = vadd.f32 0.0, %v2560
      %v2562 = vpop.f32.mrf.mxu0
      %v2563 = vpop.f32.mrf.mxu0
      %v2564 = vadd.f32 0.0, %v2563
      %v2565 = vpop.f32.mrf.mxu0
      %2566 = vmatprep.mubr.bf16.mxu0 0
      %2567 = vmatmul.mubr.bf16.gmra.mxu0 %v2462
      %v2568 = vpop.f32.mrf.mxu0
      %v2569 = vadd.f32 0.0, %v2568
      %v2570 = vpop.f32.mrf.mxu0
      %v2571 = vpop.f32.mrf.mxu0
      %v2572 = vadd.f32 0.0, %v2571
      %v2573 = vpop.f32.mrf.mxu0
      %2574 = vmatprep.mubr.bf16.mxu0 0
      %2575 = vmatmul.mubr.bf16.gmra.mxu0 %v2465
      %v2576 = vpop.f32.mrf.mxu0
      %v2577 = vadd.f32 0.0, %v2576
      %v2578 = vpop.f32.mrf.mxu0
      %v2579 = vpop.f32.mrf.mxu0
      %v2580 = vadd.f32 0.0, %v2579
      %v2581 = vpop.f32.mrf.mxu0
      %2582 = vmatprep.mubr.bf16.mxu0 0
      %2583 = vmatmul.mubr.bf16.gmra.mxu0 %v2468
      %v2584 = vpop.f32.mrf.mxu0
      %v2585 = vadd.f32 0.0, %v2584
      %v2586 = vpop.f32.mrf.mxu0
      %v2587 = vpop.f32.mrf.mxu0
      %v2588 = vadd.f32 0.0, %v2587
      %v2589 = vpop.f32.mrf.mxu0
      %2590 = vdwg.mxu0
      %v2591 = vsel %vm1032, %v2529, -1e+30
      %v2592 = vsel %vm1033, %v2532, -1e+30
      %v2593 = vsel %vm1034, %v2537, -1e+30
      %v2594 = vsel %vm1035, %v2540, -1e+30
      %v2595 = vsel %vm1036, %v2545, -1e+30
      %v2596 = vsel %vm1037, %v2548, -1e+30
      %v2597 = vsel %vm1038, %v2553, -1e+30
      %v2598 = vsel %vm1039, %v2556, -1e+30
      %v2599 = vsel %vm1040, %v2561, -1e+30
      %v2600 = vsel %vm1041, %v2564, -1e+30
      %v2601 = vsel %vm1042, %v2569, -1e+30
      %v2602 = vsel %vm1043, %v2572, -1e+30
      %v2603 = vsel %vm1044, %v2577, -1e+30
      %v2604 = vsel %vm1045, %v2580, -1e+30
      %v2605 = vsel %vm1046, %v2585, -1e+30
      %v2606 = vsel %vm1047, %v2588, -1e+30
      %2607 = vmax.xlane.f32.xlu0 %v2591
      %v2608 = vpop.xlane.xlu0 %2607
      %2609 = vmax.xlane.f32.xlu0 %v2592
      %v2610 = vpop.xlane.xlu0 %2609
      %2611 = vmax.xlane.f32.xlu0 %v2593
      %v2612 = vpop.xlane.xlu0 %2611
      %2613 = vmax.xlane.f32.xlu0 %v2594
      %v2614 = vpop.xlane.xlu0 %2613
      %2615 = vmax.xlane.f32.xlu0 %v2595
      %v2616 = vpop.xlane.xlu0 %2615
      %2617 = vmax.xlane.f32.xlu0 %v2596
      %v2618 = vpop.xlane.xlu0 %2617
      %2619 = vmax.xlane.f32.xlu0 %v2597
      %v2620 = vpop.xlane.xlu0 %2619
      %2621 = vmax.xlane.f32.xlu0 %v2598
      %v2622 = vpop.xlane.xlu0 %2621
      %2623 = vmax.xlane.f32.xlu0 %v2599
      %v2624 = vpop.xlane.xlu0 %2623
      %2625 = vmax.xlane.f32.xlu0 %v2600
      %v2626 = vpop.xlane.xlu0 %2625
      %2627 = vmax.xlane.f32.xlu0 %v2601
      %v2628 = vpop.xlane.xlu0 %2627
      %2629 = vmax.xlane.f32.xlu0 %v2602
      %v2630 = vpop.xlane.xlu0 %2629
      %2631 = vmax.xlane.f32.xlu0 %v2603
      %v2632 = vpop.xlane.xlu0 %2631
      %2633 = vmax.xlane.f32.xlu0 %v2604
      %v2634 = vpop.xlane.xlu0 %2633
      %2635 = vmax.xlane.f32.xlu0 %v2605
      %v2636 = vpop.xlane.xlu0 %2635
      %2637 = vmax.xlane.f32.xlu0 %v2606
      %v2638 = vpop.xlane.xlu0 %2637
      %v2639 = vsub.f32 %v2591, %v2608
      %v2640 = vsub.f32 %v2592, %v2610
      %v2641 = vsub.f32 %v2593, %v2612
      %v2642 = vsub.f32 %v2594, %v2614
      %v2643 = vsub.f32 %v2595, %v2616
      %v2644 = vsub.f32 %v2596, %v2618
      %v2645 = vsub.f32 %v2597, %v2620
      %v2646 = vsub.f32 %v2598, %v2622
      %v2647 = vsub.f32 %v2599, %v2624
      %v2648 = vsub.f32 %v2600, %v2626
      %v2649 = vsub.f32 %v2601, %v2628
      %v2650 = vsub.f32 %v2602, %v2630
      %v2651 = vsub.f32 %v2603, %v2632
      %v2652 = vsub.f32 %v2604, %v2634
      %v2653 = vsub.f32 %v2605, %v2636
      %v2654 = vsub.f32 %v2606, %v2638
      %v2655 = vmul.f32 %v2639, 1.442695
      %v2656 = vpow.pop %v2655
      %v2657 = vmul.f32 %v2640, 1.442695
      %v2658 = vpow.pop %v2657
      %v2659 = vmul.f32 %v2641, 1.442695
      %v2660 = vpow.pop %v2659
      %v2661 = vmul.f32 %v2642, 1.442695
      %v2662 = vpow.pop %v2661
      %v2663 = vmul.f32 %v2643, 1.442695
      %v2664 = vpow.pop %v2663
      %v2665 = vmul.f32 %v2644, 1.442695
      %v2666 = vpow.pop %v2665
      %v2667 = vmul.f32 %v2645, 1.442695
      %v2668 = vpow.pop %v2667
      %v2669 = vmul.f32 %v2646, 1.442695
      %v2670 = vpow.pop %v2669
      %v2671 = vmul.f32 %v2647, 1.442695
      %v2672 = vpow.pop %v2671
      %v2673 = vmul.f32 %v2648, 1.442695
      %v2674 = vpow.pop %v2673
      %v2675 = vmul.f32 %v2649, 1.442695
      %v2676 = vpow.pop %v2675
      %v2677 = vmul.f32 %v2650, 1.442695
      %v2678 = vpow.pop %v2677
      %v2679 = vmul.f32 %v2651, 1.442695
      %v2680 = vpow.pop %v2679
      %v2681 = vmul.f32 %v2652, 1.442695
      %v2682 = vpow.pop %v2681
      %v2683 = vmul.f32 %v2653, 1.442695
      %v2684 = vpow.pop %v2683
      %v2685 = vmul.f32 %v2654, 1.442695
      %v2686 = vpow.pop %v2685
      %2687 = vadd.xlane.f32.xlu0 %v2656
      %v2688 = vpop.xlane.xlu0 %2687
      %2689 = vadd.xlane.f32.xlu0 %v2658
      %v2690 = vpop.xlane.xlu0 %2689
      %2691 = vadd.xlane.f32.xlu0 %v2660
      %v2692 = vpop.xlane.xlu0 %2691
      %2693 = vadd.xlane.f32.xlu0 %v2662
      %v2694 = vpop.xlane.xlu0 %2693
      %2695 = vadd.xlane.f32.xlu0 %v2664
      %v2696 = vpop.xlane.xlu0 %2695
      %2697 = vadd.xlane.f32.xlu0 %v2666
      %v2698 = vpop.xlane.xlu0 %2697
      %2699 = vadd.xlane.f32.xlu0 %v2668
      %v2700 = vpop.xlane.xlu0 %2699
      %2701 = vadd.xlane.f32.xlu0 %v2670
      %v2702 = vpop.xlane.xlu0 %2701
      %2703 = vadd.xlane.f32.xlu0 %v2672
      %v2704 = vpop.xlane.xlu0 %2703
      %2705 = vadd.xlane.f32.xlu0 %v2674
      %v2706 = vpop.xlane.xlu0 %2705
      %2707 = vadd.xlane.f32.xlu0 %v2676
      %v2708 = vpop.xlane.xlu0 %2707
      %2709 = vadd.xlane.f32.xlu0 %v2678
      %v2710 = vpop.xlane.xlu0 %2709
      %2711 = vadd.xlane.f32.xlu0 %v2680
      %v2712 = vpop.xlane.xlu0 %2711
      %2713 = vadd.xlane.f32.xlu0 %v2682
      %v2714 = vpop.xlane.xlu0 %2713
      %2715 = vadd.xlane.f32.xlu0 %v2684
      %v2716 = vpop.xlane.xlu0 %2715
      %2717 = vadd.xlane.f32.xlu0 %v2686
      %v2718 = vpop.xlane.xlu0 %2717
      %v2719 = vrcp.pop %v2688
      %v2720 = vrcp.pop %v2690
      %v2721 = vrcp.pop %v2692
      %v2722 = vrcp.pop %v2694
      %v2723 = vrcp.pop %v2696
      %v2724 = vrcp.pop %v2698
      %v2725 = vrcp.pop %v2700
      %v2726 = vrcp.pop %v2702
      %v2727 = vrcp.pop %v2704
      %v2728 = vrcp.pop %v2706
      %v2729 = vrcp.pop %v2708
      %v2730 = vrcp.pop %v2710
      %v2731 = vrcp.pop %v2712
      %v2732 = vrcp.pop %v2714
      %v2733 = vrcp.pop %v2716
      %v2734 = vrcp.pop %v2718
      %v2735 = vmul.f32 %v2656, %v2719
      %v2736 = vmul.f32 %v2658, %v2720
      %v2737 = vmul.f32 %v2660, %v2721
      %v2738 = vmul.f32 %v2662, %v2722
      %v2739 = vmul.f32 %v2664, %v2723
      %v2740 = vmul.f32 %v2666, %v2724
      %v2741 = vmul.f32 %v2668, %v2725
      %v2742 = vmul.f32 %v2670, %v2726
      %v2743 = vmul.f32 %v2672, %v2727
      %v2744 = vmul.f32 %v2674, %v2728
      %v2745 = vmul.f32 %v2676, %v2729
      %v2746 = vmul.f32 %v2678, %v2730
      %v2747 = vmul.f32 %v2680, %v2731
      %v2748 = vmul.f32 %v2682, %v2732
      %v2749 = vmul.f32 %v2684, %v2733
      %v2750 = vmul.f32 %v2686, %v2734
      %v2751 = vpack.c.bf16 %v2736, %v2735
      %v2752 = vpack.c.bf16 %v2738, %v2737
      %v2753 = vpack.c.bf16 %v2740, %v2739
      %v2754 = vpack.c.bf16 %v2742, %v2741
      %v2755 = vpack.c.bf16 %v2744, %v2743
      %v2756 = vpack.c.bf16 %v2746, %v2745
      %v2757 = vpack.c.bf16 %v2748, %v2747
      %v2758 = vpack.c.bf16 %v2750, %v2749
      %2759 = vrot.lane.b32.xlu0 %v883, 32
      %v2760 = vpop.permute.xlu0 %2759
      %2761 = vrot.lane.b32.xlu0 %v886, 32
      %v2762 = vpop.permute.xlu0 %2761
      %2763 = vrot.lane.b32.xlu0 %v889, 32
      %v2764 = vpop.permute.xlu0 %2763
      %2765 = vrot.lane.b32.xlu0 %v892, 32
      %v2766 = vpop.permute.xlu0 %2765
      %2767 = vrot.lane.b32.xlu0 %v895, 32
      %v2768 = vpop.permute.xlu0 %2767
      %2769 = vrot.lane.b32.xlu0 %v898, 32
      %v2770 = vpop.permute.xlu0 %2769
      %2771 = vrot.lane.b32.xlu0 %v901, 32
      %v2772 = vpop.permute.xlu0 %2771
      %2773 = vrot.lane.b32.xlu0 %v904, 32
      %v2774 = vpop.permute.xlu0 %2773
      %2783 = vmatprep.subr.bf16.mxu0 0
      %2784 = vmatpush1.bf16.msra.mxu0 %v2774
      %2785 = vmatprep.subr.bf16.mxu0 0
      %2786 = vmatpush1.bf16.msra.mxu0 %v2772
      %2787 = vmatprep.subr.bf16.mxu0 0
      %2788 = vmatpush1.bf16.msra.mxu0 %v2770
      %2789 = vmatprep.subr.bf16.mxu0 0
      %2790 = vmatpush1.bf16.msra.mxu0 %v2768
      %2791 = vmatprep.subr.bf16.mxu0 0
      %2792 = vmatpush1.bf16.msra.mxu0 %v2766
      %2793 = vmatprep.subr.bf16.mxu0 0
      %2794 = vmatpush1.bf16.msra.mxu0 %v2764
      %2795 = vmatprep.subr.bf16.mxu0 0
      %2796 = vmatpush1.bf16.msra.mxu0 %v2762
      %2797 = vmatprep.subr.bf16.mxu0 0
      %2798 = vmatpush1.bf16.msra.mxu0 %v2760
      %2799 = vmatprep.subr.bf16.mxu0 0
      %2800 = vmatpush2.bf16.msra.mxu0 0
      %2801 = vmatprep.subr.bf16.mxu0 0
      %2802 = vmatpush2.bf16.msra.mxu0 0
      %2803 = vmatprep.subr.bf16.mxu0 0
      %2804 = vmatpush2.bf16.msra.mxu0 0
      %2805 = vmatprep.subr.bf16.mxu0 0
      %2806 = vmatpush2.bf16.msra.mxu0 0
      %2807 = vmatprep.subr.bf16.mxu0 0
      %2808 = vmatpush2.bf16.msra.mxu0 0
      %2809 = vmatprep.subr.bf16.mxu0 0
      %2810 = vmatpush2.bf16.msra.mxu0 0
      %2811 = vmatprep.subr.bf16.mxu0 0
      %2812 = vmatpush2.bf16.msra.mxu0 0
      %2813 = vmatprep.subr.bf16.mxu0 0
      %2814 = vmatpush2.bf16.msra.mxu0 0
      %2815 = vmatprep.mubr.bf16.mxu0 0
      %2816 = vmatmul.mubr.bf16.gmra.mxu0 %v2751
      %v2817 = vpop.f32.mrf.mxu0
      %v2818 = vadd.f32 0.0, %v2817
      %v2819 = vpop.f32.mrf.mxu0
      %v2820 = vpop.f32.mrf.mxu0
      %v2821 = vadd.f32 0.0, %v2820
      %v2822 = vpop.f32.mrf.mxu0
      %2823 = vmatprep.mubr.bf16.mxu0 0
      %2824 = vmatmul.mubr.bf16.gmra.mxu0 %v2752
      %v2825 = vpop.f32.mrf.mxu0
      %v2826 = vadd.f32 0.0, %v2825
      %v2827 = vpop.f32.mrf.mxu0
      %v2828 = vpop.f32.mrf.mxu0
      %v2829 = vadd.f32 0.0, %v2828
      %v2830 = vpop.f32.mrf.mxu0
      %2831 = vmatprep.mubr.bf16.mxu0 0
      %2832 = vmatmul.mubr.bf16.gmra.mxu0 %v2753
      %v2833 = vpop.f32.mrf.mxu0
      %v2834 = vadd.f32 0.0, %v2833
      %v2835 = vpop.f32.mrf.mxu0
      %v2836 = vpop.f32.mrf.mxu0
      %v2837 = vadd.f32 0.0, %v2836
      %v2838 = vpop.f32.mrf.mxu0
      %2839 = vmatprep.mubr.bf16.mxu0 0
      %2840 = vmatmul.mubr.bf16.gmra.mxu0 %v2754
      %v2841 = vpop.f32.mrf.mxu0
      %v2842 = vadd.f32 0.0, %v2841
      %v2843 = vpop.f32.mrf.mxu0
      %v2844 = vpop.f32.mrf.mxu0
      %v2845 = vadd.f32 0.0, %v2844
      %v2846 = vpop.f32.mrf.mxu0
      %2847 = vmatprep.mubr.bf16.mxu0 0
      %2848 = vmatmul.mubr.bf16.gmra.mxu0 %v2755
      %v2849 = vpop.f32.mrf.mxu0
      %v2850 = vadd.f32 0.0, %v2849
      %v2851 = vpop.f32.mrf.mxu0
      %v2852 = vpop.f32.mrf.mxu0
      %v2853 = vadd.f32 0.0, %v2852
      %v2854 = vpop.f32.mrf.mxu0
      %2855 = vmatprep.mubr.bf16.mxu0 0
      %2856 = vmatmul.mubr.bf16.gmra.mxu0 %v2756
      %v2857 = vpop.f32.mrf.mxu0
      %v2858 = vadd.f32 0.0, %v2857
      %v2859 = vpop.f32.mrf.mxu0
      %v2860 = vpop.f32.mrf.mxu0
      %v2861 = vadd.f32 0.0, %v2860
      %v2862 = vpop.f32.mrf.mxu0
      %2863 = vmatprep.mubr.bf16.mxu0 0
      %2864 = vmatmul.mubr.bf16.gmra.mxu0 %v2757
      %v2865 = vpop.f32.mrf.mxu0
      %v2866 = vadd.f32 0.0, %v2865
      %v2867 = vpop.f32.mrf.mxu0
      %v2868 = vpop.f32.mrf.mxu0
      %v2869 = vadd.f32 0.0, %v2868
      %v2870 = vpop.f32.mrf.mxu0
      %2871 = vmatprep.mubr.bf16.mxu0 0
      %2872 = vmatmul.mubr.bf16.gmra.mxu0 %v2758
      %v2873 = vpop.f32.mrf.mxu0
      %v2874 = vadd.f32 0.0, %v2873
      %v2875 = vpop.f32.mrf.mxu0
      %v2876 = vpop.f32.mrf.mxu0
      %v2877 = vadd.f32 0.0, %v2876
      %v2878 = vpop.f32.mrf.mxu0
      %2879 = vdwg.mxu0
      %2896 = vrot.lane.b32.xlu0 %v1886, 32
      %v2897 = vpop.permute.xlu0 %2896
      %2898 = vrot.lane.b32.xlu0 %v1889, 32
      %v2899 = vpop.permute.xlu0 %2898
      %2900 = vrot.lane.b32.xlu0 %v1894, 32
      %v2901 = vpop.permute.xlu0 %2900
      %2902 = vrot.lane.b32.xlu0 %v1897, 32
      %v2903 = vpop.permute.xlu0 %2902
      %2904 = vrot.lane.b32.xlu0 %v1902, 32
      %v2905 = vpop.permute.xlu0 %2904
      %2906 = vrot.lane.b32.xlu0 %v1905, 32
      %v2907 = vpop.permute.xlu0 %2906
      %2908 = vrot.lane.b32.xlu0 %v1910, 32
      %v2909 = vpop.permute.xlu0 %2908
      %2910 = vrot.lane.b32.xlu0 %v1913, 32
      %v2911 = vpop.permute.xlu0 %2910
      %2912 = vrot.lane.b32.xlu0 %v1918, 32
      %v2913 = vpop.permute.xlu0 %2912
      %2914 = vrot.lane.b32.xlu0 %v1921, 32
      %v2915 = vpop.permute.xlu0 %2914
      %2916 = vrot.lane.b32.xlu0 %v1926, 32
      %v2917 = vpop.permute.xlu0 %2916
      %2918 = vrot.lane.b32.xlu0 %v1929, 32
      %v2919 = vpop.permute.xlu0 %2918
      %2920 = vrot.lane.b32.xlu0 %v1934, 32
      %v2921 = vpop.permute.xlu0 %2920
      %2922 = vrot.lane.b32.xlu0 %v1937, 32
      %v2923 = vpop.permute.xlu0 %2922
      %2924 = vrot.lane.b32.xlu0 %v1942, 32
      %v2925 = vpop.permute.xlu0 %2924
      %2926 = vrot.lane.b32.xlu0 %v1945, 32
      %v2927 = vpop.permute.xlu0 %2926
      %2960 = vrot.lane.b32.xlu0 %v2352, 64
      %v2961 = vpop.permute.xlu0 %2960
      %2962 = vrot.lane.b32.xlu0 %v2355, 64
      %v2963 = vpop.permute.xlu0 %2962
      %2964 = vrot.lane.b32.xlu0 %v2360, 64
      %v2965 = vpop.permute.xlu0 %2964
      %2966 = vrot.lane.b32.xlu0 %v2363, 64
      %v2967 = vpop.permute.xlu0 %2966
      %2968 = vrot.lane.b32.xlu0 %v2368, 64
      %v2969 = vpop.permute.xlu0 %2968
      %2970 = vrot.lane.b32.xlu0 %v2371, 64
      %v2971 = vpop.permute.xlu0 %2970
      %2972 = vrot.lane.b32.xlu0 %v2376, 64
      %v2973 = vpop.permute.xlu0 %2972
      %2974 = vrot.lane.b32.xlu0 %v2379, 64
      %v2975 = vpop.permute.xlu0 %2974
      %2976 = vrot.lane.b32.xlu0 %v2384, 64
      %v2977 = vpop.permute.xlu0 %2976
      %2978 = vrot.lane.b32.xlu0 %v2387, 64
      %v2979 = vpop.permute.xlu0 %2978
      %2980 = vrot.lane.b32.xlu0 %v2392, 64
      %v2981 = vpop.permute.xlu0 %2980
      %2982 = vrot.lane.b32.xlu0 %v2395, 64
      %v2983 = vpop.permute.xlu0 %2982
      %2984 = vrot.lane.b32.xlu0 %v2400, 64
      %v2985 = vpop.permute.xlu0 %2984
      %2986 = vrot.lane.b32.xlu0 %v2403, 64
      %v2987 = vpop.permute.xlu0 %2986
      %2988 = vrot.lane.b32.xlu0 %v2408, 64
      %v2989 = vpop.permute.xlu0 %2988
      %2990 = vrot.lane.b32.xlu0 %v2411, 64
      %v2991 = vpop.permute.xlu0 %2990
      %3024 = vrot.lane.b32.xlu0 %v2818, 96
      %v3025 = vpop.permute.xlu0 %3024
      %3026 = vrot.lane.b32.xlu0 %v2821, 96
      %v3027 = vpop.permute.xlu0 %3026
      %3028 = vrot.lane.b32.xlu0 %v2826, 96
      %v3029 = vpop.permute.xlu0 %3028
      %3030 = vrot.lane.b32.xlu0 %v2829, 96
      %v3031 = vpop.permute.xlu0 %3030
      %3032 = vrot.lane.b32.xlu0 %v2834, 96
      %v3033 = vpop.permute.xlu0 %3032
      %3034 = vrot.lane.b32.xlu0 %v2837, 96
      %v3035 = vpop.permute.xlu0 %3034
      %3036 = vrot.lane.b32.xlu0 %v2842, 96
      %v3037 = vpop.permute.xlu0 %3036
      %3038 = vrot.lane.b32.xlu0 %v2845, 96
      %v3039 = vpop.permute.xlu0 %3038
      %3040 = vrot.lane.b32.xlu0 %v2850, 96
      %v3041 = vpop.permute.xlu0 %3040
      %3042 = vrot.lane.b32.xlu0 %v2853, 96
      %v3043 = vpop.permute.xlu0 %3042
      %3044 = vrot.lane.b32.xlu0 %v2858, 96
      %v3045 = vpop.permute.xlu0 %3044
      %3046 = vrot.lane.b32.xlu0 %v2861, 96
      %v3047 = vpop.permute.xlu0 %3046
      %3048 = vrot.lane.b32.xlu0 %v2866, 96
      %v3049 = vpop.permute.xlu0 %3048
      %3050 = vrot.lane.b32.xlu0 %v2869, 96
      %v3051 = vpop.permute.xlu0 %3050
      %3052 = vrot.lane.b32.xlu0 %v2874, 96
      %v3053 = vpop.permute.xlu0 %3052
      %3054 = vrot.lane.b32.xlu0 %v2877, 96
      %v3055 = vpop.permute.xlu0 %3054
      %v3072 = vsel %vm478, %v1396, %v2897
      %v3073 = vsel %vm478, %v1399, %v2899
      %v3074 = vsel %vm478, %v1404, %v2901
      %v3075 = vsel %vm478, %v1407, %v2903
      %v3076 = vsel %vm478, %v1412, %v2905
      %v3077 = vsel %vm478, %v1415, %v2907
      %v3078 = vsel %vm478, %v1420, %v2909
      %v3079 = vsel %vm478, %v1423, %v2911
      %v3080 = vsel %vm478, %v1428, %v2913
      %v3081 = vsel %vm478, %v1431, %v2915
      %v3082 = vsel %vm478, %v1436, %v2917
      %v3083 = vsel %vm478, %v1439, %v2919
      %v3084 = vsel %vm478, %v1444, %v2921
      %v3085 = vsel %vm478, %v1447, %v2923
      %v3086 = vsel %vm478, %v1452, %v2925
      %v3087 = vsel %vm478, %v1455, %v2927
      %vm3088 = vcmask 523264
      %v3089 = vsel %vm3088, %v3072, %v2961
      %v3090 = vsel %vm3088, %v3073, %v2963
      %v3091 = vsel %vm3088, %v3074, %v2965
      %v3092 = vsel %vm3088, %v3075, %v2967
      %v3093 = vsel %vm3088, %v3076, %v2969
      %v3094 = vsel %vm3088, %v3077, %v2971
      %v3095 = vsel %vm3088, %v3078, %v2973
      %v3096 = vsel %vm3088, %v3079, %v2975
      %v3097 = vsel %vm3088, %v3080, %v2977
      %v3098 = vsel %vm3088, %v3081, %v2979
      %v3099 = vsel %vm3088, %v3082, %v2981
      %v3100 = vsel %vm3088, %v3083, %v2983
      %v3101 = vsel %vm3088, %v3084, %v2985
      %v3102 = vsel %vm3088, %v3085, %v2987
      %v3103 = vsel %vm3088, %v3086, %v2989
      %v3104 = vsel %vm3088, %v3087, %v2991
      %vm3105 = vcmask 785408
      %v3106 = vsel %vm3105, %v3089, %v3025
      %v3107 = vsel %vm3105, %v3090, %v3027
      %v3108 = vsel %vm3105, %v3091, %v3029
      %v3109 = vsel %vm3105, %v3092, %v3031
      %v3110 = vsel %vm3105, %v3093, %v3033
      %v3111 = vsel %vm3105, %v3094, %v3035
      %v3112 = vsel %vm3105, %v3095, %v3037
      %v3113 = vsel %vm3105, %v3096, %v3039
      %v3114 = vsel %vm3105, %v3097, %v3041
      %v3115 = vsel %vm3105, %v3098, %v3043
      %v3116 = vsel %vm3105, %v3099, %v3045
      %v3117 = vsel %vm3105, %v3100, %v3047
      %v3118 = vsel %vm3105, %v3101, %v3049
      %v3119 = vsel %vm3105, %v3102, %v3051
      %v3120 = vsel %vm3105, %v3103, %v3053
      %v3121 = vsel %vm3105, %v3104, %v3055
      %v3122 = vld [vmem:[%s359 + $0x80] sm:$0xff]
      %v3123 = vld [vmem:[%s359 + $0x88] sm:$0xff]
      %v3124 = vld [vmem:[%s359 + $0x90] sm:$0xff]
      %v3125 = vld [vmem:[%s359 + $0x98] sm:$0xff]
      %v3126 = vld [vmem:[%s359 + $0xa0] sm:$0xff]
      %v3127 = vld [vmem:[%s359 + $0xa8] sm:$0xff]
      %v3128 = vld [vmem:[%s359 + $0xb0] sm:$0xff]
      %v3129 = vld [vmem:[%s359 + $0xb8] sm:$0xff]
      %v3130 = vld [vmem:[%s359 + $0xc0] sm:$0xff]
      %v3131 = vld [vmem:[%s359 + $0xc8] sm:$0xff]
      %v3132 = vld [vmem:[%s359 + $0xd0] sm:$0xff]
      %v3133 = vld [vmem:[%s359 + $0xd8] sm:$0xff]
      %v3134 = vld [vmem:[%s359 + $0xe0] sm:$0xff]
      %v3135 = vld [vmem:[%s359 + $0xe8] sm:$0xff]
      %v3136 = vld [vmem:[%s359 + $0xf0] sm:$0xff]
      %v3137 = vld [vmem:[%s359 + $0xf8] sm:$0xff]
      %v3138 = vld [vmem:[%s364 + $0x1] sm:$0x1]
      %3140 = vset.pattern.permute.xlu0 0
      %3141 = vperm.xlu0 %3140, %v3122
      %v3142 = vpop.permute.xlu0 %3141
      %3145 = vset.pattern.permute.xlu0 0
      %3146 = vperm.xlu0 %3145, %v3123
      %v3147 = vpop.permute.xlu0 %3146
      %3150 = vset.pattern.permute.xlu0 0
      %3151 = vperm.xlu0 %3150, %v3124
      %v3152 = vpop.permute.xlu0 %3151
      %3155 = vset.pattern.permute.xlu0 0
      %3156 = vperm.xlu0 %3155, %v3125
      %v3157 = vpop.permute.xlu0 %3156
      %3160 = vset.pattern.permute.xlu0 0
      %3161 = vperm.xlu0 %3160, %v3126
      %v3162 = vpop.permute.xlu0 %3161
      %3165 = vset.pattern.permute.xlu0 0
      %3166 = vperm.xlu0 %3165, %v3127
      %v3167 = vpop.permute.xlu0 %3166
      %3170 = vset.pattern.permute.xlu0 0
      %3171 = vperm.xlu0 %3170, %v3128
      %v3172 = vpop.permute.xlu0 %3171
      %3175 = vset.pattern.permute.xlu0 0
      %3176 = vperm.xlu0 %3175, %v3129
      %v3177 = vpop.permute.xlu0 %3176
      %3180 = vset.pattern.permute.xlu0 0
      %3181 = vperm.xlu0 %3180, %v3130
      %v3182 = vpop.permute.xlu0 %3181
      %3185 = vset.pattern.permute.xlu0 0
      %3186 = vperm.xlu0 %3185, %v3131
      %v3187 = vpop.permute.xlu0 %3186
      %3190 = vset.pattern.permute.xlu0 0
      %3191 = vperm.xlu0 %3190, %v3132
      %v3192 = vpop.permute.xlu0 %3191
      %3195 = vset.pattern.permute.xlu0 0
      %3196 = vperm.xlu0 %3195, %v3133
      %v3197 = vpop.permute.xlu0 %3196
      %3200 = vset.pattern.permute.xlu0 0
      %3201 = vperm.xlu0 %3200, %v3134
      %v3202 = vpop.permute.xlu0 %3201
      %3205 = vset.pattern.permute.xlu0 0
      %3206 = vperm.xlu0 %3205, %v3135
      %v3207 = vpop.permute.xlu0 %3206
      %3210 = vset.pattern.permute.xlu0 0
      %3211 = vperm.xlu0 %3210, %v3136
      %v3212 = vpop.permute.xlu0 %3211
      %3215 = vset.pattern.permute.xlu0 0
      %3216 = vperm.xlu0 %3215, %v3137
      %v3217 = vpop.permute.xlu0 %3216
      %v3220 = vlaneseq
      %v3221 = vshrl.u32 %v3220, 7
      %v3222 = vsub.s32 0, %v3221
      %v3223 = vrot.slane %v3138, %v3222
      %vm3225 = vcmp.eq.f32.partialorder %v3142, %v3223
      %vm3226 = vcmp.eq.f32.partialorder %v3147, %v3223
      %vm3227 = vcmp.eq.f32.partialorder %v3152, %v3223
      %vm3228 = vcmp.eq.f32.partialorder %v3157, %v3223
      %vm3229 = vcmp.eq.f32.partialorder %v3162, %v3223
      %vm3230 = vcmp.eq.f32.partialorder %v3167, %v3223
      %vm3231 = vcmp.eq.f32.partialorder %v3172, %v3223
      %vm3232 = vcmp.eq.f32.partialorder %v3177, %v3223
      %vm3233 = vcmp.eq.f32.partialorder %v3182, %v3223
      %vm3234 = vcmp.eq.f32.partialorder %v3187, %v3223
      %vm3235 = vcmp.eq.f32.partialorder %v3192, %v3223
      %vm3236 = vcmp.eq.f32.partialorder %v3197, %v3223
      %vm3237 = vcmp.eq.f32.partialorder %v3202, %v3223
      %vm3238 = vcmp.eq.f32.partialorder %v3207, %v3223
      %vm3239 = vcmp.eq.f32.partialorder %v3212, %v3223
      %vm3240 = vcmp.eq.f32.partialorder %v3217, %v3223
      %v3242 = vsel %vm478, %v905, 0
      %v3245 = vsel %vm478, %v908, 0
      %v3248 = vsel %vm478, %v911, 0
      %v3251 = vsel %vm478, %v914, 0
      %v3254 = vsel %vm478, %v917, 0
      %v3257 = vsel %vm478, %v920, 0
      %v3260 = vsel %vm478, %v923, 0
      %v3263 = vsel %vm478, %v926, 0
      %v3266 = vsel %vm478, %v906, 0
      %v3269 = vsel %vm478, %v909, 0
      %v3272 = vsel %vm478, %v912, 0
      %v3275 = vsel %vm478, %v915, 0
      %v3278 = vsel %vm478, %v918, 0
      %v3281 = vsel %vm478, %v921, 0
      %v3284 = vsel %vm478, %v924, 0
      %v3287 = vsel %vm478, %v927, 0
      %3289 = vmatprep.subr.bf16.mxu0 0
      %3290 = vmatpush1.bf16.xpose.msra.mxu0 %v3287
      %3291 = vmatprep.subr.bf16.mxu0 0
      %3292 = vmatpush1.bf16.xpose.msra.mxu0 %v3284
      %3293 = vmatprep.subr.bf16.mxu0 0
      %3294 = vmatpush1.bf16.xpose.msra.mxu0 %v3281
      %3295 = vmatprep.subr.bf16.mxu0 0
      %3296 = vmatpush1.bf16.xpose.msra.mxu0 %v3278
      %3297 = vmatprep.subr.bf16.mxu0 0
      %3298 = vmatpush1.bf16.xpose.msra.mxu0 %v3275
      %3299 = vmatprep.subr.bf16.mxu0 0
      %3300 = vmatpush1.bf16.xpose.msra.mxu0 %v3272
      %3301 = vmatprep.subr.bf16.mxu0 0
      %3302 = vmatpush1.bf16.xpose.msra.mxu0 %v3269
      %3303 = vmatprep.subr.bf16.mxu0 0
      %3304 = vmatpush1.bf16.xpose.msra.mxu0 %v3266
      %3305 = vmatprep.subr.bf16.mxu0 0
      %3306 = vmatpush2.bf16.xpose.msra.mxu0 0
      %3307 = vmatprep.subr.bf16.mxu0 0
      %3308 = vmatpush2.bf16.xpose.msra.mxu0 0
      %3309 = vmatprep.subr.bf16.mxu0 0
      %3310 = vmatpush2.bf16.xpose.msra.mxu0 0
      %3311 = vmatprep.subr.bf16.mxu0 0
      %3312 = vmatpush2.bf16.xpose.msra.mxu0 0
      %3313 = vmatprep.subr.bf16.mxu0 0
      %3314 = vmatpush2.bf16.xpose.msra.mxu0 0
      %3315 = vmatprep.subr.bf16.mxu0 0
      %3316 = vmatpush2.bf16.xpose.msra.mxu0 0
      %3317 = vmatprep.subr.bf16.mxu0 0
      %3318 = vmatpush2.bf16.xpose.msra.mxu0 0
      %3319 = vmatprep.subr.bf16.mxu0 0
      %3320 = vmatpush2.bf16.xpose.msra.mxu0 0
      %3321 = vmatprep.mubr.bf16.mxu0 0
      %3322 = vmatmul.mubr.bf16.gmra.mxu0 %v3242
      %v3323 = vpop.f32.mrf.mxu0
      %v3324 = vadd.f32 0.0, %v3323
      %v3325 = vpop.f32.mrf.mxu0
      %v3326 = vpop.f32.mrf.mxu0
      %v3327 = vadd.f32 0.0, %v3326
      %v3328 = vpop.f32.mrf.mxu0
      %3329 = vmatprep.mubr.bf16.mxu0 0
      %3330 = vmatmul.mubr.bf16.gmra.mxu0 %v3245
      %v3331 = vpop.f32.mrf.mxu0
      %v3332 = vadd.f32 0.0, %v3331
      %v3333 = vpop.f32.mrf.mxu0
      %v3334 = vpop.f32.mrf.mxu0
      %v3335 = vadd.f32 0.0, %v3334
      %v3336 = vpop.f32.mrf.mxu0
      %3337 = vmatprep.mubr.bf16.mxu0 0
      %3338 = vmatmul.mubr.bf16.gmra.mxu0 %v3248
      %v3339 = vpop.f32.mrf.mxu0
      %v3340 = vadd.f32 0.0, %v3339
      %v3341 = vpop.f32.mrf.mxu0
      %v3342 = vpop.f32.mrf.mxu0
      %v3343 = vadd.f32 0.0, %v3342
      %v3344 = vpop.f32.mrf.mxu0
      %3345 = vmatprep.mubr.bf16.mxu0 0
      %3346 = vmatmul.mubr.bf16.gmra.mxu0 %v3251
      %v3347 = vpop.f32.mrf.mxu0
      %v3348 = vadd.f32 0.0, %v3347
      %v3349 = vpop.f32.mrf.mxu0
      %v3350 = vpop.f32.mrf.mxu0
      %v3351 = vadd.f32 0.0, %v3350
      %v3352 = vpop.f32.mrf.mxu0
      %3353 = vmatprep.mubr.bf16.mxu0 0
      %3354 = vmatmul.mubr.bf16.gmra.mxu0 %v3254
      %v3355 = vpop.f32.mrf.mxu0
      %v3356 = vadd.f32 0.0, %v3355
      %v3357 = vpop.f32.mrf.mxu0
      %v3358 = vpop.f32.mrf.mxu0
      %v3359 = vadd.f32 0.0, %v3358
      %v3360 = vpop.f32.mrf.mxu0
      %3361 = vmatprep.mubr.bf16.mxu0 0
      %3362 = vmatmul.mubr.bf16.gmra.mxu0 %v3257
      %v3363 = vpop.f32.mrf.mxu0
      %v3364 = vadd.f32 0.0, %v3363
      %v3365 = vpop.f32.mrf.mxu0
      %v3366 = vpop.f32.mrf.mxu0
      %v3367 = vadd.f32 0.0, %v3366
      %v3368 = vpop.f32.mrf.mxu0
      %3369 = vmatprep.mubr.bf16.mxu0 0
      %3370 = vmatmul.mubr.bf16.gmra.mxu0 %v3260
      %v3371 = vpop.f32.mrf.mxu0
      %v3372 = vadd.f32 0.0, %v3371
      %v3373 = vpop.f32.mrf.mxu0
      %v3374 = vpop.f32.mrf.mxu0
      %v3375 = vadd.f32 0.0, %v3374
      %v3376 = vpop.f32.mrf.mxu0
      %3377 = vmatprep.mubr.bf16.mxu0 0
      %3378 = vmatmul.mubr.bf16.gmra.mxu0 %v3263
      %v3379 = vpop.f32.mrf.mxu0
      %v3380 = vadd.f32 0.0, %v3379
      %v3381 = vpop.f32.mrf.mxu0
      %v3382 = vpop.f32.mrf.mxu0
      %v3383 = vadd.f32 0.0, %v3382
      %v3384 = vpop.f32.mrf.mxu0
      %3385 = vdwg.mxu0
      %v3386 = vsel %vm3225, %v3324, -1e+30
      %v3387 = vsel %vm3226, %v3327, -1e+30
      %v3388 = vsel %vm3227, %v3332, -1e+30
      %v3389 = vsel %vm3228, %v3335, -1e+30
      %v3390 = vsel %vm3229, %v3340, -1e+30
      %v3391 = vsel %vm3230, %v3343, -1e+30
      %v3392 = vsel %vm3231, %v3348, -1e+30
      %v3393 = vsel %vm3232, %v3351, -1e+30
      %v3394 = vsel %vm3233, %v3356, -1e+30
      %v3395 = vsel %vm3234, %v3359, -1e+30
      %v3396 = vsel %vm3235, %v3364, -1e+30
      %v3397 = vsel %vm3236, %v3367, -1e+30
      %v3398 = vsel %vm3237, %v3372, -1e+30
      %v3399 = vsel %vm3238, %v3375, -1e+30
      %v3400 = vsel %vm3239, %v3380, -1e+30
      %v3401 = vsel %vm3240, %v3383, -1e+30
      %3402 = vmax.xlane.f32.xlu0 %v3386
      %v3403 = vpop.xlane.xlu0 %3402
      %3404 = vmax.xlane.f32.xlu0 %v3387
      %v3405 = vpop.xlane.xlu0 %3404
      %3406 = vmax.xlane.f32.xlu0 %v3388
      %v3407 = vpop.xlane.xlu0 %3406
      %3408 = vmax.xlane.f32.xlu0 %v3389
      %v3409 = vpop.xlane.xlu0 %3408
      %3410 = vmax.xlane.f32.xlu0 %v3390
      %v3411 = vpop.xlane.xlu0 %3410
      %3412 = vmax.xlane.f32.xlu0 %v3391
      %v3413 = vpop.xlane.xlu0 %3412
      %3414 = vmax.xlane.f32.xlu0 %v3392
      %v3415 = vpop.xlane.xlu0 %3414
      %3416 = vmax.xlane.f32.xlu0 %v3393
      %v3417 = vpop.xlane.xlu0 %3416
      %3418 = vmax.xlane.f32.xlu0 %v3394
      %v3419 = vpop.xlane.xlu0 %3418
      %3420 = vmax.xlane.f32.xlu0 %v3395
      %v3421 = vpop.xlane.xlu0 %3420
      %3422 = vmax.xlane.f32.xlu0 %v3396
      %v3423 = vpop.xlane.xlu0 %3422
      %3424 = vmax.xlane.f32.xlu0 %v3397
      %v3425 = vpop.xlane.xlu0 %3424
      %3426 = vmax.xlane.f32.xlu0 %v3398
      %v3427 = vpop.xlane.xlu0 %3426
      %3428 = vmax.xlane.f32.xlu0 %v3399
      %v3429 = vpop.xlane.xlu0 %3428
      %3430 = vmax.xlane.f32.xlu0 %v3400
      %v3431 = vpop.xlane.xlu0 %3430
      %3432 = vmax.xlane.f32.xlu0 %v3401
      %v3433 = vpop.xlane.xlu0 %3432
      %v3434 = vsub.f32 %v3386, %v3403
      %v3435 = vsub.f32 %v3387, %v3405
      %v3436 = vsub.f32 %v3388, %v3407
      %v3437 = vsub.f32 %v3389, %v3409
      %v3438 = vsub.f32 %v3390, %v3411
      %v3439 = vsub.f32 %v3391, %v3413
      %v3440 = vsub.f32 %v3392, %v3415
      %v3441 = vsub.f32 %v3393, %v3417
      %v3442 = vsub.f32 %v3394, %v3419
      %v3443 = vsub.f32 %v3395, %v3421
      %v3444 = vsub.f32 %v3396, %v3423
      %v3445 = vsub.f32 %v3397, %v3425
      %v3446 = vsub.f32 %v3398, %v3427
      %v3447 = vsub.f32 %v3399, %v3429
      %v3448 = vsub.f32 %v3400, %v3431
      %v3449 = vsub.f32 %v3401, %v3433
      %v3450 = vmul.f32 %v3434, 1.442695
      %v3451 = vpow.pop %v3450
      %v3452 = vmul.f32 %v3435, 1.442695
      %v3453 = vpow.pop %v3452
      %v3454 = vmul.f32 %v3436, 1.442695
      %v3455 = vpow.pop %v3454
      %v3456 = vmul.f32 %v3437, 1.442695
      %v3457 = vpow.pop %v3456
      %v3458 = vmul.f32 %v3438, 1.442695
      %v3459 = vpow.pop %v3458
      %v3460 = vmul.f32 %v3439, 1.442695
      %v3461 = vpow.pop %v3460
      %v3462 = vmul.f32 %v3440, 1.442695
      %v3463 = vpow.pop %v3462
      %v3464 = vmul.f32 %v3441, 1.442695
      %v3465 = vpow.pop %v3464
      %v3466 = vmul.f32 %v3442, 1.442695
      %v3467 = vpow.pop %v3466
      %v3468 = vmul.f32 %v3443, 1.442695
      %v3469 = vpow.pop %v3468
      %v3470 = vmul.f32 %v3444, 1.442695
      %v3471 = vpow.pop %v3470
      %v3472 = vmul.f32 %v3445, 1.442695
      %v3473 = vpow.pop %v3472
      %v3474 = vmul.f32 %v3446, 1.442695
      %v3475 = vpow.pop %v3474
      %v3476 = vmul.f32 %v3447, 1.442695
      %v3477 = vpow.pop %v3476
      %v3478 = vmul.f32 %v3448, 1.442695
      %v3479 = vpow.pop %v3478
      %v3480 = vmul.f32 %v3449, 1.442695
      %v3481 = vpow.pop %v3480
      %3482 = vadd.xlane.f32.xlu0 %v3451
      %v3483 = vpop.xlane.xlu0 %3482
      %3484 = vadd.xlane.f32.xlu0 %v3453
      %v3485 = vpop.xlane.xlu0 %3484
      %3486 = vadd.xlane.f32.xlu0 %v3455
      %v3487 = vpop.xlane.xlu0 %3486
      %3488 = vadd.xlane.f32.xlu0 %v3457
      %v3489 = vpop.xlane.xlu0 %3488
      %3490 = vadd.xlane.f32.xlu0 %v3459
      %v3491 = vpop.xlane.xlu0 %3490
      %3492 = vadd.xlane.f32.xlu0 %v3461
      %v3493 = vpop.xlane.xlu0 %3492
      %3494 = vadd.xlane.f32.xlu0 %v3463
      %v3495 = vpop.xlane.xlu0 %3494
      %3496 = vadd.xlane.f32.xlu0 %v3465
      %v3497 = vpop.xlane.xlu0 %3496
      %3498 = vadd.xlane.f32.xlu0 %v3467
      %v3499 = vpop.xlane.xlu0 %3498
      %3500 = vadd.xlane.f32.xlu0 %v3469
      %v3501 = vpop.xlane.xlu0 %3500
      %3502 = vadd.xlane.f32.xlu0 %v3471
      %v3503 = vpop.xlane.xlu0 %3502
      %3504 = vadd.xlane.f32.xlu0 %v3473
      %v3505 = vpop.xlane.xlu0 %3504
      %3506 = vadd.xlane.f32.xlu0 %v3475
      %v3507 = vpop.xlane.xlu0 %3506
      %3508 = vadd.xlane.f32.xlu0 %v3477
      %v3509 = vpop.xlane.xlu0 %3508
      %3510 = vadd.xlane.f32.xlu0 %v3479
      %v3511 = vpop.xlane.xlu0 %3510
      %3512 = vadd.xlane.f32.xlu0 %v3481
      %v3513 = vpop.xlane.xlu0 %3512
      %v3514 = vrcp.pop %v3483
      %v3515 = vrcp.pop %v3485
      %v3516 = vrcp.pop %v3487
      %v3517 = vrcp.pop %v3489
      %v3518 = vrcp.pop %v3491
      %v3519 = vrcp.pop %v3493
      %v3520 = vrcp.pop %v3495
      %v3521 = vrcp.pop %v3497
      %v3522 = vrcp.pop %v3499
      %v3523 = vrcp.pop %v3501
      %v3524 = vrcp.pop %v3503
      %v3525 = vrcp.pop %v3505
      %v3526 = vrcp.pop %v3507
      %v3527 = vrcp.pop %v3509
      %v3528 = vrcp.pop %v3511
      %v3529 = vrcp.pop %v3513
      %v3530 = vmul.f32 %v3451, %v3514
      %v3531 = vmul.f32 %v3453, %v3515
      %v3532 = vmul.f32 %v3455, %v3516
      %v3533 = vmul.f32 %v3457, %v3517
      %v3534 = vmul.f32 %v3459, %v3518
      %v3535 = vmul.f32 %v3461, %v3519
      %v3536 = vmul.f32 %v3463, %v3520
      %v3537 = vmul.f32 %v3465, %v3521
      %v3538 = vmul.f32 %v3467, %v3522
      %v3539 = vmul.f32 %v3469, %v3523
      %v3540 = vmul.f32 %v3471, %v3524
      %v3541 = vmul.f32 %v3473, %v3525
      %v3542 = vmul.f32 %v3475, %v3526
      %v3543 = vmul.f32 %v3477, %v3527
      %v3544 = vmul.f32 %v3479, %v3528
      %v3545 = vmul.f32 %v3481, %v3529
      %v3546 = vpack.c.bf16 %v3531, %v3530
      %v3547 = vpack.c.bf16 %v3533, %v3532
      %v3548 = vpack.c.bf16 %v3535, %v3534
      %v3549 = vpack.c.bf16 %v3537, %v3536
      %v3550 = vpack.c.bf16 %v3539, %v3538
      %v3551 = vpack.c.bf16 %v3541, %v3540
      %v3552 = vpack.c.bf16 %v3543, %v3542
      %v3553 = vpack.c.bf16 %v3545, %v3544
      %3554 = vmatprep.subr.bf16.mxu0 0
      %3555 = vmatpush1.bf16.msra.mxu0 %v928
      %3556 = vmatprep.subr.bf16.mxu0 0
      %3557 = vmatpush1.bf16.msra.mxu0 %v925
      %3558 = vmatprep.subr.bf16.mxu0 0
      %3559 = vmatpush1.bf16.msra.mxu0 %v922
      %3560 = vmatprep.subr.bf16.mxu0 0
      %3561 = vmatpush1.bf16.msra.mxu0 %v919
      %3562 = vmatprep.subr.bf16.mxu0 0
      %3563 = vmatpush1.bf16.msra.mxu0 %v916
      %3564 = vmatprep.subr.bf16.mxu0 0
      %3565 = vmatpush1.bf16.msra.mxu0 %v913
      %3566 = vmatprep.subr.bf16.mxu0 0
      %3567 = vmatpush1.bf16.msra.mxu0 %v910
      %3568 = vmatprep.subr.bf16.mxu0 0
      %3569 = vmatpush1.bf16.msra.mxu0 %v907
      %3570 = vmatprep.subr.bf16.mxu0 0
      %3571 = vmatpush2.bf16.msra.mxu0 0
      %3572 = vmatprep.subr.bf16.mxu0 0
      %3573 = vmatpush2.bf16.msra.mxu0 0
      %3574 = vmatprep.subr.bf16.mxu0 0
      %3575 = vmatpush2.bf16.msra.mxu0 0
      %3576 = vmatprep.subr.bf16.mxu0 0
      %3577 = vmatpush2.bf16.msra.mxu0 0
      %3578 = vmatprep.subr.bf16.mxu0 0
      %3579 = vmatpush2.bf16.msra.mxu0 0
      %3580 = vmatprep.subr.bf16.mxu0 0
      %3581 = vmatpush2.bf16.msra.mxu0 0
      %3582 = vmatprep.subr.bf16.mxu0 0
      %3583 = vmatpush2.bf16.msra.mxu0 0
      %3584 = vmatprep.subr.bf16.mxu0 0
      %3585 = vmatpush2.bf16.msra.mxu0 0
      %3586 = vmatprep.mubr.bf16.mxu0 0
      %3587 = vmatmul.mubr.bf16.gmra.mxu0 %v3546
      %v3588 = vpop.f32.mrf.mxu0
      %v3589 = vadd.f32 0.0, %v3588
      %v3590 = vpop.f32.mrf.mxu0
      %v3591 = vpop.f32.mrf.mxu0
      %v3592 = vadd.f32 0.0, %v3591
      %v3593 = vpop.f32.mrf.mxu0
      %3594 = vmatprep.mubr.bf16.mxu0 0
      %3595 = vmatmul.mubr.bf16.gmra.mxu0 %v3547
      %v3596 = vpop.f32.mrf.mxu0
      %v3597 = vadd.f32 0.0, %v3596
      %v3598 = vpop.f32.mrf.mxu0
      %v3599 = vpop.f32.mrf.mxu0
      %v3600 = vadd.f32 0.0, %v3599
      %v3601 = vpop.f32.mrf.mxu0
      %3602 = vmatprep.mubr.bf16.mxu0 0
      %3603 = vmatmul.mubr.bf16.gmra.mxu0 %v3548
      %v3604 = vpop.f32.mrf.mxu0
      %v3605 = vadd.f32 0.0, %v3604
      %v3606 = vpop.f32.mrf.mxu0
      %v3607 = vpop.f32.mrf.mxu0
      %v3608 = vadd.f32 0.0, %v3607
      %v3609 = vpop.f32.mrf.mxu0
      %3610 = vmatprep.mubr.bf16.mxu0 0
      %3611 = vmatmul.mubr.bf16.gmra.mxu0 %v3549
      %v3612 = vpop.f32.mrf.mxu0
      %v3613 = vadd.f32 0.0, %v3612
      %v3614 = vpop.f32.mrf.mxu0
      %v3615 = vpop.f32.mrf.mxu0
      %v3616 = vadd.f32 0.0, %v3615
      %v3617 = vpop.f32.mrf.mxu0
      %3618 = vmatprep.mubr.bf16.mxu0 0
      %3619 = vmatmul.mubr.bf16.gmra.mxu0 %v3550
      %v3620 = vpop.f32.mrf.mxu0
      %v3621 = vadd.f32 0.0, %v3620
      %v3622 = vpop.f32.mrf.mxu0
      %v3623 = vpop.f32.mrf.mxu0
      %v3624 = vadd.f32 0.0, %v3623
      %v3625 = vpop.f32.mrf.mxu0
      %3626 = vmatprep.mubr.bf16.mxu0 0
      %3627 = vmatmul.mubr.bf16.gmra.mxu0 %v3551
      %v3628 = vpop.f32.mrf.mxu0
      %v3629 = vadd.f32 0.0, %v3628
      %v3630 = vpop.f32.mrf.mxu0
      %v3631 = vpop.f32.mrf.mxu0
      %v3632 = vadd.f32 0.0, %v3631
      %v3633 = vpop.f32.mrf.mxu0
      %3634 = vmatprep.mubr.bf16.mxu0 0
      %3635 = vmatmul.mubr.bf16.gmra.mxu0 %v3552
      %v3636 = vpop.f32.mrf.mxu0
      %v3637 = vadd.f32 0.0, %v3636
      %v3638 = vpop.f32.mrf.mxu0
      %v3639 = vpop.f32.mrf.mxu0
      %v3640 = vadd.f32 0.0, %v3639
      %v3641 = vpop.f32.mrf.mxu0
      %3642 = vmatprep.mubr.bf16.mxu0 0
      %3643 = vmatmul.mubr.bf16.gmra.mxu0 %v3553
      %v3644 = vpop.f32.mrf.mxu0
      %v3645 = vadd.f32 0.0, %v3644
      %v3646 = vpop.f32.mrf.mxu0
      %v3647 = vpop.f32.mrf.mxu0
      %v3648 = vadd.f32 0.0, %v3647
      %v3649 = vpop.f32.mrf.mxu0
      %3650 = vdwg.mxu0
      %3659 = vrot.lane.b32.xlu0 %v905, 96
      %v3660 = vpop.permute.xlu0 %3659
      %3661 = vrot.lane.b32.xlu0 %v908, 96
      %v3662 = vpop.permute.xlu0 %3661
      %3663 = vrot.lane.b32.xlu0 %v911, 96
      %v3664 = vpop.permute.xlu0 %3663
      %3665 = vrot.lane.b32.xlu0 %v914, 96
      %v3666 = vpop.permute.xlu0 %3665
      %3667 = vrot.lane.b32.xlu0 %v917, 96
      %v3668 = vpop.permute.xlu0 %3667
      %3669 = vrot.lane.b32.xlu0 %v920, 96
      %v3670 = vpop.permute.xlu0 %3669
      %3671 = vrot.lane.b32.xlu0 %v923, 96
      %v3672 = vpop.permute.xlu0 %3671
      %3673 = vrot.lane.b32.xlu0 %v926, 96
      %v3674 = vpop.permute.xlu0 %3673
      %3683 = vrot.lane.b32.xlu0 %v906, 96
      %v3684 = vpop.permute.xlu0 %3683
      %3685 = vrot.lane.b32.xlu0 %v909, 96
      %v3686 = vpop.permute.xlu0 %3685
      %3687 = vrot.lane.b32.xlu0 %v912, 96
      %v3688 = vpop.permute.xlu0 %3687
      %3689 = vrot.lane.b32.xlu0 %v915, 96
      %v3690 = vpop.permute.xlu0 %3689
      %3691 = vrot.lane.b32.xlu0 %v918, 96
      %v3692 = vpop.permute.xlu0 %3691
      %3693 = vrot.lane.b32.xlu0 %v921, 96
      %v3694 = vpop.permute.xlu0 %3693
      %3695 = vrot.lane.b32.xlu0 %v924, 96
      %v3696 = vpop.permute.xlu0 %3695
      %3697 = vrot.lane.b32.xlu0 %v927, 96
      %v3698 = vpop.permute.xlu0 %3697
      %v3700 = vsel %vm478, %v3660, 0
      %v3703 = vsel %vm478, %v3662, 0
      %v3706 = vsel %vm478, %v3664, 0
      %v3709 = vsel %vm478, %v3666, 0
      %v3712 = vsel %vm478, %v3668, 0
      %v3715 = vsel %vm478, %v3670, 0
      %v3718 = vsel %vm478, %v3672, 0
      %v3721 = vsel %vm478, %v3674, 0
      %v3724 = vsel %vm478, %v3684, 0
      %v3727 = vsel %vm478, %v3686, 0
      %v3730 = vsel %vm478, %v3688, 0
      %v3733 = vsel %vm478, %v3690, 0
      %v3736 = vsel %vm478, %v3692, 0
      %v3739 = vsel %vm478, %v3694, 0
      %v3742 = vsel %vm478, %v3696, 0
      %v3745 = vsel %vm478, %v3698, 0
      %3747 = vmatprep.subr.bf16.mxu0 0
      %3748 = vmatpush1.bf16.xpose.msra.mxu0 %v3745
      %3749 = vmatprep.subr.bf16.mxu0 0
      %3750 = vmatpush1.bf16.xpose.msra.mxu0 %v3742
      %3751 = vmatprep.subr.bf16.mxu0 0
      %3752 = vmatpush1.bf16.xpose.msra.mxu0 %v3739
      %3753 = vmatprep.subr.bf16.mxu0 0
      %3754 = vmatpush1.bf16.xpose.msra.mxu0 %v3736
      %3755 = vmatprep.subr.bf16.mxu0 0
      %3756 = vmatpush1.bf16.xpose.msra.mxu0 %v3733
      %3757 = vmatprep.subr.bf16.mxu0 0
      %3758 = vmatpush1.bf16.xpose.msra.mxu0 %v3730
      %3759 = vmatprep.subr.bf16.mxu0 0
      %3760 = vmatpush1.bf16.xpose.msra.mxu0 %v3727
      %3761 = vmatprep.subr.bf16.mxu0 0
      %3762 = vmatpush1.bf16.xpose.msra.mxu0 %v3724
      %3763 = vmatprep.subr.bf16.mxu0 0
      %3764 = vmatpush2.bf16.xpose.msra.mxu0 0
      %3765 = vmatprep.subr.bf16.mxu0 0
      %3766 = vmatpush2.bf16.xpose.msra.mxu0 0
      %3767 = vmatprep.subr.bf16.mxu0 0
      %3768 = vmatpush2.bf16.xpose.msra.mxu0 0
      %3769 = vmatprep.subr.bf16.mxu0 0
      %3770 = vmatpush2.bf16.xpose.msra.mxu0 0
      %3771 = vmatprep.subr.bf16.mxu0 0
      %3772 = vmatpush2.bf16.xpose.msra.mxu0 0
      %3773 = vmatprep.subr.bf16.mxu0 0
      %3774 = vmatpush2.bf16.xpose.msra.mxu0 0
      %3775 = vmatprep.subr.bf16.mxu0 0
      %3776 = vmatpush2.bf16.xpose.msra.mxu0 0
      %3777 = vmatprep.subr.bf16.mxu0 0
      %3778 = vmatpush2.bf16.xpose.msra.mxu0 0
      %3779 = vmatprep.mubr.bf16.mxu0 0
      %3780 = vmatmul.mubr.bf16.gmra.mxu0 %v3700
      %v3781 = vpop.f32.mrf.mxu0
      %v3782 = vadd.f32 0.0, %v3781
      %v3783 = vpop.f32.mrf.mxu0
      %v3784 = vpop.f32.mrf.mxu0
      %v3785 = vadd.f32 0.0, %v3784
      %v3786 = vpop.f32.mrf.mxu0
      %3787 = vmatprep.mubr.bf16.mxu0 0
      %3788 = vmatmul.mubr.bf16.gmra.mxu0 %v3703
      %v3789 = vpop.f32.mrf.mxu0
      %v3790 = vadd.f32 0.0, %v3789
      %v3791 = vpop.f32.mrf.mxu0
      %v3792 = vpop.f32.mrf.mxu0
      %v3793 = vadd.f32 0.0, %v3792
      %v3794 = vpop.f32.mrf.mxu0
      %3795 = vmatprep.mubr.bf16.mxu0 0
      %3796 = vmatmul.mubr.bf16.gmra.mxu0 %v3706
      %v3797 = vpop.f32.mrf.mxu0
      %v3798 = vadd.f32 0.0, %v3797
      %v3799 = vpop.f32.mrf.mxu0
      %v3800 = vpop.f32.mrf.mxu0
      %v3801 = vadd.f32 0.0, %v3800
      %v3802 = vpop.f32.mrf.mxu0
      %3803 = vmatprep.mubr.bf16.mxu0 0
      %3804 = vmatmul.mubr.bf16.gmra.mxu0 %v3709
      %v3805 = vpop.f32.mrf.mxu0
      %v3806 = vadd.f32 0.0, %v3805
      %v3807 = vpop.f32.mrf.mxu0
      %v3808 = vpop.f32.mrf.mxu0
      %v3809 = vadd.f32 0.0, %v3808
      %v3810 = vpop.f32.mrf.mxu0
      %3811 = vmatprep.mubr.bf16.mxu0 0
      %3812 = vmatmul.mubr.bf16.gmra.mxu0 %v3712
      %v3813 = vpop.f32.mrf.mxu0
      %v3814 = vadd.f32 0.0, %v3813
      %v3815 = vpop.f32.mrf.mxu0
      %v3816 = vpop.f32.mrf.mxu0
      %v3817 = vadd.f32 0.0, %v3816
      %v3818 = vpop.f32.mrf.mxu0
      %3819 = vmatprep.mubr.bf16.mxu0 0
      %3820 = vmatmul.mubr.bf16.gmra.mxu0 %v3715
      %v3821 = vpop.f32.mrf.mxu0
      %v3822 = vadd.f32 0.0, %v3821
      %v3823 = vpop.f32.mrf.mxu0
      %v3824 = vpop.f32.mrf.mxu0
      %v3825 = vadd.f32 0.0, %v3824
      %v3826 = vpop.f32.mrf.mxu0
      %3827 = vmatprep.mubr.bf16.mxu0 0
      %3828 = vmatmul.mubr.bf16.gmra.mxu0 %v3718
      %v3829 = vpop.f32.mrf.mxu0
      %v3830 = vadd.f32 0.0, %v3829
      %v3831 = vpop.f32.mrf.mxu0
      %v3832 = vpop.f32.mrf.mxu0
      %v3833 = vadd.f32 0.0, %v3832
      %v3834 = vpop.f32.mrf.mxu0
      %3835 = vmatprep.mubr.bf16.mxu0 0
      %3836 = vmatmul.mubr.bf16.gmra.mxu0 %v3721
      %v3837 = vpop.f32.mrf.mxu0
      %v3838 = vadd.f32 0.0, %v3837
      %v3839 = vpop.f32.mrf.mxu0
      %v3840 = vpop.f32.mrf.mxu0
      %v3841 = vadd.f32 0.0, %v3840
      %v3842 = vpop.f32.mrf.mxu0
      %3843 = vdwg.mxu0
      %v3844 = vsel %vm3225, %v3782, -1e+30
      %v3845 = vsel %vm3226, %v3785, -1e+30
      %v3846 = vsel %vm3227, %v3790, -1e+30
      %v3847 = vsel %vm3228, %v3793, -1e+30
      %v3848 = vsel %vm3229, %v3798, -1e+30
      %v3849 = vsel %vm3230, %v3801, -1e+30
      %v3850 = vsel %vm3231, %v3806, -1e+30
      %v3851 = vsel %vm3232, %v3809, -1e+30
      %v3852 = vsel %vm3233, %v3814, -1e+30
      %v3853 = vsel %vm3234, %v3817, -1e+30
      %v3854 = vsel %vm3235, %v3822, -1e+30
      %v3855 = vsel %vm3236, %v3825, -1e+30
      %v3856 = vsel %vm3237, %v3830, -1e+30
      %v3857 = vsel %vm3238, %v3833, -1e+30
      %v3858 = vsel %vm3239, %v3838, -1e+30
      %v3859 = vsel %vm3240, %v3841, -1e+30
      %3860 = vmax.xlane.f32.xlu0 %v3844
      %v3861 = vpop.xlane.xlu0 %3860
      %3862 = vmax.xlane.f32.xlu0 %v3845
      %v3863 = vpop.xlane.xlu0 %3862
      %3864 = vmax.xlane.f32.xlu0 %v3846
      %v3865 = vpop.xlane.xlu0 %3864
      %3866 = vmax.xlane.f32.xlu0 %v3847
      %v3867 = vpop.xlane.xlu0 %3866
      %3868 = vmax.xlane.f32.xlu0 %v3848
      %v3869 = vpop.xlane.xlu0 %3868
      %3870 = vmax.xlane.f32.xlu0 %v3849
      %v3871 = vpop.xlane.xlu0 %3870
      %3872 = vmax.xlane.f32.xlu0 %v3850
      %v3873 = vpop.xlane.xlu0 %3872
      %3874 = vmax.xlane.f32.xlu0 %v3851
      %v3875 = vpop.xlane.xlu0 %3874
      %3876 = vmax.xlane.f32.xlu0 %v3852
      %v3877 = vpop.xlane.xlu0 %3876
      %3878 = vmax.xlane.f32.xlu0 %v3853
      %v3879 = vpop.xlane.xlu0 %3878
      %3880 = vmax.xlane.f32.xlu0 %v3854
      %v3881 = vpop.xlane.xlu0 %3880
      %3882 = vmax.xlane.f32.xlu0 %v3855
      %v3883 = vpop.xlane.xlu0 %3882
      %3884 = vmax.xlane.f32.xlu0 %v3856
      %v3885 = vpop.xlane.xlu0 %3884
      %3886 = vmax.xlane.f32.xlu0 %v3857
      %v3887 = vpop.xlane.xlu0 %3886
      %3888 = vmax.xlane.f32.xlu0 %v3858
      %v3889 = vpop.xlane.xlu0 %3888
      %3890 = vmax.xlane.f32.xlu0 %v3859
      %v3891 = vpop.xlane.xlu0 %3890
      %v3892 = vsub.f32 %v3844, %v3861
      %v3893 = vsub.f32 %v3845, %v3863
      %v3894 = vsub.f32 %v3846, %v3865
      %v3895 = vsub.f32 %v3847, %v3867
      %v3896 = vsub.f32 %v3848, %v3869
      %v3897 = vsub.f32 %v3849, %v3871
      %v3898 = vsub.f32 %v3850, %v3873
      %v3899 = vsub.f32 %v3851, %v3875
      %v3900 = vsub.f32 %v3852, %v3877
      %v3901 = vsub.f32 %v3853, %v3879
      %v3902 = vsub.f32 %v3854, %v3881
      %v3903 = vsub.f32 %v3855, %v3883
      %v3904 = vsub.f32 %v3856, %v3885
      %v3905 = vsub.f32 %v3857, %v3887
      %v3906 = vsub.f32 %v3858, %v3889
      %v3907 = vsub.f32 %v3859, %v3891
      %v3908 = vmul.f32 %v3892, 1.442695
      %v3909 = vpow.pop %v3908
      %v3910 = vmul.f32 %v3893, 1.442695
      %v3911 = vpow.pop %v3910
      %v3912 = vmul.f32 %v3894, 1.442695
      %v3913 = vpow.pop %v3912
      %v3914 = vmul.f32 %v3895, 1.442695
      %v3915 = vpow.pop %v3914
      %v3916 = vmul.f32 %v3896, 1.442695
      %v3917 = vpow.pop %v3916
      %v3918 = vmul.f32 %v3897, 1.442695
      %v3919 = vpow.pop %v3918
      %v3920 = vmul.f32 %v3898, 1.442695
      %v3921 = vpow.pop %v3920
      %v3922 = vmul.f32 %v3899, 1.442695
      %v3923 = vpow.pop %v3922
      %v3924 = vmul.f32 %v3900, 1.442695
      %v3925 = vpow.pop %v3924
      %v3926 = vmul.f32 %v3901, 1.442695
      %v3927 = vpow.pop %v3926
      %v3928 = vmul.f32 %v3902, 1.442695
      %v3929 = vpow.pop %v3928
      %v3930 = vmul.f32 %v3903, 1.442695
      %v3931 = vpow.pop %v3930
      %v3932 = vmul.f32 %v3904, 1.442695
      %v3933 = vpow.pop %v3932
      %v3934 = vmul.f32 %v3905, 1.442695
      %v3935 = vpow.pop %v3934
      %v3936 = vmul.f32 %v3906, 1.442695
      %v3937 = vpow.pop %v3936
      %v3938 = vmul.f32 %v3907, 1.442695
      %v3939 = vpow.pop %v3938
      %3940 = vadd.xlane.f32.xlu0 %v3909
      %v3941 = vpop.xlane.xlu0 %3940
      %3942 = vadd.xlane.f32.xlu0 %v3911
      %v3943 = vpop.xlane.xlu0 %3942
      %3944 = vadd.xlane.f32.xlu0 %v3913
      %v3945 = vpop.xlane.xlu0 %3944
      %3946 = vadd.xlane.f32.xlu0 %v3915
      %v3947 = vpop.xlane.xlu0 %3946
      %3948 = vadd.xlane.f32.xlu0 %v3917
      %v3949 = vpop.xlane.xlu0 %3948
      %3950 = vadd.xlane.f32.xlu0 %v3919
      %v3951 = vpop.xlane.xlu0 %3950
      %3952 = vadd.xlane.f32.xlu0 %v3921
      %v3953 = vpop.xlane.xlu0 %3952
      %3954 = vadd.xlane.f32.xlu0 %v3923
      %v3955 = vpop.xlane.xlu0 %3954
      %3956 = vadd.xlane.f32.xlu0 %v3925
      %v3957 = vpop.xlane.xlu0 %3956
      %3958 = vadd.xlane.f32.xlu0 %v3927
      %v3959 = vpop.xlane.xlu0 %3958
      %3960 = vadd.xlane.f32.xlu0 %v3929
      %v3961 = vpop.xlane.xlu0 %3960
      %3962 = vadd.xlane.f32.xlu0 %v3931
      %v3963 = vpop.xlane.xlu0 %3962
      %3964 = vadd.xlane.f32.xlu0 %v3933
      %v3965 = vpop.xlane.xlu0 %3964
      %3966 = vadd.xlane.f32.xlu0 %v3935
      %v3967 = vpop.xlane.xlu0 %3966
      %3968 = vadd.xlane.f32.xlu0 %v3937
      %v3969 = vpop.xlane.xlu0 %3968
      %3970 = vadd.xlane.f32.xlu0 %v3939
      %v3971 = vpop.xlane.xlu0 %3970
      %v3972 = vrcp.pop %v3941
      %v3973 = vrcp.pop %v3943
      %v3974 = vrcp.pop %v3945
      %v3975 = vrcp.pop %v3947
      %v3976 = vrcp.pop %v3949
      %v3977 = vrcp.pop %v3951
      %v3978 = vrcp.pop %v3953
      %v3979 = vrcp.pop %v3955
      %v3980 = vrcp.pop %v3957
      %v3981 = vrcp.pop %v3959
      %v3982 = vrcp.pop %v3961
      %v3983 = vrcp.pop %v3963
      %v3984 = vrcp.pop %v3965
      %v3985 = vrcp.pop %v3967
      %v3986 = vrcp.pop %v3969
      %v3987 = vrcp.pop %v3971
      %v3988 = vmul.f32 %v3909, %v3972
      %v3989 = vmul.f32 %v3911, %v3973
      %v3990 = vmul.f32 %v3913, %v3974
      %v3991 = vmul.f32 %v3915, %v3975
      %v3992 = vmul.f32 %v3917, %v3976
      %v3993 = vmul.f32 %v3919, %v3977
      %v3994 = vmul.f32 %v3921, %v3978
      %v3995 = vmul.f32 %v3923, %v3979
      %v3996 = vmul.f32 %v3925, %v3980
      %v3997 = vmul.f32 %v3927, %v3981
      %v3998 = vmul.f32 %v3929, %v3982
      %v3999 = vmul.f32 %v3931, %v3983
      %v4000 = vmul.f32 %v3933, %v3984
      %v4001 = vmul.f32 %v3935, %v3985
      %v4002 = vmul.f32 %v3937, %v3986
      %v4003 = vmul.f32 %v3939, %v3987
      %v4004 = vpack.c.bf16 %v3989, %v3988
      %v4005 = vpack.c.bf16 %v3991, %v3990
      %v4006 = vpack.c.bf16 %v3993, %v3992
      %v4007 = vpack.c.bf16 %v3995, %v3994
      %v4008 = vpack.c.bf16 %v3997, %v3996
      %v4009 = vpack.c.bf16 %v3999, %v3998
      %v4010 = vpack.c.bf16 %v4001, %v4000
      %v4011 = vpack.c.bf16 %v4003, %v4002
      %4020 = vrot.lane.b32.xlu0 %v907, 96
      %v4021 = vpop.permute.xlu0 %4020
      %4022 = vrot.lane.b32.xlu0 %v910, 96
      %v4023 = vpop.permute.xlu0 %4022
      %4024 = vrot.lane.b32.xlu0 %v913, 96
      %v4025 = vpop.permute.xlu0 %4024
      %4026 = vrot.lane.b32.xlu0 %v916, 96
      %v4027 = vpop.permute.xlu0 %4026
      %4028 = vrot.lane.b32.xlu0 %v919, 96
      %v4029 = vpop.permute.xlu0 %4028
      %4030 = vrot.lane.b32.xlu0 %v922, 96
      %v4031 = vpop.permute.xlu0 %4030
      %4032 = vrot.lane.b32.xlu0 %v925, 96
      %v4033 = vpop.permute.xlu0 %4032
      %4034 = vrot.lane.b32.xlu0 %v928, 96
      %v4035 = vpop.permute.xlu0 %4034
      %4044 = vmatprep.subr.bf16.mxu0 0
      %4045 = vmatpush1.bf16.msra.mxu0 %v4035
      %4046 = vmatprep.subr.bf16.mxu0 0
      %4047 = vmatpush1.bf16.msra.mxu0 %v4033
      %4048 = vmatprep.subr.bf16.mxu0 0
      %4049 = vmatpush1.bf16.msra.mxu0 %v4031
      %4050 = vmatprep.subr.bf16.mxu0 0
      %4051 = vmatpush1.bf16.msra.mxu0 %v4029
      %4052 = vmatprep.subr.bf16.mxu0 0
      %4053 = vmatpush1.bf16.msra.mxu0 %v4027
      %4054 = vmatprep.subr.bf16.mxu0 0
      %4055 = vmatpush1.bf16.msra.mxu0 %v4025
      %4056 = vmatprep.subr.bf16.mxu0 0
      %4057 = vmatpush1.bf16.msra.mxu0 %v4023
      %4058 = vmatprep.subr.bf16.mxu0 0
      %4059 = vmatpush1.bf16.msra.mxu0 %v4021
      %4060 = vmatprep.subr.bf16.mxu0 0
      %4061 = vmatpush2.bf16.msra.mxu0 0
      %4062 = vmatprep.subr.bf16.mxu0 0
      %4063 = vmatpush2.bf16.msra.mxu0 0
      %4064 = vmatprep.subr.bf16.mxu0 0
      %4065 = vmatpush2.bf16.msra.mxu0 0
      %4066 = vmatprep.subr.bf16.mxu0 0
      %4067 = vmatpush2.bf16.msra.mxu0 0
      %4068 = vmatprep.subr.bf16.mxu0 0
      %4069 = vmatpush2.bf16.msra.mxu0 0
      %4070 = vmatprep.subr.bf16.mxu0 0
      %4071 = vmatpush2.bf16.msra.mxu0 0
      %4072 = vmatprep.subr.bf16.mxu0 0
      %4073 = vmatpush2.bf16.msra.mxu0 0
      %4074 = vmatprep.subr.bf16.mxu0 0
      %4075 = vmatpush2.bf16.msra.mxu0 0
      %4076 = vmatprep.mubr.bf16.mxu0 0
      %4077 = vmatmul.mubr.bf16.gmra.mxu0 %v4004
      %v4078 = vpop.f32.mrf.mxu0
      %v4079 = vadd.f32 0.0, %v4078
      %v4080 = vpop.f32.mrf.mxu0
      %v4081 = vpop.f32.mrf.mxu0
      %v4082 = vadd.f32 0.0, %v4081
      %v4083 = vpop.f32.mrf.mxu0
      %4084 = vmatprep.mubr.bf16.mxu0 0
      %4085 = vmatmul.mubr.bf16.gmra.mxu0 %v4005
      %v4086 = vpop.f32.mrf.mxu0
      %v4087 = vadd.f32 0.0, %v4086
      %v4088 = vpop.f32.mrf.mxu0
      %v4089 = vpop.f32.mrf.mxu0
      %v4090 = vadd.f32 0.0, %v4089
      %v4091 = vpop.f32.mrf.mxu0
      %4092 = vmatprep.mubr.bf16.mxu0 0
      %4093 = vmatmul.mubr.bf16.gmra.mxu0 %v4006
      %v4094 = vpop.f32.mrf.mxu0
      %v4095 = vadd.f32 0.0, %v4094
      %v4096 = vpop.f32.mrf.mxu0
      %v4097 = vpop.f32.mrf.mxu0
      %v4098 = vadd.f32 0.0, %v4097
      %v4099 = vpop.f32.mrf.mxu0
      %4100 = vmatprep.mubr.bf16.mxu0 0
      %4101 = vmatmul.mubr.bf16.gmra.mxu0 %v4007
      %v4102 = vpop.f32.mrf.mxu0
      %v4103 = vadd.f32 0.0, %v4102
      %v4104 = vpop.f32.mrf.mxu0
      %v4105 = vpop.f32.mrf.mxu0
      %v4106 = vadd.f32 0.0, %v4105
      %v4107 = vpop.f32.mrf.mxu0
      %4108 = vmatprep.mubr.bf16.mxu0 0
      %4109 = vmatmul.mubr.bf16.gmra.mxu0 %v4008
      %v4110 = vpop.f32.mrf.mxu0
      %v4111 = vadd.f32 0.0, %v4110
      %v4112 = vpop.f32.mrf.mxu0
      %v4113 = vpop.f32.mrf.mxu0
      %v4114 = vadd.f32 0.0, %v4113
      %v4115 = vpop.f32.mrf.mxu0
      %4116 = vmatprep.mubr.bf16.mxu0 0
      %4117 = vmatmul.mubr.bf16.gmra.mxu0 %v4009
      %v4118 = vpop.f32.mrf.mxu0
      %v4119 = vadd.f32 0.0, %v4118
      %v4120 = vpop.f32.mrf.mxu0
      %v4121 = vpop.f32.mrf.mxu0
      %v4122 = vadd.f32 0.0, %v4121
      %v4123 = vpop.f32.mrf.mxu0
      %4124 = vmatprep.mubr.bf16.mxu0 0
      %4125 = vmatmul.mubr.bf16.gmra.mxu0 %v4010
      %v4126 = vpop.f32.mrf.mxu0
      %v4127 = vadd.f32 0.0, %v4126
      %v4128 = vpop.f32.mrf.mxu0
      %v4129 = vpop.f32.mrf.mxu0
      %v4130 = vadd.f32 0.0, %v4129
      %v4131 = vpop.f32.mrf.mxu0
      %4132 = vmatprep.mubr.bf16.mxu0 0
      %4133 = vmatmul.mubr.bf16.gmra.mxu0 %v4011
      %v4134 = vpop.f32.mrf.mxu0
      %v4135 = vadd.f32 0.0, %v4134
      %v4136 = vpop.f32.mrf.mxu0
      %v4137 = vpop.f32.mrf.mxu0
      %v4138 = vadd.f32 0.0, %v4137
      %v4139 = vpop.f32.mrf.mxu0
      %4140 = vdwg.mxu0
      %4141 = vrot.lane.b32.xlu0 %v905, 64
      %v4142 = vpop.permute.xlu0 %4141
      %4143 = vrot.lane.b32.xlu0 %v908, 64
      %v4144 = vpop.permute.xlu0 %4143
      %4145 = vrot.lane.b32.xlu0 %v911, 64
      %v4146 = vpop.permute.xlu0 %4145
      %4147 = vrot.lane.b32.xlu0 %v914, 64
      %v4148 = vpop.permute.xlu0 %4147
      %4149 = vrot.lane.b32.xlu0 %v917, 64
      %v4150 = vpop.permute.xlu0 %4149
      %4151 = vrot.lane.b32.xlu0 %v920, 64
      %v4152 = vpop.permute.xlu0 %4151
      %4153 = vrot.lane.b32.xlu0 %v923, 64
      %v4154 = vpop.permute.xlu0 %4153
      %4155 = vrot.lane.b32.xlu0 %v926, 64
      %v4156 = vpop.permute.xlu0 %4155
      %4157 = vrot.lane.b32.xlu0 %v906, 64
      %v4158 = vpop.permute.xlu0 %4157
      %4159 = vrot.lane.b32.xlu0 %v909, 64
      %v4160 = vpop.permute.xlu0 %4159
      %4161 = vrot.lane.b32.xlu0 %v912, 64
      %v4162 = vpop.permute.xlu0 %4161
      %4163 = vrot.lane.b32.xlu0 %v915, 64
      %v4164 = vpop.permute.xlu0 %4163
      %4165 = vrot.lane.b32.xlu0 %v918, 64
      %v4166 = vpop.permute.xlu0 %4165
      %4167 = vrot.lane.b32.xlu0 %v921, 64
      %v4168 = vpop.permute.xlu0 %4167
      %4169 = vrot.lane.b32.xlu0 %v924, 64
      %v4170 = vpop.permute.xlu0 %4169
      %4171 = vrot.lane.b32.xlu0 %v927, 64
      %v4172 = vpop.permute.xlu0 %4171
      %v4174 = vsel %vm478, %v4142, 0
      %v4177 = vsel %vm478, %v4144, 0
      %v4180 = vsel %vm478, %v4146, 0
      %v4183 = vsel %vm478, %v4148, 0
      %v4186 = vsel %vm478, %v4150, 0
      %v4189 = vsel %vm478, %v4152, 0
      %v4192 = vsel %vm478, %v4154, 0
      %v4195 = vsel %vm478, %v4156, 0
      %v4198 = vsel %vm478, %v4158, 0
      %v4201 = vsel %vm478, %v4160, 0
      %v4204 = vsel %vm478, %v4162, 0
      %v4207 = vsel %vm478, %v4164, 0
      %v4210 = vsel %vm478, %v4166, 0
      %v4213 = vsel %vm478, %v4168, 0
      %v4216 = vsel %vm478, %v4170, 0
      %v4219 = vsel %vm478, %v4172, 0
      %4221 = vmatprep.subr.bf16.mxu0 0
      %4222 = vmatpush1.bf16.xpose.msra.mxu0 %v4219
      %4223 = vmatprep.subr.bf16.mxu0 0
      %4224 = vmatpush1.bf16.xpose.msra.mxu0 %v4216
      %4225 = vmatprep.subr.bf16.mxu0 0
      %4226 = vmatpush1.bf16.xpose.msra.mxu0 %v4213
      %4227 = vmatprep.subr.bf16.mxu0 0
      %4228 = vmatpush1.bf16.xpose.msra.mxu0 %v4210
      %4229 = vmatprep.subr.bf16.mxu0 0
      %4230 = vmatpush1.bf16.xpose.msra.mxu0 %v4207
      %4231 = vmatprep.subr.bf16.mxu0 0
      %4232 = vmatpush1.bf16.xpose.msra.mxu0 %v4204
      %4233 = vmatprep.subr.bf16.mxu0 0
      %4234 = vmatpush1.bf16.xpose.msra.mxu0 %v4201
      %4235 = vmatprep.subr.bf16.mxu0 0
      %4236 = vmatpush1.bf16.xpose.msra.mxu0 %v4198
      %4237 = vmatprep.subr.bf16.mxu0 0
      %4238 = vmatpush2.bf16.xpose.msra.mxu0 0
      %4239 = vmatprep.subr.bf16.mxu0 0
      %4240 = vmatpush2.bf16.xpose.msra.mxu0 0
      %4241 = vmatprep.subr.bf16.mxu0 0
      %4242 = vmatpush2.bf16.xpose.msra.mxu0 0
      %4243 = vmatprep.subr.bf16.mxu0 0
      %4244 = vmatpush2.bf16.xpose.msra.mxu0 0
      %4245 = vmatprep.subr.bf16.mxu0 0
      %4246 = vmatpush2.bf16.xpose.msra.mxu0 0
      %4247 = vmatprep.subr.bf16.mxu0 0
      %4248 = vmatpush2.bf16.xpose.msra.mxu0 0
      %4249 = vmatprep.subr.bf16.mxu0 0
      %4250 = vmatpush2.bf16.xpose.msra.mxu0 0
      %4251 = vmatprep.subr.bf16.mxu0 0
      %4252 = vmatpush2.bf16.xpose.msra.mxu0 0
      %4253 = vmatprep.mubr.bf16.mxu0 0
      %4254 = vmatmul.mubr.bf16.gmra.mxu0 %v4174
      %v4255 = vpop.f32.mrf.mxu0
      %v4256 = vadd.f32 0.0, %v4255
      %v4257 = vpop.f32.mrf.mxu0
      %v4258 = vpop.f32.mrf.mxu0
      %v4259 = vadd.f32 0.0, %v4258
      %v4260 = vpop.f32.mrf.mxu0
      %4261 = vmatprep.mubr.bf16.mxu0 0
      %4262 = vmatmul.mubr.bf16.gmra.mxu0 %v4177
      %v4263 = vpop.f32.mrf.mxu0
      %v4264 = vadd.f32 0.0, %v4263
      %v4265 = vpop.f32.mrf.mxu0
      %v4266 = vpop.f32.mrf.mxu0
      %v4267 = vadd.f32 0.0, %v4266
      %v4268 = vpop.f32.mrf.mxu0
      %4269 = vmatprep.mubr.bf16.mxu0 0
      %4270 = vmatmul.mubr.bf16.gmra.mxu0 %v4180
      %v4271 = vpop.f32.mrf.mxu0
      %v4272 = vadd.f32 0.0, %v4271
      %v4273 = vpop.f32.mrf.mxu0
      %v4274 = vpop.f32.mrf.mxu0
      %v4275 = vadd.f32 0.0, %v4274
      %v4276 = vpop.f32.mrf.mxu0
      %4277 = vmatprep.mubr.bf16.mxu0 0
      %4278 = vmatmul.mubr.bf16.gmra.mxu0 %v4183
      %v4279 = vpop.f32.mrf.mxu0
      %v4280 = vadd.f32 0.0, %v4279
      %v4281 = vpop.f32.mrf.mxu0
      %v4282 = vpop.f32.mrf.mxu0
      %v4283 = vadd.f32 0.0, %v4282
      %v4284 = vpop.f32.mrf.mxu0
      %4285 = vmatprep.mubr.bf16.mxu0 0
      %4286 = vmatmul.mubr.bf16.gmra.mxu0 %v4186
      %v4287 = vpop.f32.mrf.mxu0
      %v4288 = vadd.f32 0.0, %v4287
      %v4289 = vpop.f32.mrf.mxu0
      %v4290 = vpop.f32.mrf.mxu0
      %v4291 = vadd.f32 0.0, %v4290
      %v4292 = vpop.f32.mrf.mxu0
      %4293 = vmatprep.mubr.bf16.mxu0 0
      %4294 = vmatmul.mubr.bf16.gmra.mxu0 %v4189
      %v4295 = vpop.f32.mrf.mxu0
      %v4296 = vadd.f32 0.0, %v4295
      %v4297 = vpop.f32.mrf.mxu0
      %v4298 = vpop.f32.mrf.mxu0
      %v4299 = vadd.f32 0.0, %v4298
      %v4300 = vpop.f32.mrf.mxu0
      %4301 = vmatprep.mubr.bf16.mxu0 0
      %4302 = vmatmul.mubr.bf16.gmra.mxu0 %v4192
      %v4303 = vpop.f32.mrf.mxu0
      %v4304 = vadd.f32 0.0, %v4303
      %v4305 = vpop.f32.mrf.mxu0
      %v4306 = vpop.f32.mrf.mxu0
      %v4307 = vadd.f32 0.0, %v4306
      %v4308 = vpop.f32.mrf.mxu0
      %4309 = vmatprep.mubr.bf16.mxu0 0
      %4310 = vmatmul.mubr.bf16.gmra.mxu0 %v4195
      %v4311 = vpop.f32.mrf.mxu0
      %v4312 = vadd.f32 0.0, %v4311
      %v4313 = vpop.f32.mrf.mxu0
      %v4314 = vpop.f32.mrf.mxu0
      %v4315 = vadd.f32 0.0, %v4314
      %v4316 = vpop.f32.mrf.mxu0
      %4317 = vdwg.mxu0
      %v4318 = vsel %vm3225, %v4256, -1e+30
      %v4319 = vsel %vm3226, %v4259, -1e+30
      %v4320 = vsel %vm3227, %v4264, -1e+30
      %v4321 = vsel %vm3228, %v4267, -1e+30
      %v4322 = vsel %vm3229, %v4272, -1e+30
      %v4323 = vsel %vm3230, %v4275, -1e+30
      %v4324 = vsel %vm3231, %v4280, -1e+30
      %v4325 = vsel %vm3232, %v4283, -1e+30
      %v4326 = vsel %vm3233, %v4288, -1e+30
      %v4327 = vsel %vm3234, %v4291, -1e+30
      %v4328 = vsel %vm3235, %v4296, -1e+30
      %v4329 = vsel %vm3236, %v4299, -1e+30
      %v4330 = vsel %vm3237, %v4304, -1e+30
      %v4331 = vsel %vm3238, %v4307, -1e+30
      %v4332 = vsel %vm3239, %v4312, -1e+30
      %v4333 = vsel %vm3240, %v4315, -1e+30
      %4334 = vmax.xlane.f32.xlu0 %v4318
      %v4335 = vpop.xlane.xlu0 %4334
      %4336 = vmax.xlane.f32.xlu0 %v4319
      %v4337 = vpop.xlane.xlu0 %4336
      %4338 = vmax.xlane.f32.xlu0 %v4320
      %v4339 = vpop.xlane.xlu0 %4338
      %4340 = vmax.xlane.f32.xlu0 %v4321
      %v4341 = vpop.xlane.xlu0 %4340
      %4342 = vmax.xlane.f32.xlu0 %v4322
      %v4343 = vpop.xlane.xlu0 %4342
      %4344 = vmax.xlane.f32.xlu0 %v4323
      %v4345 = vpop.xlane.xlu0 %4344
      %4346 = vmax.xlane.f32.xlu0 %v4324
      %v4347 = vpop.xlane.xlu0 %4346
      %4348 = vmax.xlane.f32.xlu0 %v4325
      %v4349 = vpop.xlane.xlu0 %4348
      %4350 = vmax.xlane.f32.xlu0 %v4326
      %v4351 = vpop.xlane.xlu0 %4350
      %4352 = vmax.xlane.f32.xlu0 %v4327
      %v4353 = vpop.xlane.xlu0 %4352
      %4354 = vmax.xlane.f32.xlu0 %v4328
      %v4355 = vpop.xlane.xlu0 %4354
      %4356 = vmax.xlane.f32.xlu0 %v4329
      %v4357 = vpop.xlane.xlu0 %4356
      %4358 = vmax.xlane.f32.xlu0 %v4330
      %v4359 = vpop.xlane.xlu0 %4358
      %4360 = vmax.xlane.f32.xlu0 %v4331
      %v4361 = vpop.xlane.xlu0 %4360
      %4362 = vmax.xlane.f32.xlu0 %v4332
      %v4363 = vpop.xlane.xlu0 %4362
      %4364 = vmax.xlane.f32.xlu0 %v4333
      %v4365 = vpop.xlane.xlu0 %4364
      %v4366 = vsub.f32 %v4318, %v4335
      %v4367 = vsub.f32 %v4319, %v4337
      %v4368 = vsub.f32 %v4320, %v4339
      %v4369 = vsub.f32 %v4321, %v4341
      %v4370 = vsub.f32 %v4322, %v4343
      %v4371 = vsub.f32 %v4323, %v4345
      %v4372 = vsub.f32 %v4324, %v4347
      %v4373 = vsub.f32 %v4325, %v4349
      %v4374 = vsub.f32 %v4326, %v4351
      %v4375 = vsub.f32 %v4327, %v4353
      %v4376 = vsub.f32 %v4328, %v4355
      %v4377 = vsub.f32 %v4329, %v4357
      %v4378 = vsub.f32 %v4330, %v4359
      %v4379 = vsub.f32 %v4331, %v4361
      %v4380 = vsub.f32 %v4332, %v4363
      %v4381 = vsub.f32 %v4333, %v4365
      %v4382 = vmul.f32 %v4366, 1.442695
      %v4383 = vpow.pop %v4382
      %v4384 = vmul.f32 %v4367, 1.442695
      %v4385 = vpow.pop %v4384
      %v4386 = vmul.f32 %v4368, 1.442695
      %v4387 = vpow.pop %v4386
      %v4388 = vmul.f32 %v4369, 1.442695
      %v4389 = vpow.pop %v4388
      %v4390 = vmul.f32 %v4370, 1.442695
      %v4391 = vpow.pop %v4390
      %v4392 = vmul.f32 %v4371, 1.442695
      %v4393 = vpow.pop %v4392
      %v4394 = vmul.f32 %v4372, 1.442695
      %v4395 = vpow.pop %v4394
      %v4396 = vmul.f32 %v4373, 1.442695
      %v4397 = vpow.pop %v4396
      %v4398 = vmul.f32 %v4374, 1.442695
      %v4399 = vpow.pop %v4398
      %v4400 = vmul.f32 %v4375, 1.442695
      %v4401 = vpow.pop %v4400
      %v4402 = vmul.f32 %v4376, 1.442695
      %v4403 = vpow.pop %v4402
      %v4404 = vmul.f32 %v4377, 1.442695
      %v4405 = vpow.pop %v4404
      %v4406 = vmul.f32 %v4378, 1.442695
      %v4407 = vpow.pop %v4406
      %v4408 = vmul.f32 %v4379, 1.442695
      %v4409 = vpow.pop %v4408
      %v4410 = vmul.f32 %v4380, 1.442695
      %v4411 = vpow.pop %v4410
      %v4412 = vmul.f32 %v4381, 1.442695
      %v4413 = vpow.pop %v4412
      %4414 = vadd.xlane.f32.xlu0 %v4383
      %v4415 = vpop.xlane.xlu0 %4414
      %4416 = vadd.xlane.f32.xlu0 %v4385
      %v4417 = vpop.xlane.xlu0 %4416
      %4418 = vadd.xlane.f32.xlu0 %v4387
      %v4419 = vpop.xlane.xlu0 %4418
      %4420 = vadd.xlane.f32.xlu0 %v4389
      %v4421 = vpop.xlane.xlu0 %4420
      %4422 = vadd.xlane.f32.xlu0 %v4391
      %v4423 = vpop.xlane.xlu0 %4422
      %4424 = vadd.xlane.f32.xlu0 %v4393
      %v4425 = vpop.xlane.xlu0 %4424
      %4426 = vadd.xlane.f32.xlu0 %v4395
      %v4427 = vpop.xlane.xlu0 %4426
      %4428 = vadd.xlane.f32.xlu0 %v4397
      %v4429 = vpop.xlane.xlu0 %4428
      %4430 = vadd.xlane.f32.xlu0 %v4399
      %v4431 = vpop.xlane.xlu0 %4430
      %4432 = vadd.xlane.f32.xlu0 %v4401
      %v4433 = vpop.xlane.xlu0 %4432
      %4434 = vadd.xlane.f32.xlu0 %v4403
      %v4435 = vpop.xlane.xlu0 %4434
      %4436 = vadd.xlane.f32.xlu0 %v4405
      %v4437 = vpop.xlane.xlu0 %4436
      %4438 = vadd.xlane.f32.xlu0 %v4407
      %v4439 = vpop.xlane.xlu0 %4438
      %4440 = vadd.xlane.f32.xlu0 %v4409
      %v4441 = vpop.xlane.xlu0 %4440
      %4442 = vadd.xlane.f32.xlu0 %v4411
      %v4443 = vpop.xlane.xlu0 %4442
      %4444 = vadd.xlane.f32.xlu0 %v4413
      %v4445 = vpop.xlane.xlu0 %4444
      %v4446 = vrcp.pop %v4415
      %v4447 = vrcp.pop %v4417
      %v4448 = vrcp.pop %v4419
      %v4449 = vrcp.pop %v4421
      %v4450 = vrcp.pop %v4423
      %v4451 = vrcp.pop %v4425
      %v4452 = vrcp.pop %v4427
      %v4453 = vrcp.pop %v4429
      %v4454 = vrcp.pop %v4431
      %v4455 = vrcp.pop %v4433
      %v4456 = vrcp.pop %v4435
      %v4457 = vrcp.pop %v4437
      %v4458 = vrcp.pop %v4439
      %v4459 = vrcp.pop %v4441
      %v4460 = vrcp.pop %v4443
      %v4461 = vrcp.pop %v4445
      %v4462 = vmul.f32 %v4383, %v4446
      %v4463 = vmul.f32 %v4385, %v4447
      %v4464 = vmul.f32 %v4387, %v4448
      %v4465 = vmul.f32 %v4389, %v4449
      %v4466 = vmul.f32 %v4391, %v4450
      %v4467 = vmul.f32 %v4393, %v4451
      %v4468 = vmul.f32 %v4395, %v4452
      %v4469 = vmul.f32 %v4397, %v4453
      %v4470 = vmul.f32 %v4399, %v4454
      %v4471 = vmul.f32 %v4401, %v4455
      %v4472 = vmul.f32 %v4403, %v4456
      %v4473 = vmul.f32 %v4405, %v4457
      %v4474 = vmul.f32 %v4407, %v4458
      %v4475 = vmul.f32 %v4409, %v4459
      %v4476 = vmul.f32 %v4411, %v4460
      %v4477 = vmul.f32 %v4413, %v4461
      %v4478 = vpack.c.bf16 %v4463, %v4462
      %v4479 = vpack.c.bf16 %v4465, %v4464
      %v4480 = vpack.c.bf16 %v4467, %v4466
      %v4481 = vpack.c.bf16 %v4469, %v4468
      %v4482 = vpack.c.bf16 %v4471, %v4470
      %v4483 = vpack.c.bf16 %v4473, %v4472
      %v4484 = vpack.c.bf16 %v4475, %v4474
      %v4485 = vpack.c.bf16 %v4477, %v4476
      %4486 = vrot.lane.b32.xlu0 %v907, 64
      %v4487 = vpop.permute.xlu0 %4486
      %4488 = vrot.lane.b32.xlu0 %v910, 64
      %v4489 = vpop.permute.xlu0 %4488
      %4490 = vrot.lane.b32.xlu0 %v913, 64
      %v4491 = vpop.permute.xlu0 %4490
      %4492 = vrot.lane.b32.xlu0 %v916, 64
      %v4493 = vpop.permute.xlu0 %4492
      %4494 = vrot.lane.b32.xlu0 %v919, 64
      %v4495 = vpop.permute.xlu0 %4494
      %4496 = vrot.lane.b32.xlu0 %v922, 64
      %v4497 = vpop.permute.xlu0 %4496
      %4498 = vrot.lane.b32.xlu0 %v925, 64
      %v4499 = vpop.permute.xlu0 %4498
      %4500 = vrot.lane.b32.xlu0 %v928, 64
      %v4501 = vpop.permute.xlu0 %4500
      %4510 = vmatprep.subr.bf16.mxu0 0
      %4511 = vmatpush1.bf16.msra.mxu0 %v4501
      %4512 = vmatprep.subr.bf16.mxu0 0
      %4513 = vmatpush1.bf16.msra.mxu0 %v4499
      %4514 = vmatprep.subr.bf16.mxu0 0
      %4515 = vmatpush1.bf16.msra.mxu0 %v4497
      %4516 = vmatprep.subr.bf16.mxu0 0
      %4517 = vmatpush1.bf16.msra.mxu0 %v4495
      %4518 = vmatprep.subr.bf16.mxu0 0
      %4519 = vmatpush1.bf16.msra.mxu0 %v4493
      %4520 = vmatprep.subr.bf16.mxu0 0
      %4521 = vmatpush1.bf16.msra.mxu0 %v4491
      %4522 = vmatprep.subr.bf16.mxu0 0
      %4523 = vmatpush1.bf16.msra.mxu0 %v4489
      %4524 = vmatprep.subr.bf16.mxu0 0
      %4525 = vmatpush1.bf16.msra.mxu0 %v4487
      %4526 = vmatprep.subr.bf16.mxu0 0
      %4527 = vmatpush2.bf16.msra.mxu0 0
      %4528 = vmatprep.subr.bf16.mxu0 0
      %4529 = vmatpush2.bf16.msra.mxu0 0
      %4530 = vmatprep.subr.bf16.mxu0 0
      %4531 = vmatpush2.bf16.msra.mxu0 0
      %4532 = vmatprep.subr.bf16.mxu0 0
      %4533 = vmatpush2.bf16.msra.mxu0 0
      %4534 = vmatprep.subr.bf16.mxu0 0
      %4535 = vmatpush2.bf16.msra.mxu0 0
      %4536 = vmatprep.subr.bf16.mxu0 0
      %4537 = vmatpush2.bf16.msra.mxu0 0
      %4538 = vmatprep.subr.bf16.mxu0 0
      %4539 = vmatpush2.bf16.msra.mxu0 0
      %4540 = vmatprep.subr.bf16.mxu0 0
      %4541 = vmatpush2.bf16.msra.mxu0 0
      %4542 = vmatprep.mubr.bf16.mxu0 0
      %4543 = vmatmul.mubr.bf16.gmra.mxu0 %v4478
      %v4544 = vpop.f32.mrf.mxu0
      %v4545 = vadd.f32 0.0, %v4544
      %v4546 = vpop.f32.mrf.mxu0
      %v4547 = vpop.f32.mrf.mxu0
      %v4548 = vadd.f32 0.0, %v4547
      %v4549 = vpop.f32.mrf.mxu0
      %4550 = vmatprep.mubr.bf16.mxu0 0
      %4551 = vmatmul.mubr.bf16.gmra.mxu0 %v4479
      %v4552 = vpop.f32.mrf.mxu0
      %v4553 = vadd.f32 0.0, %v4552
      %v4554 = vpop.f32.mrf.mxu0
      %v4555 = vpop.f32.mrf.mxu0
      %v4556 = vadd.f32 0.0, %v4555
      %v4557 = vpop.f32.mrf.mxu0
      %4558 = vmatprep.mubr.bf16.mxu0 0
      %4559 = vmatmul.mubr.bf16.gmra.mxu0 %v4480
      %v4560 = vpop.f32.mrf.mxu0
      %v4561 = vadd.f32 0.0, %v4560
      %v4562 = vpop.f32.mrf.mxu0
      %v4563 = vpop.f32.mrf.mxu0
      %v4564 = vadd.f32 0.0, %v4563
      %v4565 = vpop.f32.mrf.mxu0
      %4566 = vmatprep.mubr.bf16.mxu0 0
      %4567 = vmatmul.mubr.bf16.gmra.mxu0 %v4481
      %v4568 = vpop.f32.mrf.mxu0
      %v4569 = vadd.f32 0.0, %v4568
      %v4570 = vpop.f32.mrf.mxu0
      %v4571 = vpop.f32.mrf.mxu0
      %v4572 = vadd.f32 0.0, %v4571
      %v4573 = vpop.f32.mrf.mxu0
      %4574 = vmatprep.mubr.bf16.mxu0 0
      %4575 = vmatmul.mubr.bf16.gmra.mxu0 %v4482
      %v4576 = vpop.f32.mrf.mxu0
      %v4577 = vadd.f32 0.0, %v4576
      %v4578 = vpop.f32.mrf.mxu0
      %v4579 = vpop.f32.mrf.mxu0
      %v4580 = vadd.f32 0.0, %v4579
      %v4581 = vpop.f32.mrf.mxu0
      %4582 = vmatprep.mubr.bf16.mxu0 0
      %4583 = vmatmul.mubr.bf16.gmra.mxu0 %v4483
      %v4584 = vpop.f32.mrf.mxu0
      %v4585 = vadd.f32 0.0, %v4584
      %v4586 = vpop.f32.mrf.mxu0
      %v4587 = vpop.f32.mrf.mxu0
      %v4588 = vadd.f32 0.0, %v4587
      %v4589 = vpop.f32.mrf.mxu0
      %4590 = vmatprep.mubr.bf16.mxu0 0
      %4591 = vmatmul.mubr.bf16.gmra.mxu0 %v4484
      %v4592 = vpop.f32.mrf.mxu0
      %v4593 = vadd.f32 0.0, %v4592
      %v4594 = vpop.f32.mrf.mxu0
      %v4595 = vpop.f32.mrf.mxu0
      %v4596 = vadd.f32 0.0, %v4595
      %v4597 = vpop.f32.mrf.mxu0
      %4598 = vmatprep.mubr.bf16.mxu0 0
      %4599 = vmatmul.mubr.bf16.gmra.mxu0 %v4485
      %v4600 = vpop.f32.mrf.mxu0
      %v4601 = vadd.f32 0.0, %v4600
      %v4602 = vpop.f32.mrf.mxu0
      %v4603 = vpop.f32.mrf.mxu0
      %v4604 = vadd.f32 0.0, %v4603
      %v4605 = vpop.f32.mrf.mxu0
      %4606 = vdwg.mxu0
      %4607 = vrot.lane.b32.xlu0 %v905, 32
      %v4608 = vpop.permute.xlu0 %4607
      %4609 = vrot.lane.b32.xlu0 %v908, 32
      %v4610 = vpop.permute.xlu0 %4609
      %4611 = vrot.lane.b32.xlu0 %v911, 32
      %v4612 = vpop.permute.xlu0 %4611
      %4613 = vrot.lane.b32.xlu0 %v914, 32
      %v4614 = vpop.permute.xlu0 %4613
      %4615 = vrot.lane.b32.xlu0 %v917, 32
      %v4616 = vpop.permute.xlu0 %4615
      %4617 = vrot.lane.b32.xlu0 %v920, 32
      %v4618 = vpop.permute.xlu0 %4617
      %4619 = vrot.lane.b32.xlu0 %v923, 32
      %v4620 = vpop.permute.xlu0 %4619
      %4621 = vrot.lane.b32.xlu0 %v926, 32
      %v4622 = vpop.permute.xlu0 %4621
      %4623 = vrot.lane.b32.xlu0 %v906, 32
      %v4624 = vpop.permute.xlu0 %4623
      %4625 = vrot.lane.b32.xlu0 %v909, 32
      %v4626 = vpop.permute.xlu0 %4625
      %4627 = vrot.lane.b32.xlu0 %v912, 32
      %v4628 = vpop.permute.xlu0 %4627
      %4629 = vrot.lane.b32.xlu0 %v915, 32
      %v4630 = vpop.permute.xlu0 %4629
      %4631 = vrot.lane.b32.xlu0 %v918, 32
      %v4632 = vpop.permute.xlu0 %4631
      %4633 = vrot.lane.b32.xlu0 %v921, 32
      %v4634 = vpop.permute.xlu0 %4633
      %4635 = vrot.lane.b32.xlu0 %v924, 32
      %v4636 = vpop.permute.xlu0 %4635
      %4637 = vrot.lane.b32.xlu0 %v927, 32
      %v4638 = vpop.permute.xlu0 %4637
      %v4640 = vsel %vm478, %v4608, 0
      %v4643 = vsel %vm478, %v4610, 0
      %v4646 = vsel %vm478, %v4612, 0
      %v4649 = vsel %vm478, %v4614, 0
      %v4652 = vsel %vm478, %v4616, 0
      %v4655 = vsel %vm478, %v4618, 0
      %v4658 = vsel %vm478, %v4620, 0
      %v4661 = vsel %vm478, %v4622, 0
      %v4664 = vsel %vm478, %v4624, 0
      %v4667 = vsel %vm478, %v4626, 0
      %v4670 = vsel %vm478, %v4628, 0
      %v4673 = vsel %vm478, %v4630, 0
      %v4676 = vsel %vm478, %v4632, 0
      %v4679 = vsel %vm478, %v4634, 0
      %v4682 = vsel %vm478, %v4636, 0
      %v4685 = vsel %vm478, %v4638, 0
      %4687 = vmatprep.subr.bf16.mxu0 0
      %4688 = vmatpush1.bf16.xpose.msra.mxu0 %v4685
      %4689 = vmatprep.subr.bf16.mxu0 0
      %4690 = vmatpush1.bf16.xpose.msra.mxu0 %v4682
      %4691 = vmatprep.subr.bf16.mxu0 0
      %4692 = vmatpush1.bf16.xpose.msra.mxu0 %v4679
      %4693 = vmatprep.subr.bf16.mxu0 0
      %4694 = vmatpush1.bf16.xpose.msra.mxu0 %v4676
      %4695 = vmatprep.subr.bf16.mxu0 0
      %4696 = vmatpush1.bf16.xpose.msra.mxu0 %v4673
      %4697 = vmatprep.subr.bf16.mxu0 0
      %4698 = vmatpush1.bf16.xpose.msra.mxu0 %v4670
      %4699 = vmatprep.subr.bf16.mxu0 0
      %4700 = vmatpush1.bf16.xpose.msra.mxu0 %v4667
      %4701 = vmatprep.subr.bf16.mxu0 0
      %4702 = vmatpush1.bf16.xpose.msra.mxu0 %v4664
      %4703 = vmatprep.subr.bf16.mxu0 0
      %4704 = vmatpush2.bf16.xpose.msra.mxu0 0
      %4705 = vmatprep.subr.bf16.mxu0 0
      %4706 = vmatpush2.bf16.xpose.msra.mxu0 0
      %4707 = vmatprep.subr.bf16.mxu0 0
      %4708 = vmatpush2.bf16.xpose.msra.mxu0 0
      %4709 = vmatprep.subr.bf16.mxu0 0
      %4710 = vmatpush2.bf16.xpose.msra.mxu0 0
      %4711 = vmatprep.subr.bf16.mxu0 0
      %4712 = vmatpush2.bf16.xpose.msra.mxu0 0
      %4713 = vmatprep.subr.bf16.mxu0 0
      %4714 = vmatpush2.bf16.xpose.msra.mxu0 0
      %4715 = vmatprep.subr.bf16.mxu0 0
      %4716 = vmatpush2.bf16.xpose.msra.mxu0 0
      %4717 = vmatprep.subr.bf16.mxu0 0
      %4718 = vmatpush2.bf16.xpose.msra.mxu0 0
      %4719 = vmatprep.mubr.bf16.mxu0 0
      %4720 = vmatmul.mubr.bf16.gmra.mxu0 %v4640
      %v4721 = vpop.f32.mrf.mxu0
      %v4722 = vadd.f32 0.0, %v4721
      %v4723 = vpop.f32.mrf.mxu0
      %v4724 = vpop.f32.mrf.mxu0
      %v4725 = vadd.f32 0.0, %v4724
      %v4726 = vpop.f32.mrf.mxu0
      %4727 = vmatprep.mubr.bf16.mxu0 0
      %4728 = vmatmul.mubr.bf16.gmra.mxu0 %v4643
      %v4729 = vpop.f32.mrf.mxu0
      %v4730 = vadd.f32 0.0, %v4729
      %v4731 = vpop.f32.mrf.mxu0
      %v4732 = vpop.f32.mrf.mxu0
      %v4733 = vadd.f32 0.0, %v4732
      %v4734 = vpop.f32.mrf.mxu0
      %4735 = vmatprep.mubr.bf16.mxu0 0
      %4736 = vmatmul.mubr.bf16.gmra.mxu0 %v4646
      %v4737 = vpop.f32.mrf.mxu0
      %v4738 = vadd.f32 0.0, %v4737
      %v4739 = vpop.f32.mrf.mxu0
      %v4740 = vpop.f32.mrf.mxu0
      %v4741 = vadd.f32 0.0, %v4740
      %v4742 = vpop.f32.mrf.mxu0
      %4743 = vmatprep.mubr.bf16.mxu0 0
      %4744 = vmatmul.mubr.bf16.gmra.mxu0 %v4649
      %v4745 = vpop.f32.mrf.mxu0
      %v4746 = vadd.f32 0.0, %v4745
      %v4747 = vpop.f32.mrf.mxu0
      %v4748 = vpop.f32.mrf.mxu0
      %v4749 = vadd.f32 0.0, %v4748
      %v4750 = vpop.f32.mrf.mxu0
      %4751 = vmatprep.mubr.bf16.mxu0 0
      %4752 = vmatmul.mubr.bf16.gmra.mxu0 %v4652
      %v4753 = vpop.f32.mrf.mxu0
      %v4754 = vadd.f32 0.0, %v4753
      %v4755 = vpop.f32.mrf.mxu0
      %v4756 = vpop.f32.mrf.mxu0
      %v4757 = vadd.f32 0.0, %v4756
      %v4758 = vpop.f32.mrf.mxu0
      %4759 = vmatprep.mubr.bf16.mxu0 0
      %4760 = vmatmul.mubr.bf16.gmra.mxu0 %v4655
      %v4761 = vpop.f32.mrf.mxu0
      %v4762 = vadd.f32 0.0, %v4761
      %v4763 = vpop.f32.mrf.mxu0
      %v4764 = vpop.f32.mrf.mxu0
      %v4765 = vadd.f32 0.0, %v4764
      %v4766 = vpop.f32.mrf.mxu0
      %4767 = vmatprep.mubr.bf16.mxu0 0
      %4768 = vmatmul.mubr.bf16.gmra.mxu0 %v4658
      %v4769 = vpop.f32.mrf.mxu0
      %v4770 = vadd.f32 0.0, %v4769
      %v4771 = vpop.f32.mrf.mxu0
      %v4772 = vpop.f32.mrf.mxu0
      %v4773 = vadd.f32 0.0, %v4772
      %v4774 = vpop.f32.mrf.mxu0
      %4775 = vmatprep.mubr.bf16.mxu0 0
      %4776 = vmatmul.mubr.bf16.gmra.mxu0 %v4661
      %v4777 = vpop.f32.mrf.mxu0
      %v4778 = vadd.f32 0.0, %v4777
      %v4779 = vpop.f32.mrf.mxu0
      %v4780 = vpop.f32.mrf.mxu0
      %v4781 = vadd.f32 0.0, %v4780
      %v4782 = vpop.f32.mrf.mxu0
      %4783 = vdwg.mxu0
      %v4784 = vsel %vm3225, %v4722, -1e+30
      %v4785 = vsel %vm3226, %v4725, -1e+30
      %v4786 = vsel %vm3227, %v4730, -1e+30
      %v4787 = vsel %vm3228, %v4733, -1e+30
      %v4788 = vsel %vm3229, %v4738, -1e+30
      %v4789 = vsel %vm3230, %v4741, -1e+30
      %v4790 = vsel %vm3231, %v4746, -1e+30
      %v4791 = vsel %vm3232, %v4749, -1e+30
      %v4792 = vsel %vm3233, %v4754, -1e+30
      %v4793 = vsel %vm3234, %v4757, -1e+30
      %v4794 = vsel %vm3235, %v4762, -1e+30
      %v4795 = vsel %vm3236, %v4765, -1e+30
      %v4796 = vsel %vm3237, %v4770, -1e+30
      %v4797 = vsel %vm3238, %v4773, -1e+30
      %v4798 = vsel %vm3239, %v4778, -1e+30
      %v4799 = vsel %vm3240, %v4781, -1e+30
      %4800 = vmax.xlane.f32.xlu0 %v4784
      %v4801 = vpop.xlane.xlu0 %4800
      %4802 = vmax.xlane.f32.xlu0 %v4785
      %v4803 = vpop.xlane.xlu0 %4802
      %4804 = vmax.xlane.f32.xlu0 %v4786
      %v4805 = vpop.xlane.xlu0 %4804
      %4806 = vmax.xlane.f32.xlu0 %v4787
      %v4807 = vpop.xlane.xlu0 %4806
      %4808 = vmax.xlane.f32.xlu0 %v4788
      %v4809 = vpop.xlane.xlu0 %4808
      %4810 = vmax.xlane.f32.xlu0 %v4789
      %v4811 = vpop.xlane.xlu0 %4810
      %4812 = vmax.xlane.f32.xlu0 %v4790
      %v4813 = vpop.xlane.xlu0 %4812
      %4814 = vmax.xlane.f32.xlu0 %v4791
      %v4815 = vpop.xlane.xlu0 %4814
      %4816 = vmax.xlane.f32.xlu0 %v4792
      %v4817 = vpop.xlane.xlu0 %4816
      %4818 = vmax.xlane.f32.xlu0 %v4793
      %v4819 = vpop.xlane.xlu0 %4818
      %4820 = vmax.xlane.f32.xlu0 %v4794
      %v4821 = vpop.xlane.xlu0 %4820
      %4822 = vmax.xlane.f32.xlu0 %v4795
      %v4823 = vpop.xlane.xlu0 %4822
      %4824 = vmax.xlane.f32.xlu0 %v4796
      %v4825 = vpop.xlane.xlu0 %4824
      %4826 = vmax.xlane.f32.xlu0 %v4797
      %v4827 = vpop.xlane.xlu0 %4826
      %4828 = vmax.xlane.f32.xlu0 %v4798
      %v4829 = vpop.xlane.xlu0 %4828
      %4830 = vmax.xlane.f32.xlu0 %v4799
      %v4831 = vpop.xlane.xlu0 %4830
      %v4832 = vsub.f32 %v4784, %v4801
      %v4833 = vsub.f32 %v4785, %v4803
      %v4834 = vsub.f32 %v4786, %v4805
      %v4835 = vsub.f32 %v4787, %v4807
      %v4836 = vsub.f32 %v4788, %v4809
      %v4837 = vsub.f32 %v4789, %v4811
      %v4838 = vsub.f32 %v4790, %v4813
      %v4839 = vsub.f32 %v4791, %v4815
      %v4840 = vsub.f32 %v4792, %v4817
      %v4841 = vsub.f32 %v4793, %v4819
      %v4842 = vsub.f32 %v4794, %v4821
      %v4843 = vsub.f32 %v4795, %v4823
      %v4844 = vsub.f32 %v4796, %v4825
      %v4845 = vsub.f32 %v4797, %v4827
      %v4846 = vsub.f32 %v4798, %v4829
      %v4847 = vsub.f32 %v4799, %v4831
      %v4848 = vmul.f32 %v4832, 1.442695
      %v4849 = vpow.pop %v4848
      %v4850 = vmul.f32 %v4833, 1.442695
      %v4851 = vpow.pop %v4850
      %v4852 = vmul.f32 %v4834, 1.442695
      %v4853 = vpow.pop %v4852
      %v4854 = vmul.f32 %v4835, 1.442695
      %v4855 = vpow.pop %v4854
      %v4856 = vmul.f32 %v4836, 1.442695
      %v4857 = vpow.pop %v4856
      %v4858 = vmul.f32 %v4837, 1.442695
      %v4859 = vpow.pop %v4858
      %v4860 = vmul.f32 %v4838, 1.442695
      %v4861 = vpow.pop %v4860
      %v4862 = vmul.f32 %v4839, 1.442695
      %v4863 = vpow.pop %v4862
      %v4864 = vmul.f32 %v4840, 1.442695
      %v4865 = vpow.pop %v4864
      %v4866 = vmul.f32 %v4841, 1.442695
      %v4867 = vpow.pop %v4866
      %v4868 = vmul.f32 %v4842, 1.442695
      %v4869 = vpow.pop %v4868
      %v4870 = vmul.f32 %v4843, 1.442695
      %v4871 = vpow.pop %v4870
      %v4872 = vmul.f32 %v4844, 1.442695
      %v4873 = vpow.pop %v4872
      %v4874 = vmul.f32 %v4845, 1.442695
      %v4875 = vpow.pop %v4874
      %v4876 = vmul.f32 %v4846, 1.442695
      %v4877 = vpow.pop %v4876
      %v4878 = vmul.f32 %v4847, 1.442695
      %v4879 = vpow.pop %v4878
      %4880 = vadd.xlane.f32.xlu0 %v4849
      %v4881 = vpop.xlane.xlu0 %4880
      %4882 = vadd.xlane.f32.xlu0 %v4851
      %v4883 = vpop.xlane.xlu0 %4882
      %4884 = vadd.xlane.f32.xlu0 %v4853
      %v4885 = vpop.xlane.xlu0 %4884
      %4886 = vadd.xlane.f32.xlu0 %v4855
      %v4887 = vpop.xlane.xlu0 %4886
      %4888 = vadd.xlane.f32.xlu0 %v4857
      %v4889 = vpop.xlane.xlu0 %4888
      %4890 = vadd.xlane.f32.xlu0 %v4859
      %v4891 = vpop.xlane.xlu0 %4890
      %4892 = vadd.xlane.f32.xlu0 %v4861
      %v4893 = vpop.xlane.xlu0 %4892
      %4894 = vadd.xlane.f32.xlu0 %v4863
      %v4895 = vpop.xlane.xlu0 %4894
      %4896 = vadd.xlane.f32.xlu0 %v4865
      %v4897 = vpop.xlane.xlu0 %4896
      %4898 = vadd.xlane.f32.xlu0 %v4867
      %v4899 = vpop.xlane.xlu0 %4898
      %4900 = vadd.xlane.f32.xlu0 %v4869
      %v4901 = vpop.xlane.xlu0 %4900
      %4902 = vadd.xlane.f32.xlu0 %v4871
      %v4903 = vpop.xlane.xlu0 %4902
      %4904 = vadd.xlane.f32.xlu0 %v4873
      %v4905 = vpop.xlane.xlu0 %4904
      %4906 = vadd.xlane.f32.xlu0 %v4875
      %v4907 = vpop.xlane.xlu0 %4906
      %4908 = vadd.xlane.f32.xlu0 %v4877
      %v4909 = vpop.xlane.xlu0 %4908
      %4910 = vadd.xlane.f32.xlu0 %v4879
      %v4911 = vpop.xlane.xlu0 %4910
      %v4912 = vrcp.pop %v4881
      %v4913 = vrcp.pop %v4883
      %v4914 = vrcp.pop %v4885
      %v4915 = vrcp.pop %v4887
      %v4916 = vrcp.pop %v4889
      %v4917 = vrcp.pop %v4891
      %v4918 = vrcp.pop %v4893
      %v4919 = vrcp.pop %v4895
      %v4920 = vrcp.pop %v4897
      %v4921 = vrcp.pop %v4899
      %v4922 = vrcp.pop %v4901
      %v4923 = vrcp.pop %v4903
      %v4924 = vrcp.pop %v4905
      %v4925 = vrcp.pop %v4907
      %v4926 = vrcp.pop %v4909
      %v4927 = vrcp.pop %v4911
      %v4928 = vmul.f32 %v4849, %v4912
      %v4929 = vmul.f32 %v4851, %v4913
      %v4930 = vmul.f32 %v4853, %v4914
      %v4931 = vmul.f32 %v4855, %v4915
      %v4932 = vmul.f32 %v4857, %v4916
      %v4933 = vmul.f32 %v4859, %v4917
      %v4934 = vmul.f32 %v4861, %v4918
      %v4935 = vmul.f32 %v4863, %v4919
      %v4936 = vmul.f32 %v4865, %v4920
      %v4937 = vmul.f32 %v4867, %v4921
      %v4938 = vmul.f32 %v4869, %v4922
      %v4939 = vmul.f32 %v4871, %v4923
      %v4940 = vmul.f32 %v4873, %v4924
      %v4941 = vmul.f32 %v4875, %v4925
      %v4942 = vmul.f32 %v4877, %v4926
      %v4943 = vmul.f32 %v4879, %v4927
      %v4944 = vpack.c.bf16 %v4929, %v4928
      %v4945 = vpack.c.bf16 %v4931, %v4930
      %v4946 = vpack.c.bf16 %v4933, %v4932
      %v4947 = vpack.c.bf16 %v4935, %v4934
      %v4948 = vpack.c.bf16 %v4937, %v4936
      %v4949 = vpack.c.bf16 %v4939, %v4938
      %v4950 = vpack.c.bf16 %v4941, %v4940
      %v4951 = vpack.c.bf16 %v4943, %v4942
      %4952 = vrot.lane.b32.xlu0 %v907, 32
      %v4953 = vpop.permute.xlu0 %4952
      %4954 = vrot.lane.b32.xlu0 %v910, 32
      %v4955 = vpop.permute.xlu0 %4954
      %4956 = vrot.lane.b32.xlu0 %v913, 32
      %v4957 = vpop.permute.xlu0 %4956
      %4958 = vrot.lane.b32.xlu0 %v916, 32
      %v4959 = vpop.permute.xlu0 %4958
      %4960 = vrot.lane.b32.xlu0 %v919, 32
      %v4961 = vpop.permute.xlu0 %4960
      %4962 = vrot.lane.b32.xlu0 %v922, 32
      %v4963 = vpop.permute.xlu0 %4962
      %4964 = vrot.lane.b32.xlu0 %v925, 32
      %v4965 = vpop.permute.xlu0 %4964
      %4966 = vrot.lane.b32.xlu0 %v928, 32
      %v4967 = vpop.permute.xlu0 %4966
      %4976 = vmatprep.subr.bf16.mxu0 0
      %4977 = vmatpush1.bf16.msra.mxu0 %v4967
      %4978 = vmatprep.subr.bf16.mxu0 0
      %4979 = vmatpush1.bf16.msra.mxu0 %v4965
      %4980 = vmatprep.subr.bf16.mxu0 0
      %4981 = vmatpush1.bf16.msra.mxu0 %v4963
      %4982 = vmatprep.subr.bf16.mxu0 0
      %4983 = vmatpush1.bf16.msra.mxu0 %v4961
      %4984 = vmatprep.subr.bf16.mxu0 0
      %4985 = vmatpush1.bf16.msra.mxu0 %v4959
      %4986 = vmatprep.subr.bf16.mxu0 0
      %4987 = vmatpush1.bf16.msra.mxu0 %v4957
      %4988 = vmatprep.subr.bf16.mxu0 0
      %4989 = vmatpush1.bf16.msra.mxu0 %v4955
      %4990 = vmatprep.subr.bf16.mxu0 0
      %4991 = vmatpush1.bf16.msra.mxu0 %v4953
      %4992 = vmatprep.subr.bf16.mxu0 0
      %4993 = vmatpush2.bf16.msra.mxu0 0
      %4994 = vmatprep.subr.bf16.mxu0 0
      %4995 = vmatpush2.bf16.msra.mxu0 0
      %4996 = vmatprep.subr.bf16.mxu0 0
      %4997 = vmatpush2.bf16.msra.mxu0 0
      %4998 = vmatprep.subr.bf16.mxu0 0
      %4999 = vmatpush2.bf16.msra.mxu0 0
      %5000 = vmatprep.subr.bf16.mxu0 0
      %5001 = vmatpush2.bf16.msra.mxu0 0
      %5002 = vmatprep.subr.bf16.mxu0 0
      %5003 = vmatpush2.bf16.msra.mxu0 0
      %5004 = vmatprep.subr.bf16.mxu0 0
      %5005 = vmatpush2.bf16.msra.mxu0 0
      %5006 = vmatprep.subr.bf16.mxu0 0
      %5007 = vmatpush2.bf16.msra.mxu0 0
      %5008 = vmatprep.mubr.bf16.mxu0 0
      %5009 = vmatmul.mubr.bf16.gmra.mxu0 %v4944
      %v5010 = vpop.f32.mrf.mxu0
      %v5011 = vadd.f32 0.0, %v5010
      %v5012 = vpop.f32.mrf.mxu0
      %v5013 = vpop.f32.mrf.mxu0
      %v5014 = vadd.f32 0.0, %v5013
      %v5015 = vpop.f32.mrf.mxu0
      %5016 = vmatprep.mubr.bf16.mxu0 0
      %5017 = vmatmul.mubr.bf16.gmra.mxu0 %v4945
      %v5018 = vpop.f32.mrf.mxu0
      %v5019 = vadd.f32 0.0, %v5018
      %v5020 = vpop.f32.mrf.mxu0
      %v5021 = vpop.f32.mrf.mxu0
      %v5022 = vadd.f32 0.0, %v5021
      %v5023 = vpop.f32.mrf.mxu0
      %5024 = vmatprep.mubr.bf16.mxu0 0
      %5025 = vmatmul.mubr.bf16.gmra.mxu0 %v4946
      %v5026 = vpop.f32.mrf.mxu0
      %v5027 = vadd.f32 0.0, %v5026
      %v5028 = vpop.f32.mrf.mxu0
      %v5029 = vpop.f32.mrf.mxu0
      %v5030 = vadd.f32 0.0, %v5029
      %v5031 = vpop.f32.mrf.mxu0
      %5032 = vmatprep.mubr.bf16.mxu0 0
      %5033 = vmatmul.mubr.bf16.gmra.mxu0 %v4947
      %v5034 = vpop.f32.mrf.mxu0
      %v5035 = vadd.f32 0.0, %v5034
      %v5036 = vpop.f32.mrf.mxu0
      %v5037 = vpop.f32.mrf.mxu0
      %v5038 = vadd.f32 0.0, %v5037
      %v5039 = vpop.f32.mrf.mxu0
      %5040 = vmatprep.mubr.bf16.mxu0 0
      %5041 = vmatmul.mubr.bf16.gmra.mxu0 %v4948
      %v5042 = vpop.f32.mrf.mxu0
      %v5043 = vadd.f32 0.0, %v5042
      %v5044 = vpop.f32.mrf.mxu0
      %v5045 = vpop.f32.mrf.mxu0
      %v5046 = vadd.f32 0.0, %v5045
      %v5047 = vpop.f32.mrf.mxu0
      %5048 = vmatprep.mubr.bf16.mxu0 0
      %5049 = vmatmul.mubr.bf16.gmra.mxu0 %v4949
      %v5050 = vpop.f32.mrf.mxu0
      %v5051 = vadd.f32 0.0, %v5050
      %v5052 = vpop.f32.mrf.mxu0
      %v5053 = vpop.f32.mrf.mxu0
      %v5054 = vadd.f32 0.0, %v5053
      %v5055 = vpop.f32.mrf.mxu0
      %5056 = vmatprep.mubr.bf16.mxu0 0
      %5057 = vmatmul.mubr.bf16.gmra.mxu0 %v4950
      %v5058 = vpop.f32.mrf.mxu0
      %v5059 = vadd.f32 0.0, %v5058
      %v5060 = vpop.f32.mrf.mxu0
      %v5061 = vpop.f32.mrf.mxu0
      %v5062 = vadd.f32 0.0, %v5061
      %v5063 = vpop.f32.mrf.mxu0
      %5064 = vmatprep.mubr.bf16.mxu0 0
      %5065 = vmatmul.mubr.bf16.gmra.mxu0 %v4951
      %v5066 = vpop.f32.mrf.mxu0
      %v5067 = vadd.f32 0.0, %v5066
      %v5068 = vpop.f32.mrf.mxu0
      %v5069 = vpop.f32.mrf.mxu0
      %v5070 = vadd.f32 0.0, %v5069
      %v5071 = vpop.f32.mrf.mxu0
      %5072 = vdwg.mxu0
      %5089 = vrot.lane.b32.xlu0 %v4079, 32
      %v5090 = vpop.permute.xlu0 %5089
      %5091 = vrot.lane.b32.xlu0 %v4082, 32
      %v5092 = vpop.permute.xlu0 %5091
      %5093 = vrot.lane.b32.xlu0 %v4087, 32
      %v5094 = vpop.permute.xlu0 %5093
      %5095 = vrot.lane.b32.xlu0 %v4090, 32
      %v5096 = vpop.permute.xlu0 %5095
      %5097 = vrot.lane.b32.xlu0 %v4095, 32
      %v5098 = vpop.permute.xlu0 %5097
      %5099 = vrot.lane.b32.xlu0 %v4098, 32
      %v5100 = vpop.permute.xlu0 %5099
      %5101 = vrot.lane.b32.xlu0 %v4103, 32
      %v5102 = vpop.permute.xlu0 %5101
      %5103 = vrot.lane.b32.xlu0 %v4106, 32
      %v5104 = vpop.permute.xlu0 %5103
      %5105 = vrot.lane.b32.xlu0 %v4111, 32
      %v5106 = vpop.permute.xlu0 %5105
      %5107 = vrot.lane.b32.xlu0 %v4114, 32
      %v5108 = vpop.permute.xlu0 %5107
      %5109 = vrot.lane.b32.xlu0 %v4119, 32
      %v5110 = vpop.permute.xlu0 %5109
      %5111 = vrot.lane.b32.xlu0 %v4122, 32
      %v5112 = vpop.permute.xlu0 %5111
      %5113 = vrot.lane.b32.xlu0 %v4127, 32
      %v5114 = vpop.permute.xlu0 %5113
      %5115 = vrot.lane.b32.xlu0 %v4130, 32
      %v5116 = vpop.permute.xlu0 %5115
      %5117 = vrot.lane.b32.xlu0 %v4135, 32
      %v5118 = vpop.permute.xlu0 %5117
      %5119 = vrot.lane.b32.xlu0 %v4138, 32
      %v5120 = vpop.permute.xlu0 %5119
      %5153 = vrot.lane.b32.xlu0 %v4545, 64
      %v5154 = vpop.permute.xlu0 %5153
      %5155 = vrot.lane.b32.xlu0 %v4548, 64
      %v5156 = vpop.permute.xlu0 %5155
      %5157 = vrot.lane.b32.xlu0 %v4553, 64
      %v5158 = vpop.permute.xlu0 %5157
      %5159 = vrot.lane.b32.xlu0 %v4556, 64
      %v5160 = vpop.permute.xlu0 %5159
      %5161 = vrot.lane.b32.xlu0 %v4561, 64
      %v5162 = vpop.permute.xlu0 %5161
      %5163 = vrot.lane.b32.xlu0 %v4564, 64
      %v5164 = vpop.permute.xlu0 %5163
      %5165 = vrot.lane.b32.xlu0 %v4569, 64
      %v5166 = vpop.permute.xlu0 %5165
      %5167 = vrot.lane.b32.xlu0 %v4572, 64
      %v5168 = vpop.permute.xlu0 %5167
      %5169 = vrot.lane.b32.xlu0 %v4577, 64
      %v5170 = vpop.permute.xlu0 %5169
      %5171 = vrot.lane.b32.xlu0 %v4580, 64
      %v5172 = vpop.permute.xlu0 %5171
      %5173 = vrot.lane.b32.xlu0 %v4585, 64
      %v5174 = vpop.permute.xlu0 %5173
      %5175 = vrot.lane.b32.xlu0 %v4588, 64
      %v5176 = vpop.permute.xlu0 %5175
      %5177 = vrot.lane.b32.xlu0 %v4593, 64
      %v5178 = vpop.permute.xlu0 %5177
      %5179 = vrot.lane.b32.xlu0 %v4596, 64
      %v5180 = vpop.permute.xlu0 %5179
      %5181 = vrot.lane.b32.xlu0 %v4601, 64
      %v5182 = vpop.permute.xlu0 %5181
      %5183 = vrot.lane.b32.xlu0 %v4604, 64
      %v5184 = vpop.permute.xlu0 %5183
      %5217 = vrot.lane.b32.xlu0 %v5011, 96
      %v5218 = vpop.permute.xlu0 %5217
      %5219 = vrot.lane.b32.xlu0 %v5014, 96
      %v5220 = vpop.permute.xlu0 %5219
      %5221 = vrot.lane.b32.xlu0 %v5019, 96
      %v5222 = vpop.permute.xlu0 %5221
      %5223 = vrot.lane.b32.xlu0 %v5022, 96
      %v5224 = vpop.permute.xlu0 %5223
      %5225 = vrot.lane.b32.xlu0 %v5027, 96
      %v5226 = vpop.permute.xlu0 %5225
      %5227 = vrot.lane.b32.xlu0 %v5030, 96
      %v5228 = vpop.permute.xlu0 %5227
      %5229 = vrot.lane.b32.xlu0 %v5035, 96
      %v5230 = vpop.permute.xlu0 %5229
      %5231 = vrot.lane.b32.xlu0 %v5038, 96
      %v5232 = vpop.permute.xlu0 %5231
      %5233 = vrot.lane.b32.xlu0 %v5043, 96
      %v5234 = vpop.permute.xlu0 %5233
      %5235 = vrot.lane.b32.xlu0 %v5046, 96
      %v5236 = vpop.permute.xlu0 %5235
      %5237 = vrot.lane.b32.xlu0 %v5051, 96
      %v5238 = vpop.permute.xlu0 %5237
      %5239 = vrot.lane.b32.xlu0 %v5054, 96
      %v5240 = vpop.permute.xlu0 %5239
      %5241 = vrot.lane.b32.xlu0 %v5059, 96
      %v5242 = vpop.permute.xlu0 %5241
      %5243 = vrot.lane.b32.xlu0 %v5062, 96
      %v5244 = vpop.permute.xlu0 %5243
      %5245 = vrot.lane.b32.xlu0 %v5067, 96
      %v5246 = vpop.permute.xlu0 %5245
      %5247 = vrot.lane.b32.xlu0 %v5070, 96
      %v5248 = vpop.permute.xlu0 %5247
      %v5265 = vsel %vm478, %v3589, %v5090
      %v5266 = vsel %vm478, %v3592, %v5092
      %v5267 = vsel %vm478, %v3597, %v5094
      %v5268 = vsel %vm478, %v3600, %v5096
      %v5269 = vsel %vm478, %v3605, %v5098
      %v5270 = vsel %vm478, %v3608, %v5100
      %v5271 = vsel %vm478, %v3613, %v5102
      %v5272 = vsel %vm478, %v3616, %v5104
      %v5273 = vsel %vm478, %v3621, %v5106
      %v5274 = vsel %vm478, %v3624, %v5108
      %v5275 = vsel %vm478, %v3629, %v5110
      %v5276 = vsel %vm478, %v3632, %v5112
      %v5277 = vsel %vm478, %v3637, %v5114
      %v5278 = vsel %vm478, %v3640, %v5116
      %v5279 = vsel %vm478, %v3645, %v5118
      %v5280 = vsel %vm478, %v3648, %v5120
      %v5281 = vsel %vm3088, %v5265, %v5154
      %v5282 = vsel %vm3088, %v5266, %v5156
      %v5283 = vsel %vm3088, %v5267, %v5158
      %v5284 = vsel %vm3088, %v5268, %v5160
      %v5285 = vsel %vm3088, %v5269, %v5162
      %v5286 = vsel %vm3088, %v5270, %v5164
      %v5287 = vsel %vm3088, %v5271, %v5166
      %v5288 = vsel %vm3088, %v5272, %v5168
      %v5289 = vsel %vm3088, %v5273, %v5170
      %v5290 = vsel %vm3088, %v5274, %v5172
      %v5291 = vsel %vm3088, %v5275, %v5174
      %v5292 = vsel %vm3088, %v5276, %v5176
      %v5293 = vsel %vm3088, %v5277, %v5178
      %v5294 = vsel %vm3088, %v5278, %v5180
      %v5295 = vsel %vm3088, %v5279, %v5182
      %v5296 = vsel %vm3088, %v5280, %v5184
      %v5297 = vsel %vm3105, %v5281, %v5218
      %v5298 = vsel %vm3105, %v5282, %v5220
      %v5299 = vsel %vm3105, %v5283, %v5222
      %v5300 = vsel %vm3105, %v5284, %v5224
      %v5301 = vsel %vm3105, %v5285, %v5226
      %v5302 = vsel %vm3105, %v5286, %v5228
      %v5303 = vsel %vm3105, %v5287, %v5230
      %v5304 = vsel %vm3105, %v5288, %v5232
      %v5305 = vsel %vm3105, %v5289, %v5234
      %v5306 = vsel %vm3105, %v5290, %v5236
      %v5307 = vsel %vm3105, %v5291, %v5238
      %v5308 = vsel %vm3105, %v5292, %v5240
      %v5309 = vsel %vm3105, %v5293, %v5242
      %v5310 = vsel %vm3105, %v5294, %v5244
      %v5311 = vsel %vm3105, %v5295, %v5246
      %v5312 = vsel %vm3105, %v5296, %v5248
      %v5313 = vld [vmem:[%s353] sm:$0xff]
      %v5314 = vld [vmem:[%s353 + $0x8] sm:$0xff]
      %v5315 = vld [vmem:[%s353 + $0x10] sm:$0xff]
      %v5316 = vld [vmem:[%s353 + $0x18] sm:$0xff]
      %v5317 = vld [vmem:[%s353 + $0x20] sm:$0xff]
      %v5318 = vld [vmem:[%s353 + $0x28] sm:$0xff]
      %v5319 = vld [vmem:[%s353 + $0x30] sm:$0xff]
      %v5320 = vld [vmem:[%s353 + $0x38] sm:$0xff]
      %v5321 = vld [vmem:[%s353 + $0x40] sm:$0xff]
      %v5322 = vld [vmem:[%s353 + $0x48] sm:$0xff]
      %v5323 = vld [vmem:[%s353 + $0x50] sm:$0xff]
      %v5324 = vld [vmem:[%s353 + $0x58] sm:$0xff]
      %v5325 = vld [vmem:[%s353 + $0x60] sm:$0xff]
      %v5326 = vld [vmem:[%s353 + $0x68] sm:$0xff]
      %v5327 = vld [vmem:[%s353 + $0x70] sm:$0xff]
      %v5328 = vld [vmem:[%s353 + $0x78] sm:$0xff]
      %v5329 = vld [vmem:[%s353 + $0x80] sm:$0xff]
      %v5330 = vld [vmem:[%s353 + $0x88] sm:$0xff]
      %v5331 = vld [vmem:[%s353 + $0x90] sm:$0xff]
      %v5332 = vld [vmem:[%s353 + $0x98] sm:$0xff]
      %v5333 = vld [vmem:[%s353 + $0xa0] sm:$0xff]
      %v5334 = vld [vmem:[%s353 + $0xa8] sm:$0xff]
      %v5335 = vld [vmem:[%s353 + $0xb0] sm:$0xff]
      %v5336 = vld [vmem:[%s353 + $0xb8] sm:$0xff]
      %v5337 = vld [vmem:[%s353 + $0xc0] sm:$0xff]
      %v5338 = vld [vmem:[%s353 + $0xc8] sm:$0xff]
      %v5339 = vld [vmem:[%s353 + $0xd0] sm:$0xff]
      %v5340 = vld [vmem:[%s353 + $0xd8] sm:$0xff]
      %v5341 = vld [vmem:[%s353 + $0xe0] sm:$0xff]
      %v5342 = vld [vmem:[%s353 + $0xe8] sm:$0xff]
      %v5343 = vld [vmem:[%s353 + $0xf0] sm:$0xff]
      %v5344 = vld [vmem:[%s353 + $0xf8] sm:$0xff]
      %vm5345 = vcmp.ne.f32.partialorder %v5313, 0.0
      %vm5346 = vcmp.ne.f32.partialorder %v5314, 0.0
      %vm5347 = vcmp.ne.f32.partialorder %v5315, 0.0
      %vm5348 = vcmp.ne.f32.partialorder %v5316, 0.0
      %vm5349 = vcmp.ne.f32.partialorder %v5317, 0.0
      %vm5350 = vcmp.ne.f32.partialorder %v5318, 0.0
      %vm5351 = vcmp.ne.f32.partialorder %v5319, 0.0
      %vm5352 = vcmp.ne.f32.partialorder %v5320, 0.0
      %vm5353 = vcmp.ne.f32.partialorder %v5321, 0.0
      %vm5354 = vcmp.ne.f32.partialorder %v5322, 0.0
      %vm5355 = vcmp.ne.f32.partialorder %v5323, 0.0
      %vm5356 = vcmp.ne.f32.partialorder %v5324, 0.0
      %vm5357 = vcmp.ne.f32.partialorder %v5325, 0.0
      %vm5358 = vcmp.ne.f32.partialorder %v5326, 0.0
      %vm5359 = vcmp.ne.f32.partialorder %v5327, 0.0
      %vm5360 = vcmp.ne.f32.partialorder %v5328, 0.0
      %vm5361 = vcmp.ne.f32.partialorder %v5329, 0.0
      %vm5362 = vcmp.ne.f32.partialorder %v5330, 0.0
      %vm5363 = vcmp.ne.f32.partialorder %v5331, 0.0
      %vm5364 = vcmp.ne.f32.partialorder %v5332, 0.0
      %vm5365 = vcmp.ne.f32.partialorder %v5333, 0.0
      %vm5366 = vcmp.ne.f32.partialorder %v5334, 0.0
      %vm5367 = vcmp.ne.f32.partialorder %v5335, 0.0
      %vm5368 = vcmp.ne.f32.partialorder %v5336, 0.0
      %vm5369 = vcmp.ne.f32.partialorder %v5337, 0.0
      %vm5370 = vcmp.ne.f32.partialorder %v5338, 0.0
      %vm5371 = vcmp.ne.f32.partialorder %v5339, 0.0
      %vm5372 = vcmp.ne.f32.partialorder %v5340, 0.0
      %vm5373 = vcmp.ne.f32.partialorder %v5341, 0.0
      %vm5374 = vcmp.ne.f32.partialorder %v5342, 0.0
      %vm5375 = vcmp.ne.f32.partialorder %v5343, 0.0
      %vm5376 = vcmp.ne.f32.partialorder %v5344, 0.0
      %v5377 = vsel %vm5345, 1, 0
      %v5378 = vsel %vm5346, 1, 0
      %v5379 = vsel %vm5347, 1, 0
      %v5380 = vsel %vm5348, 1, 0
      %v5381 = vsel %vm5349, 1, 0
      %v5382 = vsel %vm5350, 1, 0
      %v5383 = vsel %vm5351, 1, 0
      %v5384 = vsel %vm5352, 1, 0
      %v5385 = vsel %vm5353, 1, 0
      %v5386 = vsel %vm5354, 1, 0
      %v5387 = vsel %vm5355, 1, 0
      %v5388 = vsel %vm5356, 1, 0
      %v5389 = vsel %vm5357, 1, 0
      %v5390 = vsel %vm5358, 1, 0
      %v5391 = vsel %vm5359, 1, 0
      %v5392 = vsel %vm5360, 1, 0
      %v5393 = vsel %vm5361, 1, 0
      %v5394 = vsel %vm5362, 1, 0
      %v5395 = vsel %vm5363, 1, 0
      %v5396 = vsel %vm5364, 1, 0
      %v5397 = vsel %vm5365, 1, 0
      %v5398 = vsel %vm5366, 1, 0
      %v5399 = vsel %vm5367, 1, 0
      %v5400 = vsel %vm5368, 1, 0
      %v5401 = vsel %vm5369, 1, 0
      %v5402 = vsel %vm5370, 1, 0
      %v5403 = vsel %vm5371, 1, 0
      %v5404 = vsel %vm5372, 1, 0
      %v5405 = vsel %vm5373, 1, 0
      %v5406 = vsel %vm5374, 1, 0
      %v5407 = vsel %vm5375, 1, 0
      %v5408 = vsel %vm5376, 1, 0
      %v5409 = vcvt.s32.f32 %v5377
      %v5410 = vcvt.s32.f32 %v5378
      %v5411 = vcvt.s32.f32 %v5379
      %v5412 = vcvt.s32.f32 %v5380
      %v5413 = vcvt.s32.f32 %v5381
      %v5414 = vcvt.s32.f32 %v5382
      %v5415 = vcvt.s32.f32 %v5383
      %v5416 = vcvt.s32.f32 %v5384
      %v5417 = vcvt.s32.f32 %v5385
      %v5418 = vcvt.s32.f32 %v5386
      %v5419 = vcvt.s32.f32 %v5387
      %v5420 = vcvt.s32.f32 %v5388
      %v5421 = vcvt.s32.f32 %v5389
      %v5422 = vcvt.s32.f32 %v5390
      %v5423 = vcvt.s32.f32 %v5391
      %v5424 = vcvt.s32.f32 %v5392
      %v5425 = vcvt.s32.f32 %v5393
      %v5426 = vcvt.s32.f32 %v5394
      %v5427 = vcvt.s32.f32 %v5395
      %v5428 = vcvt.s32.f32 %v5396
      %v5429 = vcvt.s32.f32 %v5397
      %v5430 = vcvt.s32.f32 %v5398
      %v5431 = vcvt.s32.f32 %v5399
      %v5432 = vcvt.s32.f32 %v5400
      %v5433 = vcvt.s32.f32 %v5401
      %v5434 = vcvt.s32.f32 %v5402
      %v5435 = vcvt.s32.f32 %v5403
      %v5436 = vcvt.s32.f32 %v5404
      %v5437 = vcvt.s32.f32 %v5405
      %v5438 = vcvt.s32.f32 %v5406
      %v5439 = vcvt.s32.f32 %v5407
      %v5440 = vcvt.s32.f32 %v5408
      %5442 = vset.pattern.permute.xlu0 0
      %5443 = vperm.xlu0 %5442, %v5409
      %v5444 = vpop.permute.xlu0 %5443
      %5447 = vset.pattern.permute.xlu0 0
      %5448 = vperm.xlu0 %5447, %v5410
      %v5449 = vpop.permute.xlu0 %5448
      %5452 = vset.pattern.permute.xlu0 0
      %5453 = vperm.xlu0 %5452, %v5411
      %v5454 = vpop.permute.xlu0 %5453
      %5457 = vset.pattern.permute.xlu0 0
      %5458 = vperm.xlu0 %5457, %v5412
      %v5459 = vpop.permute.xlu0 %5458
      %5462 = vset.pattern.permute.xlu0 0
      %5463 = vperm.xlu0 %5462, %v5413
      %v5464 = vpop.permute.xlu0 %5463
      %5467 = vset.pattern.permute.xlu0 0
      %5468 = vperm.xlu0 %5467, %v5414
      %v5469 = vpop.permute.xlu0 %5468
      %5472 = vset.pattern.permute.xlu0 0
      %5473 = vperm.xlu0 %5472, %v5415
      %v5474 = vpop.permute.xlu0 %5473
      %5477 = vset.pattern.permute.xlu0 0
      %5478 = vperm.xlu0 %5477, %v5416
      %v5479 = vpop.permute.xlu0 %5478
      %5482 = vset.pattern.permute.xlu0 0
      %5483 = vperm.xlu0 %5482, %v5417
      %v5484 = vpop.permute.xlu0 %5483
      %5487 = vset.pattern.permute.xlu0 0
      %5488 = vperm.xlu0 %5487, %v5418
      %v5489 = vpop.permute.xlu0 %5488
      %5492 = vset.pattern.permute.xlu0 0
      %5493 = vperm.xlu0 %5492, %v5419
      %v5494 = vpop.permute.xlu0 %5493
      %5497 = vset.pattern.permute.xlu0 0
      %5498 = vperm.xlu0 %5497, %v5420
      %v5499 = vpop.permute.xlu0 %5498
      %5502 = vset.pattern.permute.xlu0 0
      %5503 = vperm.xlu0 %5502, %v5421
      %v5504 = vpop.permute.xlu0 %5503
      %5507 = vset.pattern.permute.xlu0 0
      %5508 = vperm.xlu0 %5507, %v5422
      %v5509 = vpop.permute.xlu0 %5508
      %5512 = vset.pattern.permute.xlu0 0
      %5513 = vperm.xlu0 %5512, %v5423
      %v5514 = vpop.permute.xlu0 %5513
      %5517 = vset.pattern.permute.xlu0 0
      %5518 = vperm.xlu0 %5517, %v5424
      %v5519 = vpop.permute.xlu0 %5518
      %5522 = vset.pattern.permute.xlu0 0
      %5523 = vperm.xlu0 %5522, %v5425
      %v5524 = vpop.permute.xlu0 %5523
      %5527 = vset.pattern.permute.xlu0 0
      %5528 = vperm.xlu0 %5527, %v5426
      %v5529 = vpop.permute.xlu0 %5528
      %5532 = vset.pattern.permute.xlu0 0
      %5533 = vperm.xlu0 %5532, %v5427
      %v5534 = vpop.permute.xlu0 %5533
      %5537 = vset.pattern.permute.xlu0 0
      %5538 = vperm.xlu0 %5537, %v5428
      %v5539 = vpop.permute.xlu0 %5538
      %5542 = vset.pattern.permute.xlu0 0
      %5543 = vperm.xlu0 %5542, %v5429
      %v5544 = vpop.permute.xlu0 %5543
      %5547 = vset.pattern.permute.xlu0 0
      %5548 = vperm.xlu0 %5547, %v5430
      %v5549 = vpop.permute.xlu0 %5548
      %5552 = vset.pattern.permute.xlu0 0
      %5553 = vperm.xlu0 %5552, %v5431
      %v5554 = vpop.permute.xlu0 %5553
      %5557 = vset.pattern.permute.xlu0 0
      %5558 = vperm.xlu0 %5557, %v5432
      %v5559 = vpop.permute.xlu0 %5558
      %5562 = vset.pattern.permute.xlu0 0
      %5563 = vperm.xlu0 %5562, %v5433
      %v5564 = vpop.permute.xlu0 %5563
      %5567 = vset.pattern.permute.xlu0 0
      %5568 = vperm.xlu0 %5567, %v5434
      %v5569 = vpop.permute.xlu0 %5568
      %5572 = vset.pattern.permute.xlu0 0
      %5573 = vperm.xlu0 %5572, %v5435
      %v5574 = vpop.permute.xlu0 %5573
      %5577 = vset.pattern.permute.xlu0 0
      %5578 = vperm.xlu0 %5577, %v5436
      %v5579 = vpop.permute.xlu0 %5578
      %5582 = vset.pattern.permute.xlu0 0
      %5583 = vperm.xlu0 %5582, %v5437
      %v5584 = vpop.permute.xlu0 %5583
      %5587 = vset.pattern.permute.xlu0 0
      %5588 = vperm.xlu0 %5587, %v5438
      %v5589 = vpop.permute.xlu0 %5588
      %5592 = vset.pattern.permute.xlu0 0
      %5593 = vperm.xlu0 %5592, %v5439
      %v5594 = vpop.permute.xlu0 %5593
      %5597 = vset.pattern.permute.xlu0 0
      %5598 = vperm.xlu0 %5597, %v5440
      %v5599 = vpop.permute.xlu0 %5598
      %v5601 = vmul.f32 %v3106, %v5444
      %v5602 = vmul.f32 %v3107, %v5449
      %v5603 = vmul.f32 %v3108, %v5454
      %v5604 = vmul.f32 %v3109, %v5459
      %v5605 = vmul.f32 %v3110, %v5464
      %v5606 = vmul.f32 %v3111, %v5469
      %v5607 = vmul.f32 %v3112, %v5474
      %v5608 = vmul.f32 %v3113, %v5479
      %v5609 = vmul.f32 %v3114, %v5484
      %v5610 = vmul.f32 %v3115, %v5489
      %v5611 = vmul.f32 %v3116, %v5494
      %v5612 = vmul.f32 %v3117, %v5499
      %v5613 = vmul.f32 %v3118, %v5504
      %v5614 = vmul.f32 %v3119, %v5509
      %v5615 = vmul.f32 %v3120, %v5514
      %v5616 = vmul.f32 %v3121, %v5519
      %v5617 = vmul.f32 %v5297, %v5524
      %v5618 = vmul.f32 %v5298, %v5529
      %v5619 = vmul.f32 %v5299, %v5534
      %v5620 = vmul.f32 %v5300, %v5539
      %v5621 = vmul.f32 %v5301, %v5544
      %v5622 = vmul.f32 %v5302, %v5549
      %v5623 = vmul.f32 %v5303, %v5554
      %v5624 = vmul.f32 %v5304, %v5559
      %v5625 = vmul.f32 %v5305, %v5564
      %v5626 = vmul.f32 %v5306, %v5569
      %v5627 = vmul.f32 %v5307, %v5574
      %v5628 = vmul.f32 %v5308, %v5579
      %v5629 = vmul.f32 %v5309, %v5584
      %v5630 = vmul.f32 %v5310, %v5589
      %v5631 = vmul.f32 %v5311, %v5594
      %v5632 = vmul.f32 %v5312, %v5599
      %v5633 = vpack.c.bf16 %v5602, %v5601
      %v5634 = vpack.c.bf16 %v5604, %v5603
      %v5635 = vpack.c.bf16 %v5606, %v5605
      %v5636 = vpack.c.bf16 %v5608, %v5607
      %v5637 = vpack.c.bf16 %v5610, %v5609
      %v5638 = vpack.c.bf16 %v5612, %v5611
      %v5639 = vpack.c.bf16 %v5614, %v5613
      %v5640 = vpack.c.bf16 %v5616, %v5615
      %v5641 = vpack.c.bf16 %v5618, %v5617
      %v5642 = vpack.c.bf16 %v5620, %v5619
      %v5643 = vpack.c.bf16 %v5622, %v5621
      %v5644 = vpack.c.bf16 %v5624, %v5623
      %v5645 = vpack.c.bf16 %v5626, %v5625
      %v5646 = vpack.c.bf16 %v5628, %v5627
      %v5647 = vpack.c.bf16 %v5630, %v5629
      %v5648 = vpack.c.bf16 %v5632, %v5631
      %v5649 = vld [vmem:[%s6] sm:$0xf]
      %v5650 = vld [vmem:[%s6 + $0x4] sm:$0xf]
      %v5651 = vld [vmem:[%s6 + $0x8] sm:$0xf]
      %v5652 = vld [vmem:[%s6 + $0xc] sm:$0xf]
      %v5653 = vld [vmem:[%s6 + $0x10] sm:$0xf]
      %v5654 = vld [vmem:[%s6 + $0x14] sm:$0xf]
      %v5655 = vld [vmem:[%s6 + $0x18] sm:$0xf]
      %v5656 = vld [vmem:[%s6 + $0x1c] sm:$0xf]
      %v5657 = vld [vmem:[%s6 + $0x20] sm:$0xf]
      %v5658 = vld [vmem:[%s6 + $0x24] sm:$0xf]
      %v5659 = vld [vmem:[%s6 + $0x28] sm:$0xf]
      %v5660 = vld [vmem:[%s6 + $0x2c] sm:$0xf]
      %v5661 = vld [vmem:[%s6 + $0x30] sm:$0xf]
      %v5662 = vld [vmem:[%s6 + $0x34] sm:$0xf]
      %v5663 = vld [vmem:[%s6 + $0x38] sm:$0xf]
      %v5664 = vld [vmem:[%s6 + $0x3c] sm:$0xf]
      %v5665 = vld [vmem:[%s7] sm:$0x1]
      %v5667 = vlaneseq
      %v5668 = vshrl.u32 %v5667, 7
      %v5669 = vsub.s32 0, %v5668
      %v5670 = vrot.slane %v5665, %v5669
      %v5688 = vunpack.c.l.b16 %v5649
      %v5689 = vunpack.c.l.b16 %v5650
      %v5690 = vunpack.c.l.b16 %v5651
      %v5691 = vunpack.c.l.b16 %v5652
      %v5692 = vunpack.c.l.b16 %v5653
      %v5693 = vunpack.c.l.b16 %v5654
      %v5694 = vunpack.c.l.b16 %v5655
      %v5695 = vunpack.c.l.b16 %v5656
      %v5696 = vunpack.c.l.b16 %v5657
      %v5697 = vunpack.c.l.b16 %v5658
      %v5698 = vunpack.c.l.b16 %v5659
      %v5699 = vunpack.c.l.b16 %v5660
      %v5700 = vunpack.c.l.b16 %v5661
      %v5701 = vunpack.c.l.b16 %v5662
      %v5702 = vunpack.c.l.b16 %v5663
      %v5703 = vunpack.c.l.b16 %v5664
      %v5704 = vpack.c.b16 %v5689, %v5688
      %v5705 = vpack.c.b16 %v5691, %v5690
      %v5706 = vpack.c.b16 %v5693, %v5692
      %v5707 = vpack.c.b16 %v5695, %v5694
      %v5708 = vpack.c.b16 %v5697, %v5696
      %v5709 = vpack.c.b16 %v5699, %v5698
      %v5710 = vpack.c.b16 %v5701, %v5700
      %v5711 = vpack.c.b16 %v5703, %v5702
      %5720 = vmatprep.subr.bf16.mxu0 0
      %5721 = vmatpush1.bf16.msra.mxu0 %v5711
      %5722 = vmatprep.subr.bf16.mxu0 0
      %5723 = vmatpush1.bf16.msra.mxu0 %v5710
      %5724 = vmatprep.subr.bf16.mxu0 0
      %5725 = vmatpush1.bf16.msra.mxu0 %v5709
      %5726 = vmatprep.subr.bf16.mxu0 0
      %5727 = vmatpush1.bf16.msra.mxu0 %v5708
      %5728 = vmatprep.subr.bf16.mxu0 0
      %5729 = vmatpush1.bf16.msra.mxu0 %v5707
      %5730 = vmatprep.subr.bf16.mxu0 0
      %5731 = vmatpush1.bf16.msra.mxu0 %v5706
      %5732 = vmatprep.subr.bf16.mxu0 0
      %5733 = vmatpush1.bf16.msra.mxu0 %v5705
      %5734 = vmatprep.subr.bf16.mxu0 0
      %5735 = vmatpush1.bf16.msra.mxu0 %v5704
      %5736 = vmatprep.subr.bf16.mxu0 0
      %5737 = vmatpush2.bf16.msra.mxu0 0
      %5738 = vmatprep.subr.bf16.mxu0 0
      %5739 = vmatpush2.bf16.msra.mxu0 0
      %5740 = vmatprep.subr.bf16.mxu0 0
      %5741 = vmatpush2.bf16.msra.mxu0 0
      %5742 = vmatprep.subr.bf16.mxu0 0
      %5743 = vmatpush2.bf16.msra.mxu0 0
      %5744 = vmatprep.subr.bf16.mxu0 0
      %5745 = vmatpush2.bf16.msra.mxu0 0
      %5746 = vmatprep.subr.bf16.mxu0 0
      %5747 = vmatpush2.bf16.msra.mxu0 0
      %5748 = vmatprep.subr.bf16.mxu0 0
      %5749 = vmatpush2.bf16.msra.mxu0 0
      %5750 = vmatprep.subr.bf16.mxu0 0
      %5751 = vmatpush2.bf16.msra.mxu0 0
      %5752 = vmatprep.mubr.bf16.mxu0 0
      %5753 = vmatmul.mubr.bf16.gmra.mxu0 %v5633
      %v5754 = vpop.f32.mrf.mxu0
      %v5755 = vadd.f32 %v5670, %v5754
      %v5756 = vpop.f32.mrf.mxu0
      %v5757 = vpop.f32.mrf.mxu0
      %v5758 = vadd.f32 %v5670, %v5757
      %v5759 = vpop.f32.mrf.mxu0
      %5760 = vmatprep.mubr.bf16.mxu0 0
      %5761 = vmatmul.mubr.bf16.gmra.mxu0 %v5634
      %v5762 = vpop.f32.mrf.mxu0
      %v5763 = vadd.f32 %v5670, %v5762
      %v5764 = vpop.f32.mrf.mxu0
      %v5765 = vpop.f32.mrf.mxu0
      %v5766 = vadd.f32 %v5670, %v5765
      %v5767 = vpop.f32.mrf.mxu0
      %5768 = vmatprep.mubr.bf16.mxu0 0
      %5769 = vmatmul.mubr.bf16.gmra.mxu0 %v5635
      %v5770 = vpop.f32.mrf.mxu0
      %v5771 = vadd.f32 %v5670, %v5770
      %v5772 = vpop.f32.mrf.mxu0
      %v5773 = vpop.f32.mrf.mxu0
      %v5774 = vadd.f32 %v5670, %v5773
      %v5775 = vpop.f32.mrf.mxu0
      %5776 = vmatprep.mubr.bf16.mxu0 0
      %5777 = vmatmul.mubr.bf16.gmra.mxu0 %v5636
      %v5778 = vpop.f32.mrf.mxu0
      %v5779 = vadd.f32 %v5670, %v5778
      %v5780 = vpop.f32.mrf.mxu0
      %v5781 = vpop.f32.mrf.mxu0
      %v5782 = vadd.f32 %v5670, %v5781
      %v5783 = vpop.f32.mrf.mxu0
      %5784 = vmatprep.mubr.bf16.mxu0 0
      %5785 = vmatmul.mubr.bf16.gmra.mxu0 %v5637
      %v5786 = vpop.f32.mrf.mxu0
      %v5787 = vadd.f32 %v5670, %v5786
      %v5788 = vpop.f32.mrf.mxu0
      %v5789 = vpop.f32.mrf.mxu0
      %v5790 = vadd.f32 %v5670, %v5789
      %v5791 = vpop.f32.mrf.mxu0
      %5792 = vmatprep.mubr.bf16.mxu0 0
      %5793 = vmatmul.mubr.bf16.gmra.mxu0 %v5638
      %v5794 = vpop.f32.mrf.mxu0
      %v5795 = vadd.f32 %v5670, %v5794
      %v5796 = vpop.f32.mrf.mxu0
      %v5797 = vpop.f32.mrf.mxu0
      %v5798 = vadd.f32 %v5670, %v5797
      %v5799 = vpop.f32.mrf.mxu0
      %5800 = vmatprep.mubr.bf16.mxu0 0
      %5801 = vmatmul.mubr.bf16.gmra.mxu0 %v5639
      %v5802 = vpop.f32.mrf.mxu0
      %v5803 = vadd.f32 %v5670, %v5802
      %v5804 = vpop.f32.mrf.mxu0
      %v5805 = vpop.f32.mrf.mxu0
      %v5806 = vadd.f32 %v5670, %v5805
      %v5807 = vpop.f32.mrf.mxu0
      %5808 = vmatprep.mubr.bf16.mxu0 0
      %5809 = vmatmul.mubr.bf16.gmra.mxu0 %v5640
      %v5810 = vpop.f32.mrf.mxu0
      %v5811 = vadd.f32 %v5670, %v5810
      %v5812 = vpop.f32.mrf.mxu0
      %v5813 = vpop.f32.mrf.mxu0
      %v5814 = vadd.f32 %v5670, %v5813
      %v5815 = vpop.f32.mrf.mxu0
      %5816 = vmatprep.mubr.bf16.mxu0 0
      %5817 = vmatmul.mubr.bf16.gmra.mxu0 %v5641
      %v5818 = vpop.f32.mrf.mxu0
      %v5819 = vadd.f32 %v5670, %v5818
      %v5820 = vpop.f32.mrf.mxu0
      %v5821 = vpop.f32.mrf.mxu0
      %v5822 = vadd.f32 %v5670, %v5821
      %v5823 = vpop.f32.mrf.mxu0
      %5824 = vmatprep.mubr.bf16.mxu0 0
      %5825 = vmatmul.mubr.bf16.gmra.mxu0 %v5642
      %v5826 = vpop.f32.mrf.mxu0
      %v5827 = vadd.f32 %v5670, %v5826
      %v5828 = vpop.f32.mrf.mxu0
      %v5829 = vpop.f32.mrf.mxu0
      %v5830 = vadd.f32 %v5670, %v5829
      %v5831 = vpop.f32.mrf.mxu0
      %5832 = vmatprep.mubr.bf16.mxu0 0
      %5833 = vmatmul.mubr.bf16.gmra.mxu0 %v5643
      %v5834 = vpop.f32.mrf.mxu0
      %v5835 = vadd.f32 %v5670, %v5834
      %v5836 = vpop.f32.mrf.mxu0
      %v5837 = vpop.f32.mrf.mxu0
      %v5838 = vadd.f32 %v5670, %v5837
      %v5839 = vpop.f32.mrf.mxu0
      %5840 = vmatprep.mubr.bf16.mxu0 0
      %5841 = vmatmul.mubr.bf16.gmra.mxu0 %v5644
      %v5842 = vpop.f32.mrf.mxu0
      %v5843 = vadd.f32 %v5670, %v5842
      %v5844 = vpop.f32.mrf.mxu0
      %v5845 = vpop.f32.mrf.mxu0
      %v5846 = vadd.f32 %v5670, %v5845
      %v5847 = vpop.f32.mrf.mxu0
      %5848 = vmatprep.mubr.bf16.mxu0 0
      %5849 = vmatmul.mubr.bf16.gmra.mxu0 %v5645
      %v5850 = vpop.f32.mrf.mxu0
      %v5851 = vadd.f32 %v5670, %v5850
      %v5852 = vpop.f32.mrf.mxu0
      %v5853 = vpop.f32.mrf.mxu0
      %v5854 = vadd.f32 %v5670, %v5853
      %v5855 = vpop.f32.mrf.mxu0
      %5856 = vmatprep.mubr.bf16.mxu0 0
      %5857 = vmatmul.mubr.bf16.gmra.mxu0 %v5646
      %v5858 = vpop.f32.mrf.mxu0
      %v5859 = vadd.f32 %v5670, %v5858
      %v5860 = vpop.f32.mrf.mxu0
      %v5861 = vpop.f32.mrf.mxu0
      %v5862 = vadd.f32 %v5670, %v5861
      %v5863 = vpop.f32.mrf.mxu0
      %5864 = vmatprep.mubr.bf16.mxu0 0
      %5865 = vmatmul.mubr.bf16.gmra.mxu0 %v5647
      %v5866 = vpop.f32.mrf.mxu0
      %v5867 = vadd.f32 %v5670, %v5866
      %v5868 = vpop.f32.mrf.mxu0
      %v5869 = vpop.f32.mrf.mxu0
      %v5870 = vadd.f32 %v5670, %v5869
      %v5871 = vpop.f32.mrf.mxu0
      %5872 = vmatprep.mubr.bf16.mxu0 0
      %5873 = vmatmul.mubr.bf16.gmra.mxu0 %v5648
      %v5874 = vpop.f32.mrf.mxu0
      %v5875 = vadd.f32 %v5670, %v5874
      %v5876 = vpop.f32.mrf.mxu0
      %v5877 = vpop.f32.mrf.mxu0
      %v5878 = vadd.f32 %v5670, %v5877
      %v5879 = vpop.f32.mrf.mxu0
      %5880 = vdwg.mxu0
      %5881 = vst.msk [vmem:[%s370] sm:$0xff] %vm478, %v5755
      %5882 = vst.msk [vmem:[%s370 + $0x8] sm:$0xff] %vm478, %v5758
      %5883 = vst.msk [vmem:[%s370 + $0x10] sm:$0xff] %vm478, %v5763
      %5884 = vst.msk [vmem:[%s370 + $0x18] sm:$0xff] %vm478, %v5766
      %5885 = vst.msk [vmem:[%s370 + $0x20] sm:$0xff] %vm478, %v5771
      %5886 = vst.msk [vmem:[%s370 + $0x28] sm:$0xff] %vm478, %v5774
      %5887 = vst.msk [vmem:[%s370 + $0x30] sm:$0xff] %vm478, %v5779
      %5888 = vst.msk [vmem:[%s370 + $0x38] sm:$0xff] %vm478, %v5782
      %5889 = vst.msk [vmem:[%s370 + $0x40] sm:$0xff] %vm478, %v5787
      %5890 = vst.msk [vmem:[%s370 + $0x48] sm:$0xff] %vm478, %v5790
      %5891 = vst.msk [vmem:[%s370 + $0x50] sm:$0xff] %vm478, %v5795
      %5892 = vst.msk [vmem:[%s370 + $0x58] sm:$0xff] %vm478, %v5798
      %5893 = vst.msk [vmem:[%s370 + $0x60] sm:$0xff] %vm478, %v5803
      %5894 = vst.msk [vmem:[%s370 + $0x68] sm:$0xff] %vm478, %v5806
      %5895 = vst.msk [vmem:[%s370 + $0x70] sm:$0xff] %vm478, %v5811
      %5896 = vst.msk [vmem:[%s370 + $0x78] sm:$0xff] %vm478, %v5814
      %5897 = vst.msk [vmem:[%s370 + $0x80] sm:$0xff] %vm478, %v5819
      %5898 = vst.msk [vmem:[%s370 + $0x88] sm:$0xff] %vm478, %v5822
      %5899 = vst.msk [vmem:[%s370 + $0x90] sm:$0xff] %vm478, %v5827
      %5900 = vst.msk [vmem:[%s370 + $0x98] sm:$0xff] %vm478, %v5830
      %5901 = vst.msk [vmem:[%s370 + $0xa0] sm:$0xff] %vm478, %v5835
      %5902 = vst.msk [vmem:[%s370 + $0xa8] sm:$0xff] %vm478, %v5838
      %5903 = vst.msk [vmem:[%s370 + $0xb0] sm:$0xff] %vm478, %v5843
      %5904 = vst.msk [vmem:[%s370 + $0xb8] sm:$0xff] %vm478, %v5846
      %5905 = vst.msk [vmem:[%s370 + $0xc0] sm:$0xff] %vm478, %v5851
      %5906 = vst.msk [vmem:[%s370 + $0xc8] sm:$0xff] %vm478, %v5854
      %5907 = vst.msk [vmem:[%s370 + $0xd0] sm:$0xff] %vm478, %v5859
      %5908 = vst.msk [vmem:[%s370 + $0xd8] sm:$0xff] %vm478, %v5862
      %5909 = vst.msk [vmem:[%s370 + $0xe0] sm:$0xff] %vm478, %v5867
      %5910 = vst.msk [vmem:[%s370 + $0xe8] sm:$0xff] %vm478, %v5870
      %5911 = vst.msk [vmem:[%s370 + $0xf0] sm:$0xff] %vm478, %v5875
      %5912 = vst.msk [vmem:[%s370 + $0xf8] sm:$0xff] %vm478, %v5878
      %s5913 = smul.u32 32, %s19
      %p5914 = scmp.lt.s32.totalorder %s5913, 63
      %s5915 = scalar_select %p5914, %s5913, 63
      %s5916 = smul.addr %s5915, 8
      %s5917 = scalar_lea.vmem %s8, %s5916
      // Predicated region
      $region53: #{multihead_attention_pallas.1} parent=51 // pred_check
        %p5918 = pneg %p225
      $region54: #{multihead_attention_pallas.1} parent=51 // pred_check_branch
        %5920 = sbr.rel (%p5918) target = $region56
      $region55: #{multihead_attention_pallas.1} parent=51 // pred_region
        %s5921 = smul.u32 32, %s19
      $region56: #{multihead_attention_pallas.1} parent=51 // pred_fallthru
        _
    $region52: #{multihead_attention_pallas.1} parent=5 // pred_fallthru
      _
    %p5922 = scmp.le.s32.totalorder 2, %s14
    // Predicated region
    $region57: #{multihead_attention_pallas.1} parent=5 // pred_check
      %p5923 = pneg %p5922
    $region58: #{multihead_attention_pallas.1} parent=5 // pred_check_branch
      %5925 = sbr.rel (%p5923) target = $region60
    $region59: #{multihead_attention_pallas.1} parent=5 // pred_region
      %s5926 = ssub.s32 %s14, 2
      // Predicated region
      $region61: #{multihead_attention_pallas.1} parent=59 // pred_check
        %p5927 = pneg %p231
      $region62: #{multihead_attention_pallas.1} parent=59 // pred_check_branch
        %5929 = sbr.rel (%p5927) target = $region64
      $region63: #{multihead_attention_pallas.1} parent=59 // pred_region
        %s5930 = smul.u32 32, %s20
        %p5931 = scmp.lt.s32.totalorder %s5930, 63
        %s5932 = scalar_select %p5931, %s5930, 63
        %s5933 = smul.addr %s5932, 8
        %s5934 = scalar_lea.vmem %s8, %s5933
      $region64: #{multihead_attention_pallas.1} parent=59 // pred_fallthru
        _
    $region60: #{multihead_attention_pallas.1} parent=5 // pred_fallthru
      _
  $region6: #{multihead_attention_pallas.1} parent=0 // loop_footer
    %s18 = sadd.s32 1, %s14
  $region7: #{multihead_attention_pallas.1} parent=0 // loop_footer_branch
    %13 = sbr.rel target = $region3
  $region8: #{multihead_attention_pallas.1} parent=0 // loop_exit
    _

</llo_original>
